<compile_context>
chip_gen: v7x
topology: tpu7x:2x2x1
jax: 0.10.0
libtpu: 0.0.40
codegen_flags: <defaults>
</compile_context>

<pallas_src>
import functools

import jax
import jax.numpy as jnp
from jax import lax
from jax.experimental import pallas as pl
from jax.experimental.pallas import tpu as pltpu


LANE = 128


def _round_up(v, m):
    return (v + m - 1) // m * m


def _pad2d(w, rows, cols):
    return jnp.pad(w, ((0, rows - w.shape[0]), (0, cols - w.shape[1])))


def _pad_vec(v, cols):
    return jnp.pad(v, (0, cols - v.shape[0])).reshape(1, cols).astype(jnp.float32)


@functools.lru_cache(maxsize=None)
def _vmem_limit_bytes():
    """Per-generation scoped-VMEM limit (~3/4 of physical, capped at 100 MiB)."""
    try:
        info = pltpu.get_tpu_info()
        for name in ("vmem_capacity_bytes", "vmem_size_bytes", "vmem_bytes"):
            cap = getattr(info, name, None)
            if cap:
                return int(min(cap * 3 // 4, 100 * 1024 * 1024))
    except Exception:
        pass
    return 48 * 1024 * 1024   # safe on v5e/v6e (128 MiB) and v7x (64 MiB)


@functools.lru_cache(maxsize=None)
def _single_buffer_supported():
    """Probe (eagerly, outside any trace) whether pl.Buffered(1) is accepted."""
    def copy_kernel(x_ref, o_ref):
        o_ref[...] = x_ref[...]
    try:
        spec = pl.BlockSpec((8, 128), lambda i: (0, 0),
                            pipeline_mode=pl.Buffered(1))
        out = pl.pallas_call(
            copy_kernel,
            out_shape=jax.ShapeDtypeStruct((8, 128), jnp.float32),
            grid=(1,),
            in_specs=[spec],
            out_specs=pl.BlockSpec((8, 128), lambda i: (0, 0)),
        )(jnp.zeros((8, 128), jnp.float32))
        jax.block_until_ready(out)
        return True
    except Exception:
        return False


def _rep_spec(shape, index_map):
    """Grid-invariant operand (weights/biases/mask): single-buffer if possible."""
    if _single_buffer_supported():
        return pl.BlockSpec(shape, index_map, pipeline_mode=pl.Buffered(1))
    return pl.BlockSpec(shape, index_map)


# Prime the probe eagerly at import so it never runs inside a jit trace.
_ = _single_buffer_supported()


# ----------------------------- Pallas kernels ------------------------------


def _conv1_conv2_kernel(xd_ref, mask_ref, w1_ref, b1_ref, w2_ref, b2_ref,
                        o_ref, y1_ref, *, stride, wq, hout, wout):
    """Fused conv1(1x1)+BN+ReLU and conv2(3x3, stride, pad=1)+BN+ReLU (1 image).

    xd_ref:   (1, s*s, HWq, Cin_p) bf16  parity-deinterleaved zero-padded input
    mask_ref: (s*s, HWq, 1) f32          1 inside the image, 0 on the pad ring
    w1_ref:   (Cin_p, C1p) bf16          conv1 weight, BN scale folded in
    b1_ref:   (1, C1p) f32               folded BN bias
    w2_ref:   (9*C1p, C1p) bf16          conv2 weight, rows ordered (kh, kw, ci)
    b2_ref:   (1, C1p) f32
    o_ref:    (1, Ho*Wo, C1p) bf16       flattened lane/sublane-dense output
    y1_ref:   (s*s, HWq, C1p) f32        conv1 activation scratch (per plane)
    """
    s = stride
    ss = y1_ref.shape[0]
    c1p = w1_ref.shape[1]

    # conv1 (1x1) + folded-BN bias + ReLU on every parity plane.  The mask
    # zeroes the 1-pixel ring so it behaves exactly like conv2's zero padding.
    for pq in range(ss):                               # static unroll (1 or 4)
        y = jnp.dot(xd_ref[0, pq], w1_ref[...],
                    preferred_element_type=jnp.float32)
        y = jnp.maximum(y + b1_ref[...], 0.0) * mask_ref[pq]
        y1_ref[pq] = y

    # conv2 (3x3, stride, pad=1) + folded-BN bias + ReLU: accumulate nine tap
    # matmuls (K = C1p each) into an f32 accumulator -- no im2col tensor and no
    # lane-dim concatenation.  Each tap is a contiguous row window of the
    # flattened (HWq, C1p) plane; out-of-window rows only land in columns that
    # are cropped before the store.
    nrows = hout * wq
    acc = jnp.zeros((nrows, c1p), jnp.float32)
    for kh in range(3):
        for kw in range(3):
            plane = (kh % s) * s + (kw % s)
            off = (kh // s) * wq + (kw // s)
            k = kh * 3 + kw
            tap = y1_ref[plane, off:off + nrows, :].astype(jnp.bfloat16)
            acc = acc + jnp.dot(tap, w2_ref[k * c1p:(k + 1) * c1p, :],
                                preferred_element_type=jnp.float32)
    y2 = jnp.maximum(acc + b2_ref[...], 0.0)
    # Crop the padded columns once and store a dense (Ho*Wo, C1p) block.
    y2 = y2.reshape(hout, wq, c1p)[:, :wout, :].reshape(hout * wout, c1p)
    o_ref[0] = y2.astype(o_ref.dtype)


def _final_ds_kernel(y_ref, w3_ref, b3_ref, x_ref, wd_ref, bd_ref, o_ref):
    """conv3(1x1)+BN fused with downsample 1x1 conv+BN, add, ReLU (row tile)."""
    out = jnp.dot(y_ref[...], w3_ref[...],
                  preferred_element_type=jnp.float32) + b3_ref[...]
    res = jnp.dot(x_ref[...], wd_ref[...],
                  preferred_element_type=jnp.float32) + bd_ref[...]
    o_ref[...] = jnp.maximum(out + res, 0.0).astype(o_ref.dtype)


def _final_id_kernel(y_ref, w3_ref, b3_ref, res_ref, o_ref):
    """conv3(1x1)+BN + identity residual add + ReLU (row tile)."""
    out = jnp.dot(y_ref[...], w3_ref[...],
                  preferred_element_type=jnp.float32) + b3_ref[...]
    out = out + res_ref[...].astype(jnp.float32)
    o_ref[...] = jnp.maximum(out, 0.0).astype(o_ref.dtype)


# ------------------------------ Pallas wrappers -----------------------------


def _prep_conv2_input(x, stride, cin_p):
    """Zero-pad (pad=1), parity-deinterleave and flatten x for kernel 1.

    Returns xd: (N, s*s, HWq_a, Cin_p) bf16 where plane p*s+q holds padded
    pixels with coords congruent to (p, q) mod s, flattened row-major over the
    (Hq, Wq) parity grid, plus an interior mask (s*s, HWq_a, 1) f32 that is 1
    inside the original image and 0 on the padding ring.  Wq is rounded to a
    multiple of 8; HWq_a adds >= 8 zero slack rows so every conv2 tap window is
    in bounds.  Pure layout glue: one pass over the input.
    """
    n, h, w, c = x.shape
    s = stride
    hq = -(-(h + 2) // s)
    wq = _round_up(-(-(w + 2) // s), 8)
    hwq = hq * wq
    hwq_a = _round_up(hwq + 8, 16)

    xp = jnp.pad(x, ((0, 0), (1, s * hq - h - 1), (1, s * wq - w - 1),
                     (0, cin_p - c)))
    xd = xp.reshape(n, hq, s, wq, s, cin_p).transpose(0, 2, 4, 1, 3, 5)
    xd = xd.reshape(n, s * s, hwq, cin_p)
    xd = jnp.pad(xd, ((0, 0), (0, 0), (0, hwq_a - hwq), (0, 0)))

    i = jnp.arange(hq)[:, None]
    j = jnp.arange(wq)[None, :]
    planes = []
    for p in range(s):
        for q in range(s):
            hp = s * i + p
            wp = s * j + q
            m = (hp >= 1) & (hp <= h) & (wp >= 1) & (wp <= w)
            planes.append(m.astype(jnp.float32).reshape(hwq, 1))
    mask = jnp.stack(planes, axis=0)                       # (s*s, hwq, 1)
    mask = jnp.pad(mask, ((0, 0), (0, hwq_a - hwq), (0, 0)))
    return xd.astype(jnp.bfloat16), mask, wq, hwq_a


def conv1_conv2(x, w1p, b1p, w2p, b2p, *, stride):
    """x: (N, H, W, Cin) NHWC f32. Returns (N, Ho*Wo, C1p) bf16, lane-padded."""
    n, h, w, cin = x.shape
    cin_p, c1p = w1p.shape
    s = stride
    hout = (h + 2 - 3) // s + 1
    wout = (w + 2 - 3) // s + 1
    xd, mask, wq, hwq_a = _prep_conv2_input(x, s, cin_p)
    ss = s * s

    kernel = functools.partial(_conv1_conv2_kernel, stride=s, wq=wq,
                               hout=hout, wout=wout)
    # TODO(synk): add an H-tile grid axis (with a 1-row halo) for very large
    #             feature maps and for batch-1 megacore utilization on v7x.
    return pl.pallas_call(
        kernel,
        out_shape=jax.ShapeDtypeStruct((n, hout * wout, c1p), jnp.bfloat16),
        grid=(n,),
        in_specs=[
            pl.BlockSpec((1, ss, hwq_a, cin_p), lambda i: (i, 0, 0, 0)),
            _rep_spec((ss, hwq_a, 1), lambda i: (0, 0, 0)),
            _rep_spec((cin_p, c1p), lambda i: (0, 0)),
            _rep_spec((1, c1p), lambda i: (0, 0)),
            _rep_spec((9 * c1p, c1p), lambda i: (0, 0)),
            _rep_spec((1, c1p), lambda i: (0, 0)),
        ],
        out_specs=pl.BlockSpec((1, hout * wout, c1p), lambda i: (i, 0, 0)),
        scratch_shapes=[pltpu.VMEM((ss, hwq_a, c1p), jnp.float32)],
        compiler_params=pltpu.CompilerParams(
            dimension_semantics=("parallel",),
            vmem_limit_bytes=_vmem_limit_bytes()),
    )(xd, mask, w1p, b1p, w2p, b2p)


def conv3_residual(y2_rows, w3p, b3p, *, xs_rows=None, wdp=None, bdp=None,
                   residual_rows=None, out_dtype=jnp.float32):
    """Row-tiled conv3 + BN + (downsample|identity) residual + add + ReLU."""
    m, c1p = y2_rows.shape
    c3p = w3p.shape[1]
    tm = min(1024, _round_up(m, 16))            # rows per tile
    mp = _round_up(m, tm)

    def pad_rows(a):
        return jnp.pad(a, ((0, mp - m), (0, 0))) if mp != m else a

    def row_spec(c):
        return pl.BlockSpec((tm, c), lambda i: (i, 0))

    cparams = pltpu.CompilerParams(dimension_semantics=("parallel",),
                                   vmem_limit_bytes=_vmem_limit_bytes())
    grid = (mp // tm,)
    y2p = pad_rows(y2_rows)

    if xs_rows is not None:                     # fused downsample branch
        cin_p = xs_rows.shape[1]
        out = pl.pallas_call(
            _final_ds_kernel,
            out_shape=jax.ShapeDtypeStruct((mp, c3p), out_dtype),
            grid=grid,
            in_specs=[row_spec(c1p),
                      _rep_spec((c1p, c3p), lambda i: (0, 0)),
                      _rep_spec((1, c3p), lambda i: (0, 0)),
                      row_spec(cin_p),
                      _rep_spec((cin_p, c3p), lambda i: (0, 0)),
                      _rep_spec((1, c3p), lambda i: (0, 0))],
            out_specs=row_spec(c3p),
            compiler_params=cparams,
        )(y2p, w3p, b3p, pad_rows(xs_rows), wdp, bdp)
    else:                                       # identity residual branch
        out = pl.pallas_call(
            _final_id_kernel,
            out_shape=jax.ShapeDtypeStruct((mp, c3p), out_dtype),
            grid=grid,
            in_specs=[row_spec(c1p),
                      _rep_spec((c1p, c3p), lambda i: (0, 0)),
                      _rep_spec((1, c3p), lambda i: (0, 0)),
                      row_spec(c3p)],
            out_specs=row_spec(c3p),
            compiler_params=cparams,
        )(y2p, w3p, b3p, pad_rows(residual_rows))
    return out[:m]


# ------------------------------ module emulation ----------------------------


def _fold_bn(gamma, beta, mean, var, eps=1e-5):
    scale = gamma / jnp.sqrt(var + eps)
    bias = beta - mean * scale
    return scale, bias


def init_bottleneck_params(key, in_channels, out_channels, expansion=4,
                           downsampling=False):
    c1 = out_channels
    c3 = out_channels * expansion
    keys = jax.random.split(key, 8)

    def bn(kk, c):
        k1, k2, k3, k4 = jax.random.split(kk, 4)
        gamma = 1.0 + 0.1 * jax.random.normal(k1, (c,), jnp.float32)
        beta = 0.1 * jax.random.normal(k2, (c,), jnp.float32)
        mean = 0.1 * jax.random.normal(k3, (c,), jnp.float32)
        var = 0.5 + jax.random.uniform(k4, (c,), jnp.float32)
        return _fold_bn(gamma, beta, mean, var)

    p = {}
    p["w1"] = 0.1 * jax.random.normal(keys[0], (in_channels, c1), jnp.float32)
    p["s1"], p["b1"] = bn(keys[1], c1)
    p["w2"] = 0.1 * jax.random.normal(keys[2], (3, 3, c1, c1), jnp.float32)
    p["s2"], p["b2"] = bn(keys[3], c1)
    p["w3"] = 0.1 * jax.random.normal(keys[4], (c1, c3), jnp.float32)
    p["s3"], p["b3"] = bn(keys[5], c3)
    if downsampling:
        p["wd"] = 0.1 * jax.random.normal(keys[6], (in_channels, c3), jnp.float32)
        p["sd"], p["bd"] = bn(keys[7], c3)
    return p


def bottleneck_forward(x_nchw, params, *, stride=1, downsampling=False):
    x = jnp.transpose(x_nchw, (0, 2, 3, 1))          # NCHW -> NHWC boundary glue
    n, h, w, cin = x.shape
    c1 = params["w1"].shape[1]
    c3 = params["w3"].shape[1]
    c1p = _round_up(c1, LANE)                        # lane-dense channels
    c3p = _round_up(c3, LANE)
    cin_p = _round_up(cin, 16)                       # bf16 sublane packing

    # Fold BN scales into the (bf16) conv weights; keep biases in f32.
    w1p = _pad2d(params["w1"] * params["s1"][None, :],
                 cin_p, c1p).astype(jnp.bfloat16)
    b1p = _pad_vec(params["b1"], c1p)
    w2f = params["w2"] * params["s2"][None, None, None, :]
    w2p = jnp.pad(w2f, ((0, 0), (0, 0), (0, c1p - c1), (0, c1p - c1)))
    w2p = w2p.reshape(9 * c1p, c1p).astype(jnp.bfloat16)   # rows: (kh, kw, ci)
    b2p = _pad_vec(params["b2"], c1p)
    w3p = _pad2d(params["w3"] * params["s3"][None, :],
                 c1p, c3p).astype(jnp.bfloat16)
    b3p = _pad_vec(params["b3"], c3p)

    # Stage 1+2: fused conv1 + BN + ReLU and conv2 (3x3, stride) + BN + ReLU.
    y2 = conv1_conv2(x, w1p, b1p, w2p, b2p, stride=stride)  # (n, ho*wo, c1p) bf16
    ho = (h + 2 - 3) // stride + 1
    wo = (w + 2 - 3) // stride + 1
    m = n * ho * wo
    y2r = y2.reshape(m, c1p)

    # Stage 3: conv3 + BN fused with the residual path, add and ReLU.
    if downsampling:
        wdp = _pad2d(params["wd"] * params["sd"][None, :],
                     cin_p, c3p).astype(jnp.bfloat16)
        bdp = _pad_vec(params["bd"], c3p)
        xs = x[:, ::stride, ::stride, :]
        xs = jnp.pad(xs, ((0, 0), (0, 0), (0, 0), (0, cin_p - cin)))
        xs = xs.reshape(m, cin_p).astype(jnp.bfloat16)
        out = conv3_residual(y2r, w3p, b3p, xs_rows=xs, wdp=wdp, bdp=bdp,
                             out_dtype=x.dtype)
    else:
        assert stride == 1 and cin == c3, \
            "identity residual requires stride == 1 and in_channels == out*expansion"
        res = x.reshape(m, cin)
        if c3p != c3:
            res = jnp.pad(res, ((0, 0), (0, c3p - c3)))
        res = res.astype(jnp.bfloat16)
        out = conv3_residual(y2r, w3p, b3p, residual_rows=res,
                             out_dtype=x.dtype)

    out = out[:, :c3].reshape(n, ho, wo, c3)
    return jnp.transpose(out, (0, 3, 1, 2))          # NHWC -> NCHW


# --------------------------- pure-JAX reference ------------------------------


def bottleneck_ref(x_nchw, params, *, stride=1, downsampling=False):
    x = jnp.transpose(x_nchw, (0, 2, 3, 1))
    dn = ("NHWC", "HWIO", "NHWC")

    def conv(inp, w, s, pad):
        return lax.conv_general_dilated(inp, w, (s, s), pad, dimension_numbers=dn,
                                        precision=lax.Precision.HIGHEST)

    cin = x.shape[-1]
    c1 = params["w1"].shape[1]
    c3 = params["w3"].shape[1]
    y = conv(x, params["w1"].reshape(1, 1, cin, c1), 1, "VALID")
    y = jnp.maximum(y * params["s1"] + params["b1"], 0.0)
    y = conv(y, params["w2"], stride, ((1, 1), (1, 1)))
    y = jnp.maximum(y * params["s2"] + params["b2"], 0.0)
    y = conv(y, params["w3"].reshape(1, 1, c1, c3), 1, "VALID")
    y = y * params["s3"] + params["b3"]
    if downsampling:
        r = conv(x, params["wd"].reshape(1, 1, cin, c3), stride, "VALID")
        r = r * params["sd"] + params["bd"]
    else:
        r = x
    out = jnp.maximum(y + r, 0.0)
    return jnp.transpose(out, (0, 3, 1, 2))


# ----------------------------------- main ------------------------------------


if __name__ == "__main__":
    key = jax.random.PRNGKey(0)
    configs = [
        # downsampling block, stride 2
        dict(n=2, cin=16, h=16, w=16, out_channels=8, expansion=4,
             stride=2, downsampling=True),
        # identity block, stride 1 (in_channels == out_channels * expansion)
        dict(n=2, cin=32, h=8, w=8, out_channels=8, expansion=4,
             stride=1, downsampling=False),
    ]

    for idx, cfg in enumerate(configs):
        key, kx, kp = jax.random.split(key, 3)
        x = jax.random.normal(kx, (cfg["n"], cfg["cin"], cfg["h"], cfg["w"]),
                              jnp.float32)                      # NCHW like PyTorch
        params = init_bottleneck_params(kp, cfg["cin"], cfg["out_channels"],
                                        expansion=cfg["expansion"],
                                        downsampling=cfg["downsampling"])
        fwd = jax.jit(functools.partial(bottleneck_forward,
                                        stride=cfg["stride"],
                                        downsampling=cfg["downsampling"]))
        out = jax.block_until_ready(fwd(x, params))
        ref = bottleneck_ref(x, params, stride=cfg["stride"],
                             downsampling=cfg["downsampling"])

        c3 = cfg["out_channels"] * cfg["expansion"]
        ho = (cfg["h"] + 2 - 3) // cfg["stride"] + 1
        assert out.shape == (cfg["n"], c3, ho, ho), (idx, out.shape)
        # bf16 data path (f32 accumulation) vs f32 HIGHEST-precision reference.
        if not jnp.allclose(out, ref, atol=3e-2, rtol=3e-2):
            raise AssertionError(
                f"config {idx}: Pallas BottleNeck output mismatch vs JAX reference")

    print("KERNEL_OK")
</pallas_src>

<mosaic_0001>
module attributes {stable_mosaic.version = 11 : i64} {
  func.func @copy_kernel(%arg0: i32, %arg1: memref<8x128xf32, #tpu.memory_space<vmem>>, %arg2: memref<8x128xf32, #tpu.memory_space<vmem>>) attributes {dimension_semantics = [#tpu.dimension_semantics<arbitrary>], iteration_bounds = array<i64: 1>, scalar_prefetch = 0 : i64, scratch_operands = 0 : i64, tpu.core_type = #tpu.core_type<tc>, window_params = [{pipeline_mode = #tpu.pipeline_mode<synchronous>, transform_indices = @transform_0, window_bounds = array<i64: 8, 128>}, {pipeline_mode = #tpu.pipeline_mode<synchronous>, transform_indices = @transform_1, window_bounds = array<i64: 8, 128>}]} {
    %c0 = arith.constant 0 : index
    %c0_0 = arith.constant 0 : index
    %0 = vector.load %arg1[%c0, %c0_0] : memref<8x128xf32, #tpu.memory_space<vmem>>, vector<8x128xf32>
    %c0_1 = arith.constant 0 : index
    %c0_2 = arith.constant 0 : index
    %1 = vector.load %arg2[%c0_1, %c0_2] : memref<8x128xf32, #tpu.memory_space<vmem>>, vector<8x128xf32>
    tpu.vector_store %arg2[%c0_1, %c0_2], %0 {strides = array<i32>} : memref<8x128xf32, #tpu.memory_space<vmem>>, vector<8x128xf32>,
    return
  }
  func.func @transform_0(%arg0: i32) -> (i32, i32) {
    %c0_i32 = arith.constant 0 : i32
    %c0_i32_0 = arith.constant 0 : i32
    %c0_i32_1 = arith.constant 0 : i32
    return %c0_i32, %c0_i32_0 : i32, i32
  }
  func.func @transform_1(%arg0: i32) -> (i32, i32) {
    %c0_i32 = arith.constant 0 : i32
    %c0_i32_0 = arith.constant 0 : i32
    %c0_i32_1 = arith.constant 0 : i32
    return %c0_i32, %c0_i32_0 : i32, i32
  }
}

module attributes {stable_mosaic.version = 11 : i64} {
  func.func @_conv1_conv2_kernel(%arg0: i32, %arg1: memref<1x4x160x16xbf16, #tpu.memory_space<vmem>>, %arg2: memref<4x160x1xf32, #tpu.memory_space<vmem>>, %arg3: memref<16x128xbf16, #tpu.memory_space<vmem>>, %arg4: memref<1x128xf32, #tpu.memory_space<vmem>>, %arg5: memref<1152x128xbf16, #tpu.memory_space<vmem>>, %arg6: memref<1x128xf32, #tpu.memory_space<vmem>>, %arg7: memref<1x64x128xbf16, #tpu.memory_space<vmem>>, %arg8: memref<4x160x128xf32, #tpu.memory_space<vmem>>) attributes {dimension_semantics = [#tpu.dimension_semantics<parallel>], iteration_bounds = array<i64: 2>, scalar_prefetch = 0 : i64, scratch_operands = 1 : i64, tpu.core_type = #tpu.core_type<tc>, window_params = [{transform_indices = @transform_0, window_bounds = array<i64: 1, 4, 160, 16>}, {pipeline_mode = #tpu.pipeline_mode<synchronous>, transform_indices = @transform_1, window_bounds = array<i64: 4, 160, 1>}, {pipeline_mode = #tpu.pipeline_mode<synchronous>, transform_indices = @transform_2, window_bounds = array<i64: 16, 128>}, {pipeline_mode = #tpu.pipeline_mode<synchronous>, transform_indices = @transform_3, window_bounds = array<i64: 1, 128>}, {pipeline_mode = #tpu.pipeline_mode<synchronous>, transform_indices = @transform_4, window_bounds = array<i64: 1152, 128>}, {pipeline_mode = #tpu.pipeline_mode<synchronous>, transform_indices = @transform_5, window_bounds = array<i64: 1, 128>}, {transform_indices = @transform_6, window_bounds = array<i64: 1, 64, 128>}]} {
    %c0 = arith.constant 0 : index
    %c0_0 = arith.constant 0 : index
    %c0_1 = arith.constant 0 : index
    %c0_2 = arith.constant 0 : index
    %0 = vector.load %arg1[%c0, %c0_0, %c0_1, %c0_2] : memref<1x4x160x16xbf16, #tpu.memory_space<vmem>>, vector<1x1x160x16xbf16>
    %1 = vector.shape_cast %0 : vector<1x1x160x16xbf16> to vector<160x16xbf16>
    %c0_3 = arith.constant 0 : index
    %c0_4 = arith.constant 0 : index
    %2 = vector.load %arg3[%c0_3, %c0_4] : memref<16x128xbf16, #tpu.memory_space<vmem>>, vector<16x128xbf16>
    %cst = arith.constant dense<0.000000e+00> : vector<160x128xf32>
    %3 = tpu.matmul %1, %2, %cst {dimension_numbers = #tpu.dot_dimension_numbers<[1], [0], [0], [1], [0, 0, 1, 1], [], []>} : vector<160x16xbf16>, vector<16x128xbf16>, vector<160x128xf32> -> vector<160x128xf32>
    %c0_5 = arith.constant 0 : index
    %c0_6 = arith.constant 0 : index
    %4 = vector.load %arg4[%c0_5, %c0_6] : memref<1x128xf32, #tpu.memory_space<vmem>>, vector<1x128xf32>
    %5 = vector.broadcast %4 : vector<1x128xf32> to vector<160x128xf32>
    %6 = arith.addf %3, %5 : vector<160x128xf32>
    %cst_7 = arith.constant 0.000000e+00 : f32
    %7 = vector.broadcast %cst_7 : f32 to vector<160x128xf32>
    %8 = arith.maximumf %6, %7 : vector<160x128xf32>
    %c0_8 = arith.constant 0 : index
    %c0_9 = arith.constant 0 : index
    %c0_10 = arith.constant 0 : index
    %9 = vector.load %arg2[%c0_8, %c0_9, %c0_10] : memref<4x160x1xf32, #tpu.memory_space<vmem>>, vector<1x160x1xf32>
    %10 = vector.shape_cast %9 : vector<1x160x1xf32> to vector<160x1xf32>
    %11 = vector.broadcast %10 : vector<160x1xf32> to vector<160x128xf32>
    %12 = arith.mulf %8, %11 : vector<160x128xf32>
    %c0_11 = arith.constant 0 : index
    %c0_12 = arith.constant 0 : index
    %c0_13 = arith.constant 0 : index
    %13 = vector.load %arg8[%c0_11, %c0_12, %c0_13] : memref<4x160x128xf32, #tpu.memory_space<vmem>>, vector<1x160x128xf32>
    %14 = vector.shape_cast %13 : vector<1x160x128xf32> to vector<160x128xf32>
    %15 = vector.shape_cast %12 : vector<160x128xf32> to vector<1x160x128xf32>
    tpu.vector_store %arg8[%c0_11, %c0_12, %c0_13], %15 {strides = array<i32>} : memref<4x160x128xf32, #tpu.memory_space<vmem>>, vector<1x160x128xf32>,
    %c0_14 = arith.constant 0 : index
    %c1 = arith.constant 1 : index
    %c0_15 = arith.constant 0 : index
    %c0_16 = arith.constant 0 : index
    %16 = vector.load %arg1[%c0_14, %c1, %c0_15, %c0_16] : memref<1x4x160x16xbf16, #tpu.memory_space<vmem>>, vector<1x1x160x16xbf16>
    %17 = vector.shape_cast %16 : vector<1x1x160x16xbf16> to vector<160x16xbf16>
    %c0_17 = arith.constant 0 : index
    %c0_18 = arith.constant 0 : index
    %18 = vector.load %arg3[%c0_17, %c0_18] : memref<16x128xbf16, #tpu.memory_space<vmem>>, vector<16x128xbf16>
    %cst_19 = arith.constant dense<0.000000e+00> : vector<160x128xf32>
    %19 = tpu.matmul %17, %18, %cst_19 {dimension_numbers = #tpu.dot_dimension_numbers<[1], [0], [0], [1], [0, 0, 1, 1], [], []>} : vector<160x16xbf16>, vector<16x128xbf16>, vector<160x128xf32> -> vector<160x128xf32>
    %c0_20 = arith.constant 0 : index
    %c0_21 = arith.constant 0 : index
    %20 = vector.load %arg4[%c0_20, %c0_21] : memref<1x128xf32, #tpu.memory_space<vmem>>, vector<1x128xf32>
    %21 = vector.broadcast %20 : vector<1x128xf32> to vector<160x128xf32>
    %22 = arith.addf %19, %21 : vector<160x128xf32>
    %cst_22 = arith.constant 0.000000e+00 : f32
    %23 = vector.broadcast %cst_22 : f32 to vector<160x128xf32>
    %24 = arith.maximumf %22, %23 : vector<160x128xf32>
    %c1_23 = arith.constant 1 : index
    %c0_24 = arith.constant 0 : index
    %c0_25 = arith.constant 0 : index
    %25 = vector.load %arg2[%c1_23, %c0_24, %c0_25] : memref<4x160x1xf32, #tpu.memory_space<vmem>>, vector<1x160x1xf32>
    %26 = vector.shape_cast %25 : vector<1x160x1xf32> to vector<160x1xf32>
    %27 = vector.broadcast %26 : vector<160x1xf32> to vector<160x128xf32>
    %28 = arith.mulf %24, %27 : vector<160x128xf32>
    %c1_26 = arith.constant 1 : index
    %c0_27 = arith.constant 0 : index
    %c0_28 = arith.constant 0 : index
    %29 = vector.load %arg8[%c1_26, %c0_27, %c0_28] : memref<4x160x128xf32, #tpu.memory_space<vmem>>, vector<1x160x128xf32>
    %30 = vector.shape_cast %29 : vector<1x160x128xf32> to vector<160x128xf32>
    %31 = vector.shape_cast %28 : vector<160x128xf32> to vector<1x160x128xf32>
    tpu.vector_store %arg8[%c1_26, %c0_27, %c0_28], %31 {strides = array<i32>} : memref<4x160x128xf32, #tpu.memory_space<vmem>>, vector<1x160x128xf32>,
    %c0_29 = arith.constant 0 : index
    %c2 = arith.constant 2 : index
    %c0_30 = arith.constant 0 : index
    %c0_31 = arith.constant 0 : index
    %32 = vector.load %arg1[%c0_29, %c2, %c0_30, %c0_31] : memref<1x4x160x16xbf16, #tpu.memory_space<vmem>>, vector<1x1x160x16xbf16>
    %33 = vector.shape_cast %32 : vector<1x1x160x16xbf16> to vector<160x16xbf16>
    %c0_32 = arith.constant 0 : index
    %c0_33 = arith.constant 0 : index
    %34 = vector.load %arg3[%c0_32, %c0_33] : memref<16x128xbf16, #tpu.memory_space<vmem>>, vector<16x128xbf16>
    %cst_34 = arith.constant dense<0.000000e+00> : vector<160x128xf32>
    %35 = tpu.matmul %33, %34, %cst_34 {dimension_numbers = #tpu.dot_dimension_numbers<[1], [0], [0], [1], [0, 0, 1, 1], [], []>} : vector<160x16xbf16>, vector<16x128xbf16>, vector<160x128xf32> -> vector<160x128xf32>
    %c0_35 = arith.constant 0 : index
    %c0_36 = arith.constant 0 : index
    %36 = vector.load %arg4[%c0_35, %c0_36] : memref<1x128xf32, #tpu.memory_space<vmem>>, vector<1x128xf32>
    %37 = vector.broadcast %36 : vector<1x128xf32> to vector<160x128xf32>
    %38 = arith.addf %35, %37 : vector<160x128xf32>
    %cst_37 = arith.constant 0.000000e+00 : f32
    %39 = vector.broadcast %cst_37 : f32 to vector<160x128xf32>
    %40 = arith.maximumf %38, %39 : vector<160x128xf32>
    %c2_38 = arith.constant 2 : index
    %c0_39 = arith.constant 0 : index
    %c0_40 = arith.constant 0 : index
    %41 = vector.load %arg2[%c2_38, %c0_39, %c0_40] : memref<4x160x1xf32, #tpu.memory_space<vmem>>, vector<1x160x1xf32>
    %42 = vector.shape_cast %41 : vector<1x160x1xf32> to vector<160x1xf32>
    %43 = vector.broadcast %42 : vector<160x1xf32> to vector<160x128xf32>
    %44 = arith.mulf %40, %43 : vector<160x128xf32>
    %c2_41 = arith.constant 2 : index
    %c0_42 = arith.constant 0 : index
    %c0_43 = arith.constant 0 : index
    %45 = vector.load %arg8[%c2_41, %c0_42, %c0_43] : memref<4x160x128xf32, #tpu.memory_space<vmem>>, vector<1x160x128xf32>
    %46 = vector.shape_cast %45 : vector<1x160x128xf32> to vector<160x128xf32>
    %47 = vector.shape_cast %44 : vector<160x128xf32> to vector<1x160x128xf32>
    tpu.vector_store %arg8[%c2_41, %c0_42, %c0_43], %47 {strides = array<i32>} : memref<4x160x128xf32, #tpu.memory_space<vmem>>, vector<1x160x128xf32>,
    %c0_44 = arith.constant 0 : index
    %c3 = arith.constant 3 : index
    %c0_45 = arith.constant 0 : index
    %c0_46 = arith.constant 0 : index
    %48 = vector.load %arg1[%c0_44, %c3, %c0_45, %c0_46] : memref<1x4x160x16xbf16, #tpu.memory_space<vmem>>, vector<1x1x160x16xbf16>
    %49 = vector.shape_cast %48 : vector<1x1x160x16xbf16> to vector<160x16xbf16>
    %c0_47 = arith.constant 0 : index
    %c0_48 = arith.constant 0 : index
    %50 = vector.load %arg3[%c0_47, %c0_48] : memref<16x128xbf16, #tpu.memory_space<vmem>>, vector<16x128xbf16>
    %cst_49 = arith.constant dense<0.000000e+00> : vector<160x128xf32>
    %51 = tpu.matmul %49, %50, %cst_49 {dimension_numbers = #tpu.dot_dimension_numbers<[1], [0], [0], [1], [0, 0, 1, 1], [], []>} : vector<160x16xbf16>, vector<16x128xbf16>, vector<160x128xf32> -> vector<160x128xf32>
    %c0_50 = arith.constant 0 : index
    %c0_51 = arith.constant 0 : index
    %52 = vector.load %arg4[%c0_50, %c0_51] : memref<1x128xf32, #tpu.memory_space<vmem>>, vector<1x128xf32>
    %53 = vector.broadcast %52 : vector<1x128xf32> to vector<160x128xf32>
    %54 = arith.addf %51, %53 : vector<160x128xf32>
    %cst_52 = arith.constant 0.000000e+00 : f32
    %55 = vector.broadcast %cst_52 : f32 to vector<160x128xf32>
    %56 = arith.maximumf %54, %55 : vector<160x128xf32>
    %c3_53 = arith.constant 3 : index
    %c0_54 = arith.constant 0 : index
    %c0_55 = arith.constant 0 : index
    %57 = vector.load %arg2[%c3_53, %c0_54, %c0_55] : memref<4x160x1xf32, #tpu.memory_space<vmem>>, vector<1x160x1xf32>
    %58 = vector.shape_cast %57 : vector<1x160x1xf32> to vector<160x1xf32>
    %59 = vector.broadcast %58 : vector<160x1xf32> to vector<160x128xf32>
    %60 = arith.mulf %56, %59 : vector<160x128xf32>
    %c3_56 = arith.constant 3 : index
    %c0_57 = arith.constant 0 : index
    %c0_58 = arith.constant 0 : index
    %61 = vector.load %arg8[%c3_56, %c0_57, %c0_58] : memref<4x160x128xf32, #tpu.memory_space<vmem>>, vector<1x160x128xf32>
    %62 = vector.shape_cast %61 : vector<1x160x128xf32> to vector<160x128xf32>
    %63 = vector.shape_cast %60 : vector<160x128xf32> to vector<1x160x128xf32>
    tpu.vector_store %arg8[%c3_56, %c0_57, %c0_58], %63 {strides = array<i32>} : memref<4x160x128xf32, #tpu.memory_space<vmem>>, vector<1x160x128xf32>,
    %cst_59 = arith.constant 0.000000e+00 : f32
    %64 = vector.broadcast %cst_59 : f32 to vector<128x128xf32>
    %c0_60 = arith.constant 0 : index
    %c0_61 = arith.constant 0 : index
    %c0_62 = arith.constant 0 : index
    %65 = vector.load %arg8[%c0_60, %c0_61, %c0_62] : memref<4x160x128xf32, #tpu.memory_space<vmem>>, vector<1x128x128xf32>
    %66 = vector.shape_cast %65 : vector<1x128x128xf32> to vector<128x128xf32>
    %67 = arith.truncf %66 : vector<128x128xf32> to vector<128x128xbf16>
    %c0_63 = arith.constant 0 : index
    %c0_64 = arith.constant 0 : index
    %68 = vector.load %arg5[%c0_63, %c0_64] : memref<1152x128xbf16, #tpu.memory_space<vmem>>, vector<128x128xbf16>
    %cst_65 = arith.constant dense<0.000000e+00> : vector<128x128xf32>
    %69 = tpu.matmul %67, %68, %cst_65 {dimension_numbers = #tpu.dot_dimension_numbers<[1], [0], [0], [1], [0, 0, 1, 1], [], []>} : vector<128x128xbf16>, vector<128x128xbf16>, vector<128x128xf32> -> vector<128x128xf32>
    %70 = arith.addf %64, %69 : vector<128x128xf32>
    %c1_66 = arith.constant 1 : index
    %c0_67 = arith.constant 0 : index
    %c0_68 = arith.constant 0 : index
    %71 = vector.load %arg8[%c1_66, %c0_67, %c0_68] : memref<4x160x128xf32, #tpu.memory_space<vmem>>, vector<1x128x128xf32>
    %72 = vector.shape_cast %71 : vector<1x128x128xf32> to vector<128x128xf32>
    %73 = arith.truncf %72 : vector<128x128xf32> to vector<128x128xbf16>
    %c128 = arith.constant 128 : index
    %c0_69 = arith.constant 0 : index
    %74 = vector.load %arg5[%c128, %c0_69] : memref<1152x128xbf16, #tpu.memory_space<vmem>>, vector<128x128xbf16>
    %cst_70 = arith.constant dense<0.000000e+00> : vector<128x128xf32>
    %75 = tpu.matmul %73, %74, %cst_70 {dimension_numbers = #tpu.dot_dimension_numbers<[1], [0], [0], [1], [0, 0, 1, 1], [], []>} : vector<128x128xbf16>, vector<128x128xbf16>, vector<128x128xf32> -> vector<128x128xf32>
    %76 = arith.addf %70, %75 : vector<128x128xf32>
    %c0_71 = arith.constant 0 : index
    %c1_72 = arith.constant 1 : index
    %c0_73 = arith.constant 0 : index
    %77 = vector.load %arg8[%c0_71, %c1_72, %c0_73] : memref<4x160x128xf32, #tpu.memory_space<vmem>>, vector<1x128x128xf32>
    %78 = vector.shape_cast %77 : vector<1x128x128xf32> to vector<128x128xf32>
    %79 = arith.truncf %78 : vector<128x128xf32> to vector<128x128xbf16>
    %c256 = arith.constant 256 : index
    %c0_74 = arith.constant 0 : index
    %80 = vector.load %arg5[%c256, %c0_74] : memref<1152x128xbf16, #tpu.memory_space<vmem>>, vector<128x128xbf16>
    %cst_75 = arith.constant dense<0.000000e+00> : vector<128x128xf32>
    %81 = tpu.matmul %79, %80, %cst_75 {dimension_numbers = #tpu.dot_dimension_numbers<[1], [0], [0], [1], [0, 0, 1, 1], [], []>} : vector<128x128xbf16>, vector<128x128xbf16>, vector<128x128xf32> -> vector<128x128xf32>
    %82 = arith.addf %76, %81 : vector<128x128xf32>
    %c2_76 = arith.constant 2 : index
    %c0_77 = arith.constant 0 : index
    %c0_78 = arith.constant 0 : index
    %83 = vector.load %arg8[%c2_76, %c0_77, %c0_78] : memref<4x160x128xf32, #tpu.memory_space<vmem>>, vector<1x128x128xf32>
    %84 = vector.shape_cast %83 : vector<1x128x128xf32> to vector<128x128xf32>
    %85 = arith.truncf %84 : vector<128x128xf32> to vector<128x128xbf16>
    %c384 = arith.constant 384 : index
    %c0_79 = arith.constant 0 : index
    %86 = vector.load %arg5[%c384, %c0_79] : memref<1152x128xbf16, #tpu.memory_space<vmem>>, vector<128x128xbf16>
    %cst_80 = arith.constant dense<0.000000e+00> : vector<128x128xf32>
    %87 = tpu.matmul %85, %86, %cst_80 {dimension_numbers = #tpu.dot_dimension_numbers<[1], [0], [0], [1], [0, 0, 1, 1], [], []>} : vector<128x128xbf16>, vector<128x128xbf16>, vector<128x128xf32> -> vector<128x128xf32>
    %88 = arith.addf %82, %87 : vector<128x128xf32>
    %c3_81 = arith.constant 3 : index
    %c0_82 = arith.constant 0 : index
    %c0_83 = arith.constant 0 : index
    %89 = vector.load %arg8[%c3_81, %c0_82, %c0_83] : memref<4x160x128xf32, #tpu.memory_space<vmem>>, vector<1x128x128xf32>
    %90 = vector.shape_cast %89 : vector<1x128x128xf32> to vector<128x128xf32>
    %91 = arith.truncf %90 : vector<128x128xf32> to vector<128x128xbf16>
    %c512 = arith.constant 512 : index
    %c0_84 = arith.constant 0 : index
    %92 = vector.load %arg5[%c512, %c0_84] : memref<1152x128xbf16, #tpu.memory_space<vmem>>, vector<128x128xbf16>
    %cst_85 = arith.constant dense<0.000000e+00> : vector<128x128xf32>
    %93 = tpu.matmul %91, %92, %cst_85 {dimension_numbers = #tpu.dot_dimension_numbers<[1], [0], [0], [1], [0, 0, 1, 1], [], []>} : vector<128x128xbf16>, vector<128x128xbf16>, vector<128x128xf32> -> vector<128x128xf32>
    %94 = arith.addf %88, %93 : vector<128x128xf32>
    %c2_86 = arith.constant 2 : index
    %c1_87 = arith.constant 1 : index
    %c0_88 = arith.constant 0 : index
    %95 = vector.load %arg8[%c2_86, %c1_87, %c0_88] : memref<4x160x128xf32, #tpu.memory_space<vmem>>, vector<1x128x128xf32>
    %96 = vector.shape_cast %95 : vector<1x128x128xf32> to vector<128x128xf32>
    %97 = arith.truncf %96 : vector<128x128xf32> to vector<128x128xbf16>
    %c640 = arith.constant 640 : index
    %c0_89 = arith.constant 0 : index
    %98 = vector.load %arg5[%c640, %c0_89] : memref<1152x128xbf16, #tpu.memory_space<vmem>>, vector<128x128xbf16>
    %cst_90 = arith.constant dense<0.000000e+00> : vector<128x128xf32>
    %99 = tpu.matmul %97, %98, %cst_90 {dimension_numbers = #tpu.dot_dimension_numbers<[1], [0], [0], [1], [0, 0, 1, 1], [], []>} : vector<128x128xbf16>, vector<128x128xbf16>, vector<128x128xf32> -> vector<128x128xf32>
    %100 = arith.addf %94, %99 : vector<128x128xf32>
    %c0_91 = arith.constant 0 : index
    %c16 = arith.constant 16 : index
    %c0_92 = arith.constant 0 : index
    %101 = vector.load %arg8[%c0_91, %c16, %c0_92] : memref<4x160x128xf32, #tpu.memory_space<vmem>>, vector<1x128x128xf32>
    %102 = vector.shape_cast %101 : vector<1x128x128xf32> to vector<128x128xf32>
    %103 = arith.truncf %102 : vector<128x128xf32> to vector<128x128xbf16>
    %c768 = arith.constant 768 : index
    %c0_93 = arith.constant 0 : index
    %104 = vector.load %arg5[%c768, %c0_93] : memref<1152x128xbf16, #tpu.memory_space<vmem>>, vector<128x128xbf16>
    %cst_94 = arith.constant dense<0.000000e+00> : vector<128x128xf32>
    %105 = tpu.matmul %103, %104, %cst_94 {dimension_numbers = #tpu.dot_dimension_numbers<[1], [0], [0], [1], [0, 0, 1, 1], [], []>} : vector<128x128xbf16>, vector<128x128xbf16>, vector<128x128xf32> -> vector<128x128xf32>
    %106 = arith.addf %100, %105 : vector<128x128xf32>
    %c1_95 = arith.constant 1 : index
    %c16_96 = arith.constant 16 : index
    %c0_97 = arith.constant 0 : index
    %107 = vector.load %arg8[%c1_95, %c16_96, %c0_97] : memref<4x160x128xf32, #tpu.memory_space<vmem>>, vector<1x128x128xf32>
    %108 = vector.shape_cast %107 : vector<1x128x128xf32> to vector<128x128xf32>
    %109 = arith.truncf %108 : vector<128x128xf32> to vector<128x128xbf16>
    %c896 = arith.constant 896 : index
    %c0_98 = arith.constant 0 : index
    %110 = vector.load %arg5[%c896, %c0_98] : memref<1152x128xbf16, #tpu.memory_space<vmem>>, vector<128x128xbf16>
    %cst_99 = arith.constant dense<0.000000e+00> : vector<128x128xf32>
    %111 = tpu.matmul %109, %110, %cst_99 {dimension_numbers = #tpu.dot_dimension_numbers<[1], [0], [0], [1], [0, 0, 1, 1], [], []>} : vector<128x128xbf16>, vector<128x128xbf16>, vector<128x128xf32> -> vector<128x128xf32>
    %112 = arith.addf %106, %111 : vector<128x128xf32>
    %c0_100 = arith.constant 0 : index
    %c17 = arith.constant 17 : index
    %c0_101 = arith.constant 0 : index
    %113 = vector.load %arg8[%c0_100, %c17, %c0_101] : memref<4x160x128xf32, #tpu.memory_space<vmem>>, vector<1x128x128xf32>
    %114 = vector.shape_cast %113 : vector<1x128x128xf32> to vector<128x128xf32>
    %115 = arith.truncf %114 : vector<128x128xf32> to vector<128x128xbf16>
    %c1024 = arith.constant 1024 : index
    %c0_102 = arith.constant 0 : index
    %116 = vector.load %arg5[%c1024, %c0_102] : memref<1152x128xbf16, #tpu.memory_space<vmem>>, vector<128x128xbf16>
    %cst_103 = arith.constant dense<0.000000e+00> : vector<128x128xf32>
    %117 = tpu.matmul %115, %116, %cst_103 {dimension_numbers = #tpu.dot_dimension_numbers<[1], [0], [0], [1], [0, 0, 1, 1], [], []>} : vector<128x128xbf16>, vector<128x128xbf16>, vector<128x128xf32> -> vector<128x128xf32>
    %118 = arith.addf %112, %117 : vector<128x128xf32>
    %c0_104 = arith.constant 0 : index
    %c0_105 = arith.constant 0 : index
    %119 = vector.load %arg6[%c0_104, %c0_105] : memref<1x128xf32, #tpu.memory_space<vmem>>, vector<1x128xf32>
    %120 = vector.broadcast %119 : vector<1x128xf32> to vector<128x128xf32>
    %121 = arith.addf %118, %120 : vector<128x128xf32>
    %cst_106 = arith.constant 0.000000e+00 : f32
    %122 = vector.broadcast %cst_106 : f32 to vector<128x128xf32>
    %123 = arith.maximumf %121, %122 : vector<128x128xf32>
    %124 = vector.shape_cast %123 : vector<128x128xf32> to vector<8x16x128xf32>
    %125 = vector.extract_strided_slice %124 {offsets = [0, 0, 0], sizes = [8, 8, 128], strides = [1, 1, 1]} : vector<8x16x128xf32> to vector<8x8x128xf32>
    %126 = vector.shape_cast %125 : vector<8x8x128xf32> to vector<64x128xf32>
    %127 = arith.truncf %126 : vector<64x128xf32> to vector<64x128xbf16>
    %c0_107 = arith.constant 0 : index
    %c0_108 = arith.constant 0 : index
    %c0_109 = arith.constant 0 : index
    %128 = vector.load %arg7[%c0_107, %c0_108, %c0_109] : memref<1x64x128xbf16, #tpu.memory_space<vmem>>, vector<1x64x128xbf16>
    %129 = vector.shape_cast %128 : vector<1x64x128xbf16> to vector<64x128xbf16>
    %130 = vector.shape_cast %127 : vector<64x128xbf16> to vector<1x64x128xbf16>
    tpu.vector_store %arg7[%c0_107, %c0_108, %c0_109], %130 {strides = array<i32>} : memref<1x64x128xbf16, #tpu.memory_space<vmem>>, vector<1x64x128xbf16>,
    return
  }
  func.func @transform_0(%arg0: i32) -> (i32, i32, i32, i32) {
    %c0_i32 = arith.constant 0 : i32
    %c0_i32_0 = arith.constant 0 : i32
    %c0_i32_1 = arith.constant 0 : i32
    %c0_i32_2 = arith.constant 0 : i32
    return %arg0, %c0_i32, %c0_i32_0, %c0_i32_1 : i32, i32, i32, i32
  }
  func.func @transform_1(%arg0: i32) -> (i32, i32, i32) {
    %c0_i32 = arith.constant 0 : i32
    %c0_i32_0 = arith.constant 0 : i32
    %c0_i32_1 = arith.constant 0 : i32
    %c0_i32_2 = arith.constant 0 : i32
    return %c0_i32, %c0_i32_0, %c0_i32_1 : i32, i32, i32
  }
  func.func @transform_2(%arg0: i32) -> (i32, i32) {
    %c0_i32 = arith.constant 0 : i32
    %c0_i32_0 = arith.constant 0 : i32
    %c0_i32_1 = arith.constant 0 : i32
    return %c0_i32, %c0_i32_0 : i32, i32
  }
  func.func @transform_3(%arg0: i32) -> (i32, i32) {
    %c0_i32 = arith.constant 0 : i32
    %c0_i32_0 = arith.constant 0 : i32
    %c0_i32_1 = arith.constant 0 : i32
    return %c0_i32, %c0_i32_0 : i32, i32
  }
  func.func @transform_4(%arg0: i32) -> (i32, i32) {
    %c0_i32 = arith.constant 0 : i32
    %c0_i32_0 = arith.constant 0 : i32
    %c0_i32_1 = arith.constant 0 : i32
    return %c0_i32, %c0_i32_0 : i32, i32
  }
  func.func @transform_5(%arg0: i32) -> (i32, i32) {
    %c0_i32 = arith.constant 0 : i32
    %c0_i32_0 = arith.constant 0 : i32
    %c0_i32_1 = arith.constant 0 : i32
    return %c0_i32, %c0_i32_0 : i32, i32
  }
  func.func @transform_6(%arg0: i32) -> (i32, i32, i32) {
    %c0_i32 = arith.constant 0 : i32
    %c0_i32_0 = arith.constant 0 : i32
    %c0_i32_1 = arith.constant 0 : i32
    return %arg0, %c0_i32, %c0_i32_0 : i32, i32, i32
  }
}

module attributes {stable_mosaic.version = 11 : i64} {
  func.func @_final_ds_kernel(%arg0: i32, %arg1: memref<128x128xbf16, #tpu.memory_space<vmem>>, %arg2: memref<128x128xbf16, #tpu.memory_space<vmem>>, %arg3: memref<1x128xf32, #tpu.memory_space<vmem>>, %arg4: memref<128x16xbf16, #tpu.memory_space<vmem>>, %arg5: memref<16x128xbf16, #tpu.memory_space<vmem>>, %arg6: memref<1x128xf32, #tpu.memory_space<vmem>>, %arg7: memref<128x128xf32, #tpu.memory_space<vmem>>) attributes {dimension_semantics = [#tpu.dimension_semantics<parallel>], iteration_bounds = array<i64: 1>, scalar_prefetch = 0 : i64, scratch_operands = 0 : i64, tpu.core_type = #tpu.core_type<tc>, window_params = [{transform_indices = @transform_0, window_bounds = array<i64: 128, 128>}, {pipeline_mode = #tpu.pipeline_mode<synchronous>, transform_indices = @transform_1, window_bounds = array<i64: 128, 128>}, {pipeline_mode = #tpu.pipeline_mode<synchronous>, transform_indices = @transform_2, window_bounds = array<i64: 1, 128>}, {transform_indices = @transform_3, window_bounds = array<i64: 128, 16>}, {pipeline_mode = #tpu.pipeline_mode<synchronous>, transform_indices = @transform_4, window_bounds = array<i64: 16, 128>}, {pipeline_mode = #tpu.pipeline_mode<synchronous>, transform_indices = @transform_5, window_bounds = array<i64: 1, 128>}, {transform_indices = @transform_6, window_bounds = array<i64: 128, 128>}]} {
    %c0 = arith.constant 0 : index
    %c0_0 = arith.constant 0 : index
    %0 = vector.load %arg1[%c0, %c0_0] : memref<128x128xbf16, #tpu.memory_space<vmem>>, vector<128x128xbf16>
    %c0_1 = arith.constant 0 : index
    %c0_2 = arith.constant 0 : index
    %1 = vector.load %arg2[%c0_1, %c0_2] : memref<128x128xbf16, #tpu.memory_space<vmem>>, vector<128x128xbf16>
    %cst = arith.constant dense<0.000000e+00> : vector<128x128xf32>
    %2 = tpu.matmul %0, %1, %cst {dimension_numbers = #tpu.dot_dimension_numbers<[1], [0], [0], [1], [0, 0, 1, 1], [], []>} : vector<128x128xbf16>, vector<128x128xbf16>, vector<128x128xf32> -> vector<128x128xf32>
    %c0_3 = arith.constant 0 : index
    %c0_4 = arith.constant 0 : index
    %3 = vector.load %arg3[%c0_3, %c0_4] : memref<1x128xf32, #tpu.memory_space<vmem>>, vector<1x128xf32>
    %4 = vector.broadcast %3 : vector<1x128xf32> to vector<128x128xf32>
    %5 = arith.addf %2, %4 : vector<128x128xf32>
    %c0_5 = arith.constant 0 : index
    %c0_6 = arith.constant 0 : index
    %6 = vector.load %arg4[%c0_5, %c0_6] : memref<128x16xbf16, #tpu.memory_space<vmem>>, vector<128x16xbf16>
    %c0_7 = arith.constant 0 : index
    %c0_8 = arith.constant 0 : index
    %7 = vector.load %arg5[%c0_7, %c0_8] : memref<16x128xbf16, #tpu.memory_space<vmem>>, vector<16x128xbf16>
    %cst_9 = arith.constant dense<0.000000e+00> : vector<128x128xf32>
    %8 = tpu.matmul %6, %7, %cst_9 {dimension_numbers = #tpu.dot_dimension_numbers<[1], [0], [0], [1], [0, 0, 1, 1], [], []>} : vector<128x16xbf16>, vector<16x128xbf16>, vector<128x128xf32> -> vector<128x128xf32>
    %c0_10 = arith.constant 0 : index
    %c0_11 = arith.constant 0 : index
    %9 = vector.load %arg6[%c0_10, %c0_11] : memref<1x128xf32, #tpu.memory_space<vmem>>, vector<1x128xf32>
    %10 = vector.broadcast %9 : vector<1x128xf32> to vector<128x128xf32>
    %11 = arith.addf %8, %10 : vector<128x128xf32>
    %12 = arith.addf %5, %11 : vector<128x128xf32>
    %cst_12 = arith.constant 0.000000e+00 : f32
    %13 = vector.broadcast %cst_12 : f32 to vector<128x128xf32>
    %14 = arith.maximumf %12, %13 : vector<128x128xf32>
    %c0_13 = arith.constant 0 : index
    %c0_14 = arith.constant 0 : index
    %15 = vector.load %arg7[%c0_13, %c0_14] : memref<128x128xf32, #tpu.memory_space<vmem>>, vector<128x128xf32>
    tpu.vector_store %arg7[%c0_13, %c0_14], %14 {strides = array<i32>} : memref<128x128xf32, #tpu.memory_space<vmem>>, vector<128x128xf32>,
    return
  }
  func.func @transform_0(%arg0: i32) -> (i32, i32) {
    %c0_i32 = arith.constant 0 : i32
    %c0_i32_0 = arith.constant 0 : i32
    return %arg0, %c0_i32 : i32, i32
  }
  func.func @transform_1(%arg0: i32) -> (i32, i32) {
    %c0_i32 = arith.constant 0 : i32
    %c0_i32_0 = arith.constant 0 : i32
    %c0_i32_1 = arith.constant 0 : i32
    return %c0_i32, %c0_i32_0 : i32, i32
  }
  func.func @transform_2(%arg0: i32) -> (i32, i32) {
    %c0_i32 = arith.constant 0 : i32
    %c0_i32_0 = arith.constant 0 : i32
    %c0_i32_1 = arith.constant 0 : i32
    return %c0_i32, %c0_i32_0 : i32, i32
  }
  func.func @transform_3(%arg0: i32) -> (i32, i32) {
    %c0_i32 = arith.constant 0 : i32
    %c0_i32_0 = arith.constant 0 : i32
    return %arg0, %c0_i32 : i32, i32
  }
  func.func @transform_4(%arg0: i32) -> (i32, i32) {
    %c0_i32 = arith.constant 0 : i32
    %c0_i32_0 = arith.constant 0 : i32
    %c0_i32_1 = arith.constant 0 : i32
    return %c0_i32, %c0_i32_0 : i32, i32
  }
  func.func @transform_5(%arg0: i32) -> (i32, i32) {
    %c0_i32 = arith.constant 0 : i32
    %c0_i32_0 = arith.constant 0 : i32
    %c0_i32_1 = arith.constant 0 : i32
    return %c0_i32, %c0_i32_0 : i32, i32
  }
  func.func @transform_6(%arg0: i32) -> (i32, i32) {
    %c0_i32 = arith.constant 0 : i32
    %c0_i32_0 = arith.constant 0 : i32
    return %arg0, %c0_i32 : i32, i32
  }
}

</mosaic_0001>

<llo_original>
// kernel: tpu_custom_call.1
$region0: #{tpu_custom_call.1}
  #allocation0 [shape = 'u32[]', space=smem, size = 0x4, offset = 0x4, fixed_abs, tag = 'smem constant byte address 0x4 - core index']
  #allocation1 [shape = 'u32[144,128]{1,0:T(1,128)}', space=vmem, size = 0x12000, scoped, tag = 'internal scratch']
  %s0 = inlined_call_operand.hbm [shape: f32[8,128], index: 0, kind: input, shape index: {}]
  %s1 = inlined_call_operand.hbm [shape: f32[8,128], index: 1, kind: output, shape index: {}]
  %s2 = sld [smem:[#allocation0]]
  $region18: #{tpu_custom_call.1} parent=0
    _
  %s4 = ssub.s32 1, %s2
  %s5 = scalar_select 0, %s4, %s2
  $region1: #{tpu_custom_call.1} parent=0
    #allocation2 [shape = 'u8[4096]{0}', space=vmem, size = 0x1000, scoped, tag = 'input window, operand 0, single buffered']
    #allocation3 [shape = 's32[1]{0}', space=sflag, size = 0x4, scoped, tag = 'scoped memory for tpu_custom_call.1']
    #allocation4 [shape = 's32[1]{0}', space=sflag, size = 0x4, scoped, tag = 'scoped memory for tpu_custom_call.1']
    #allocation5 [shape = 'u8[4096]{0}', space=vmem, size = 0x1000, scoped, tag = 'output window, operand 0, single buffered']
    %6 = vsyncpa [#allocation3], 0
    %7 = vsyncpa [#allocation4], 0
    // Predicated region
    $region2: #{tpu_custom_call.1} parent=1 // pred_check
      _
    $region3: #{tpu_custom_call.1} parent=1 // pred_check_branch
      %9 = sbr.rel (0) target = $region5
    $region4: #{tpu_custom_call.1} parent=1 // pred_region
      %s11 = ssub.s32 128, 128
      %12 = vsyncadd [#allocation3], %s11
      %s14 = sshll.u32 [#allocation2], 4
      %s15 = int_to_ptr.vmem [resolvable:$true] %s14
      %17 = dma.hbm_to_vmem [thread:$0]  %s0, 128, %s15, [#allocation3]
    $region5: #{tpu_custom_call.1} parent=1 // pred_fallthru
      _
    // Predicated region
    $region6: #{tpu_custom_call.1} parent=1 // pred_check
      _
    $region7: #{tpu_custom_call.1} parent=1 // pred_check_branch
      %19 = sbr.rel (0) target = $region9
    $region8: #{tpu_custom_call.1} parent=1 // pred_region
      %20 = dma.done [#allocation3], 128
    $region9: #{tpu_custom_call.1} parent=1 // pred_fallthru
      _
    %v21 = vld [vmem:[#allocation2] sm:$0xff]
    %22 = vst [vmem:[#allocation5] sm:$0xff] %v21
    // Predicated region
    $region10: #{tpu_custom_call.1} parent=1 // pred_check
      _
    $region11: #{tpu_custom_call.1} parent=1 // pred_check_branch
      %24 = sbr.rel (0) target = $region13
    $region12: #{tpu_custom_call.1} parent=1 // pred_region
      %s26 = ssub.s32 128, 128
      %27 = vsyncadd [#allocation4], %s26
      %s29 = sshll.u32 [#allocation5], 4
      %s30 = int_to_ptr.vmem [resolvable:$true] %s29
      %32 = dma.vmem_to_hbm [thread:$0]  %s30, 128, %s1, [#allocation4]
    $region13: #{tpu_custom_call.1} parent=1 // pred_fallthru
      _
    // Predicated region
    $region14: #{tpu_custom_call.1} parent=1 // pred_check
      _
    $region15: #{tpu_custom_call.1} parent=1 // pred_check_branch
      %34 = sbr.rel (0) target = $region17
    $region16: #{tpu_custom_call.1} parent=1 // pred_region
      %35 = dma.done [#allocation4], 128
    $region17: #{tpu_custom_call.1} parent=1 // pred_fallthru
      _
    %36 = vsyncpa [#allocation3], 1
    %37 = vsyncpa [#allocation4], 1

// kernel: bottleneck_forward.3
$region0: #{bottleneck_forward.3}
  #allocation0 [shape = 'u32[]', space=smem, size = 0x4, offset = 0x4, fixed_abs, tag = 'smem constant byte address 0x4 - core index']
  #allocation1 [shape = 'u32[144,128]{1,0:T(1,128)}', space=vmem, size = 0x12000, scoped, tag = 'internal scratch']
  %s0 = inlined_call_operand.vmem [shape: bf16[128,128], index: 0, kind: input, shape index: {}]
  %s1 = inlined_call_operand.vmem [shape: bf16[128,128], index: 1, kind: input, shape index: {}]
  %s2 = inlined_call_operand.vmem [shape: f32[1,128], index: 2, kind: input, shape index: {}]
  %s3 = inlined_call_operand.vmem [shape: bf16[128,16], index: 3, kind: input, shape index: {}]
  %s4 = inlined_call_operand.vmem [shape: bf16[16,128], index: 4, kind: input, shape index: {}]
  %s5 = inlined_call_operand.vmem [shape: f32[1,128], index: 5, kind: input, shape index: {}]
  %s6 = inlined_call_operand.hbm [shape: f32[128,128], index: 6, kind: output, shape index: {}]
  %s7 = sld [smem:[#allocation0]]
  $region34: #{bottleneck_forward.3} parent=0
    _
  %s9 = ssub.s32 1, %s7
  %s10 = scalar_select 0, %s9, %s7
  $region1: #{bottleneck_forward.3} parent=0
    #allocation2 [shape = 'u8[65536]{0}', space=vmem, size = 0x10000, scoped, tag = 'output window, operand 0, single buffered']
    #allocation3 [shape = 's32[1]{0}', space=sflag, size = 0x4, scoped, tag = 'scoped memory for bottleneck_forward.3']
    %11 = vsyncpa [#allocation3], 0
    // Predicated region
    $region2: #{bottleneck_forward.3} parent=1 // pred_check
      _
    $region3: #{bottleneck_forward.3} parent=1 // pred_check_branch
      %13 = sbr.rel (0) target = $region5
    $region4: #{bottleneck_forward.3} parent=1 // pred_region
      _
    $region5: #{bottleneck_forward.3} parent=1 // pred_fallthru
      _
    // Predicated region
    $region6: #{bottleneck_forward.3} parent=1 // pred_check
      _
    $region7: #{bottleneck_forward.3} parent=1 // pred_check_branch
      %15 = sbr.rel (0) target = $region9
    $region8: #{bottleneck_forward.3} parent=1 // pred_region
      _
    $region9: #{bottleneck_forward.3} parent=1 // pred_fallthru
      _
    // Predicated region
    $region10: #{bottleneck_forward.3} parent=1 // pred_check
      _
    $region11: #{bottleneck_forward.3} parent=1 // pred_check_branch
      %17 = sbr.rel (0) target = $region13
    $region12: #{bottleneck_forward.3} parent=1 // pred_region
      _
    $region13: #{bottleneck_forward.3} parent=1 // pred_fallthru
      _
    // Predicated region
    $region14: #{bottleneck_forward.3} parent=1 // pred_check
      _
    $region15: #{bottleneck_forward.3} parent=1 // pred_check_branch
      %19 = sbr.rel (0) target = $region17
    $region16: #{bottleneck_forward.3} parent=1 // pred_region
      _
    $region17: #{bottleneck_forward.3} parent=1 // pred_fallthru
      _
    // Predicated region
    $region18: #{bottleneck_forward.3} parent=1 // pred_check
      _
    $region19: #{bottleneck_forward.3} parent=1 // pred_check_branch
      %21 = sbr.rel (0) target = $region21
    $region20: #{bottleneck_forward.3} parent=1 // pred_region
      _
    $region21: #{bottleneck_forward.3} parent=1 // pred_fallthru
      _
    // Predicated region
    $region22: #{bottleneck_forward.3} parent=1 // pred_check
      _
    $region23: #{bottleneck_forward.3} parent=1 // pred_check_branch
      %23 = sbr.rel (0) target = $region25
    $region24: #{bottleneck_forward.3} parent=1 // pred_region
      _
    $region25: #{bottleneck_forward.3} parent=1 // pred_fallthru
      _
    %v25 = vld [vmem:[%s0] sm:$0xf]
    %v26 = vld [vmem:[%s0 + $0x4] sm:$0xf]
    %v27 = vld [vmem:[%s0 + $0x8] sm:$0xf]
    %v28 = vld [vmem:[%s0 + $0xc] sm:$0xf]
    %v29 = vld [vmem:[%s0 + $0x10] sm:$0xf]
    %v30 = vld [vmem:[%s0 + $0x14] sm:$0xf]
    %v31 = vld [vmem:[%s0 + $0x18] sm:$0xf]
    %v32 = vld [vmem:[%s0 + $0x1c] sm:$0xf]
    %v33 = vld [vmem:[%s0 + $0x20] sm:$0xf]
    %v34 = vld [vmem:[%s0 + $0x24] sm:$0xf]
    %v35 = vld [vmem:[%s0 + $0x28] sm:$0xf]
    %v36 = vld [vmem:[%s0 + $0x2c] sm:$0xf]
    %v37 = vld [vmem:[%s0 + $0x30] sm:$0xf]
    %v38 = vld [vmem:[%s0 + $0x34] sm:$0xf]
    %v39 = vld [vmem:[%s0 + $0x38] sm:$0xf]
    %v40 = vld [vmem:[%s0 + $0x3c] sm:$0xf]
    %v41 = vld [vmem:[%s1] sm:$0xf]
    %v42 = vld [vmem:[%s1 + $0x4] sm:$0xf]
    %v43 = vld [vmem:[%s1 + $0x8] sm:$0xf]
    %v44 = vld [vmem:[%s1 + $0xc] sm:$0xf]
    %v45 = vld [vmem:[%s1 + $0x10] sm:$0xf]
    %v46 = vld [vmem:[%s1 + $0x14] sm:$0xf]
    %v47 = vld [vmem:[%s1 + $0x18] sm:$0xf]
    %v48 = vld [vmem:[%s1 + $0x1c] sm:$0xf]
    %v49 = vld [vmem:[%s1 + $0x20] sm:$0xf]
    %v50 = vld [vmem:[%s1 + $0x24] sm:$0xf]
    %v51 = vld [vmem:[%s1 + $0x28] sm:$0xf]
    %v52 = vld [vmem:[%s1 + $0x2c] sm:$0xf]
    %v53 = vld [vmem:[%s1 + $0x30] sm:$0xf]
    %v54 = vld [vmem:[%s1 + $0x34] sm:$0xf]
    %v55 = vld [vmem:[%s1 + $0x38] sm:$0xf]
    %v56 = vld [vmem:[%s1 + $0x3c] sm:$0xf]
    %v57 = vld [vmem:[%s2] sm:$0x1]
    %v59 = vlaneseq
    %v60 = vshrl.u32 %v59, 7
    %v61 = vsub.s32 0, %v60
    %v62 = vrot.slane %v57, %v61
    %v80 = vunpack.c.l.b16 %v25
    %v81 = vunpack.c.l.b16 %v26
    %v82 = vunpack.c.l.b16 %v27
    %v83 = vunpack.c.l.b16 %v28
    %v84 = vunpack.c.l.b16 %v29
    %v85 = vunpack.c.l.b16 %v30
    %v86 = vunpack.c.l.b16 %v31
    %v87 = vunpack.c.l.b16 %v32
    %v88 = vunpack.c.l.b16 %v33
    %v89 = vunpack.c.l.b16 %v34
    %v90 = vunpack.c.l.b16 %v35
    %v91 = vunpack.c.l.b16 %v36
    %v92 = vunpack.c.l.b16 %v37
    %v93 = vunpack.c.l.b16 %v38
    %v94 = vunpack.c.l.b16 %v39
    %v95 = vunpack.c.l.b16 %v40
    %v96 = vpack.c.b16 %v81, %v80
    %v97 = vpack.c.b16 %v83, %v82
    %v98 = vpack.c.b16 %v85, %v84
    %v99 = vpack.c.b16 %v87, %v86
    %v100 = vpack.c.b16 %v89, %v88
    %v101 = vpack.c.b16 %v91, %v90
    %v102 = vpack.c.b16 %v93, %v92
    %v103 = vpack.c.b16 %v95, %v94
    %v128 = vunpack.c.l.b16 %v41
    %v129 = vunpack.c.l.b16 %v42
    %v130 = vunpack.c.l.b16 %v43
    %v131 = vunpack.c.l.b16 %v44
    %v132 = vunpack.c.l.b16 %v45
    %v133 = vunpack.c.l.b16 %v46
    %v134 = vunpack.c.l.b16 %v47
    %v135 = vunpack.c.l.b16 %v48
    %v136 = vunpack.c.l.b16 %v49
    %v137 = vunpack.c.l.b16 %v50
    %v138 = vunpack.c.l.b16 %v51
    %v139 = vunpack.c.l.b16 %v52
    %v140 = vunpack.c.l.b16 %v53
    %v141 = vunpack.c.l.b16 %v54
    %v142 = vunpack.c.l.b16 %v55
    %v143 = vunpack.c.l.b16 %v56
    %v144 = vpack.c.b16 %v129, %v128
    %v145 = vpack.c.b16 %v131, %v130
    %v146 = vpack.c.b16 %v133, %v132
    %v147 = vpack.c.b16 %v135, %v134
    %v148 = vpack.c.b16 %v137, %v136
    %v149 = vpack.c.b16 %v139, %v138
    %v150 = vpack.c.b16 %v141, %v140
    %v151 = vpack.c.b16 %v143, %v142
    %160 = vmatprep.subr.bf16.mxu0 0
    %161 = vmatpush1.bf16.msra.mxu0 %v144
    %162 = vmatprep.subr.bf16.mxu0 0
    %163 = vmatpush1.bf16.msra.mxu0 %v145
    %164 = vmatprep.subr.bf16.mxu0 0
    %165 = vmatpush1.bf16.msra.mxu0 %v146
    %166 = vmatprep.subr.bf16.mxu0 0
    %167 = vmatpush1.bf16.msra.mxu0 %v147
    %168 = vmatprep.subr.bf16.mxu0 0
    %169 = vmatpush1.bf16.msra.mxu0 %v148
    %170 = vmatprep.subr.bf16.mxu0 0
    %171 = vmatpush1.bf16.msra.mxu0 %v149
    %172 = vmatprep.subr.bf16.mxu0 0
    %173 = vmatpush1.bf16.msra.mxu0 %v150
    %174 = vmatprep.subr.bf16.mxu0 0
    %175 = vmatpush1.bf16.msra.mxu0 %v151
    %176 = vmatprep.subr.bf16.mxu0 0
    %177 = vmatpush1.bf16.msra.mxu0 0
    %178 = vmatprep.subr.bf16.mxu0 0
    %179 = vmatpush1.bf16.msra.mxu0 0
    %180 = vmatprep.subr.bf16.mxu0 0
    %181 = vmatpush1.bf16.msra.mxu0 0
    %182 = vmatprep.subr.bf16.mxu0 0
    %183 = vmatpush1.bf16.msra.mxu0 0
    %184 = vmatprep.subr.bf16.mxu0 0
    %185 = vmatpush1.bf16.msra.mxu0 0
    %186 = vmatprep.subr.bf16.mxu0 0
    %187 = vmatpush1.bf16.msra.mxu0 0
    %188 = vmatprep.subr.bf16.mxu0 0
    %189 = vmatpush1.bf16.msra.mxu0 0
    %190 = vmatprep.subr.bf16.mxu0 0
    %191 = vmatpush1.bf16.msra.mxu0 0
    %192 = vmatprep.mubr.bf16.mxu0 0
    %193 = vmatmul.mubr.bf16.gmra.mrb[0].mxu0 %v96
    %v194 = vpop.f32.mrb[0].mxu0
    %v195 = vadd.f32 %v62, %v194
    %v196 = vpop.f32.mrb[0].mxu0
    %v197 = vpop.f32.mrb[0].mxu0
    %v198 = vadd.f32 %v62, %v197
    %v199 = vpop.f32.mrb[0].mxu0
    %200 = vmatprep.mubr.bf16.mxu0 0
    %201 = vmatmul.mubr.bf16.gmra.mrb[0].mxu0 %v97
    %v202 = vpop.f32.mrb[0].mxu0
    %v203 = vadd.f32 %v62, %v202
    %v204 = vpop.f32.mrb[0].mxu0
    %v205 = vpop.f32.mrb[0].mxu0
    %v206 = vadd.f32 %v62, %v205
    %v207 = vpop.f32.mrb[0].mxu0
    %208 = vmatprep.mubr.bf16.mxu0 0
    %209 = vmatmul.mubr.bf16.gmra.mrb[0].mxu0 %v98
    %v210 = vpop.f32.mrb[0].mxu0
    %v211 = vadd.f32 %v62, %v210
    %v212 = vpop.f32.mrb[0].mxu0
    %v213 = vpop.f32.mrb[0].mxu0
    %v214 = vadd.f32 %v62, %v213
    %v215 = vpop.f32.mrb[0].mxu0
    %216 = vmatprep.mubr.bf16.mxu0 0
    %217 = vmatmul.mubr.bf16.gmra.mrb[0].mxu0 %v99
    %v218 = vpop.f32.mrb[0].mxu0
    %v219 = vadd.f32 %v62, %v218
    %v220 = vpop.f32.mrb[0].mxu0
    %v221 = vpop.f32.mrb[0].mxu0
    %v222 = vadd.f32 %v62, %v221
    %v223 = vpop.f32.mrb[0].mxu0
    %224 = vmatprep.mubr.bf16.mxu0 0
    %225 = vmatmul.mubr.bf16.gmra.mrb[0].mxu0 %v100
    %v226 = vpop.f32.mrb[0].mxu0
    %v227 = vadd.f32 %v62, %v226
    %v228 = vpop.f32.mrb[0].mxu0
    %v229 = vpop.f32.mrb[0].mxu0
    %v230 = vadd.f32 %v62, %v229
    %v231 = vpop.f32.mrb[0].mxu0
    %232 = vmatprep.mubr.bf16.mxu0 0
    %233 = vmatmul.mubr.bf16.gmra.mrb[0].mxu0 %v101
    %v234 = vpop.f32.mrb[0].mxu0
    %v235 = vadd.f32 %v62, %v234
    %v236 = vpop.f32.mrb[0].mxu0
    %v237 = vpop.f32.mrb[0].mxu0
    %v238 = vadd.f32 %v62, %v237
    %v239 = vpop.f32.mrb[0].mxu0
    %240 = vmatprep.mubr.bf16.mxu0 0
    %241 = vmatmul.mubr.bf16.gmra.mrb[0].mxu0 %v102
    %v242 = vpop.f32.mrb[0].mxu0
    %v243 = vadd.f32 %v62, %v242
    %v244 = vpop.f32.mrb[0].mxu0
    %v245 = vpop.f32.mrb[0].mxu0
    %v246 = vadd.f32 %v62, %v245
    %v247 = vpop.f32.mrb[0].mxu0
    %248 = vmatprep.mubr.bf16.mxu0 0
    %249 = vmatmul.mubr.bf16.gmra.mrb[0].mxu0 %v103
    %v250 = vpop.f32.mrb[0].mxu0
    %v251 = vadd.f32 %v62, %v250
    %v252 = vpop.f32.mrb[0].mxu0
    %v253 = vpop.f32.mrb[0].mxu0
    %v254 = vadd.f32 %v62, %v253
    %v255 = vpop.f32.mrb[0].mxu0
    %256 = vdwg.mxu0
    %v257 = vld [vmem:[%s3] sm:$0xf]
    %v258 = vld [vmem:[%s3 + $0x4] sm:$0xf]
    %v259 = vld [vmem:[%s3 + $0x8] sm:$0xf]
    %v260 = vld [vmem:[%s3 + $0xc] sm:$0xf]
    %v261 = vld [vmem:[%s3 + $0x10] sm:$0xf]
    %v262 = vld [vmem:[%s3 + $0x14] sm:$0xf]
    %v263 = vld [vmem:[%s3 + $0x18] sm:$0xf]
    %v264 = vld [vmem:[%s3 + $0x1c] sm:$0xf]
    %v265 = vld [vmem:[%s3 + $0x20] sm:$0xf]
    %v266 = vld [vmem:[%s3 + $0x24] sm:$0xf]
    %v267 = vld [vmem:[%s3 + $0x28] sm:$0xf]
    %v268 = vld [vmem:[%s3 + $0x2c] sm:$0xf]
    %v269 = vld [vmem:[%s3 + $0x30] sm:$0xf]
    %v270 = vld [vmem:[%s3 + $0x34] sm:$0xf]
    %v271 = vld [vmem:[%s3 + $0x38] sm:$0xf]
    %v272 = vld [vmem:[%s3 + $0x3c] sm:$0xf]
    %v273 = vld [vmem:[%s4] sm:$0xf]
    %v274 = vld [vmem:[%s4 + $0x4] sm:$0xf]
    %v275 = vld [vmem:[%s5] sm:$0x1]
    %v277 = vlaneseq
    %v278 = vshrl.u32 %v277, 7
    %v279 = vsub.s32 0, %v278
    %v280 = vrot.slane %v275, %v279
    %v298 = vunpack.c.l.b16 %v257
    %v299 = vunpack.c.l.b16 %v258
    %v300 = vunpack.c.l.b16 %v259
    %v301 = vunpack.c.l.b16 %v260
    %v302 = vunpack.c.l.b16 %v261
    %v303 = vunpack.c.l.b16 %v262
    %v304 = vunpack.c.l.b16 %v263
    %v305 = vunpack.c.l.b16 %v264
    %v306 = vunpack.c.l.b16 %v265
    %v307 = vunpack.c.l.b16 %v266
    %v308 = vunpack.c.l.b16 %v267
    %v309 = vunpack.c.l.b16 %v268
    %v310 = vunpack.c.l.b16 %v269
    %v311 = vunpack.c.l.b16 %v270
    %v312 = vunpack.c.l.b16 %v271
    %v313 = vunpack.c.l.b16 %v272
    %v314 = vpack.c.b16 %v299, %v298
    %v315 = vpack.c.b16 %v301, %v300
    %v316 = vpack.c.b16 %v303, %v302
    %v317 = vpack.c.b16 %v305, %v304
    %v318 = vpack.c.b16 %v307, %v306
    %v319 = vpack.c.b16 %v309, %v308
    %v320 = vpack.c.b16 %v311, %v310
    %v321 = vpack.c.b16 %v313, %v312
    %v324 = vunpack.c.l.b16 %v273
    %v325 = vunpack.c.l.b16 %v274
    %v326 = vpack.c.b16 %v325, %v324
    %vm328 = vcmask 130048
    %v330 = vsel %vm328, %v314, 0
    %v333 = vsel %vm328, %v315, 0
    %v336 = vsel %vm328, %v316, 0
    %v339 = vsel %vm328, %v317, 0
    %v342 = vsel %vm328, %v318, 0
    %v345 = vsel %vm328, %v319, 0
    %v348 = vsel %vm328, %v320, 0
    %v351 = vsel %vm328, %v321, 0
    %353 = vmatprep.subr.bf16.mxu0 0
    %354 = vmatpush1.bf16.msra.mxu0 %v326
    %355 = vmatprep.subr.bf16.mxu0 0
    %356 = vmatpush1.bf16.msra.mxu0 0
    %357 = vmatprep.subr.bf16.mxu0 0
    %358 = vmatpush1.bf16.msra.mxu0 0
    %359 = vmatprep.subr.bf16.mxu0 0
    %360 = vmatpush1.bf16.msra.mxu0 0
    %361 = vmatprep.subr.bf16.mxu0 0
    %362 = vmatpush1.bf16.msra.mxu0 0
    %363 = vmatprep.subr.bf16.mxu0 0
    %364 = vmatpush1.bf16.msra.mxu0 0
    %365 = vmatprep.subr.bf16.mxu0 0
    %366 = vmatpush1.bf16.msra.mxu0 0
    %367 = vmatprep.subr.bf16.mxu0 0
    %368 = vmatpush1.bf16.msra.mxu0 0
    %369 = vmatprep.subr.bf16.mxu0 0
    %370 = vmatpush1.bf16.msra.mxu0 0
    %371 = vmatprep.subr.bf16.mxu0 0
    %372 = vmatpush1.bf16.msra.mxu0 0
    %373 = vmatprep.subr.bf16.mxu0 0
    %374 = vmatpush1.bf16.msra.mxu0 0
    %375 = vmatprep.subr.bf16.mxu0 0
    %376 = vmatpush1.bf16.msra.mxu0 0
    %377 = vmatprep.subr.bf16.mxu0 0
    %378 = vmatpush1.bf16.msra.mxu0 0
    %379 = vmatprep.subr.bf16.mxu0 0
    %380 = vmatpush1.bf16.msra.mxu0 0
    %381 = vmatprep.subr.bf16.mxu0 0
    %382 = vmatpush1.bf16.msra.mxu0 0
    %383 = vmatprep.subr.bf16.mxu0 0
    %384 = vmatpush1.bf16.msra.mxu0 0
    %385 = vmatprep.mubr.bf16.mxu0 0
    %386 = vmatmul.mubr.bf16.gmra.mrb[0].mxu0 %v330
    %v387 = vpop.f32.mrb[0].mxu0
    %v388 = vadd.f32 %v280, %v387
    %v389 = vpop.f32.mrb[0].mxu0
    %v390 = vpop.f32.mrb[0].mxu0
    %v391 = vadd.f32 %v280, %v390
    %v392 = vpop.f32.mrb[0].mxu0
    %393 = vmatprep.mubr.bf16.mxu0 0
    %394 = vmatmul.mubr.bf16.gmra.mrb[0].mxu0 %v333
    %v395 = vpop.f32.mrb[0].mxu0
    %v396 = vadd.f32 %v280, %v395
    %v397 = vpop.f32.mrb[0].mxu0
    %v398 = vpop.f32.mrb[0].mxu0
    %v399 = vadd.f32 %v280, %v398
    %v400 = vpop.f32.mrb[0].mxu0
    %401 = vmatprep.mubr.bf16.mxu0 0
    %402 = vmatmul.mubr.bf16.gmra.mrb[0].mxu0 %v336
    %v403 = vpop.f32.mrb[0].mxu0
    %v404 = vadd.f32 %v280, %v403
    %v405 = vpop.f32.mrb[0].mxu0
    %v406 = vpop.f32.mrb[0].mxu0
    %v407 = vadd.f32 %v280, %v406
    %v408 = vpop.f32.mrb[0].mxu0
    %409 = vmatprep.mubr.bf16.mxu0 0
    %410 = vmatmul.mubr.bf16.gmra.mrb[0].mxu0 %v339
    %v411 = vpop.f32.mrb[0].mxu0
    %v412 = vadd.f32 %v280, %v411
    %v413 = vpop.f32.mrb[0].mxu0
    %v414 = vpop.f32.mrb[0].mxu0
    %v415 = vadd.f32 %v280, %v414
    %v416 = vpop.f32.mrb[0].mxu0
    %417 = vmatprep.mubr.bf16.mxu0 0
    %418 = vmatmul.mubr.bf16.gmra.mrb[0].mxu0 %v342
    %v419 = vpop.f32.mrb[0].mxu0
    %v420 = vadd.f32 %v280, %v419
    %v421 = vpop.f32.mrb[0].mxu0
    %v422 = vpop.f32.mrb[0].mxu0
    %v423 = vadd.f32 %v280, %v422
    %v424 = vpop.f32.mrb[0].mxu0
    %425 = vmatprep.mubr.bf16.mxu0 0
    %426 = vmatmul.mubr.bf16.gmra.mrb[0].mxu0 %v345
    %v427 = vpop.f32.mrb[0].mxu0
    %v428 = vadd.f32 %v280, %v427
    %v429 = vpop.f32.mrb[0].mxu0
    %v430 = vpop.f32.mrb[0].mxu0
    %v431 = vadd.f32 %v280, %v430
    %v432 = vpop.f32.mrb[0].mxu0
    %433 = vmatprep.mubr.bf16.mxu0 0
    %434 = vmatmul.mubr.bf16.gmra.mrb[0].mxu0 %v348
    %v435 = vpop.f32.mrb[0].mxu0
    %v436 = vadd.f32 %v280, %v435
    %v437 = vpop.f32.mrb[0].mxu0
    %v438 = vpop.f32.mrb[0].mxu0
    %v439 = vadd.f32 %v280, %v438
    %v440 = vpop.f32.mrb[0].mxu0
    %441 = vmatprep.mubr.bf16.mxu0 0
    %442 = vmatmul.mubr.bf16.gmra.mrb[0].mxu0 %v351
    %v443 = vpop.f32.mrb[0].mxu0
    %v444 = vadd.f32 %v280, %v443
    %v445 = vpop.f32.mrb[0].mxu0
    %v446 = vpop.f32.mrb[0].mxu0
    %v447 = vadd.f32 %v280, %v446
    %v448 = vpop.f32.mrb[0].mxu0
    %449 = vdwg.mxu0
    %v450 = vadd.f32 %v195, %v388
    %v451 = vadd.f32 %v198, %v391
    %v452 = vadd.f32 %v203, %v396
    %v453 = vadd.f32 %v206, %v399
    %v454 = vadd.f32 %v211, %v404
    %v455 = vadd.f32 %v214, %v407
    %v456 = vadd.f32 %v219, %v412
    %v457 = vadd.f32 %v222, %v415
    %v458 = vadd.f32 %v227, %v420
    %v459 = vadd.f32 %v230, %v423
    %v460 = vadd.f32 %v235, %v428
    %v461 = vadd.f32 %v238, %v431
    %v462 = vadd.f32 %v243, %v436
    %v463 = vadd.f32 %v246, %v439
    %v464 = vadd.f32 %v251, %v444
    %v465 = vadd.f32 %v254, %v447
    %v466 = vmax.f32 %v450, 0.0
    %v467 = vmax.f32 %v451, 0.0
    %v468 = vmax.f32 %v452, 0.0
    %v469 = vmax.f32 %v453, 0.0
    %v470 = vmax.f32 %v454, 0.0
    %v471 = vmax.f32 %v455, 0.0
    %v472 = vmax.f32 %v456, 0.0
    %v473 = vmax.f32 %v457, 0.0
    %v474 = vmax.f32 %v458, 0.0
    %v475 = vmax.f32 %v459, 0.0
    %v476 = vmax.f32 %v460, 0.0
    %v477 = vmax.f32 %v461, 0.0
    %v478 = vmax.f32 %v462, 0.0
    %v479 = vmax.f32 %v463, 0.0
    %v480 = vmax.f32 %v464, 0.0
    %v481 = vmax.f32 %v465, 0.0
    %482 = vst [vmem:[#allocation2] sm:$0xff] %v466
    %483 = vst [vmem:[#allocation2 + $0x8] sm:$0xff] %v467
    %484 = vst [vmem:[#allocation2 + $0x10] sm:$0xff] %v468
    %485 = vst [vmem:[#allocation2 + $0x18] sm:$0xff] %v469
    %486 = vst [vmem:[#allocation2 + $0x20] sm:$0xff] %v470
    %487 = vst [vmem:[#allocation2 + $0x28] sm:$0xff] %v471
    %488 = vst [vmem:[#allocation2 + $0x30] sm:$0xff] %v472
    %489 = vst [vmem:[#allocation2 + $0x38] sm:$0xff] %v473
    %490 = vst [vmem:[#allocation2 + $0x40] sm:$0xff] %v474
    %491 = vst [vmem:[#allocation2 + $0x48] sm:$0xff] %v475
    %492 = vst [vmem:[#allocation2 + $0x50] sm:$0xff] %v476
    %493 = vst [vmem:[#allocation2 + $0x58] sm:$0xff] %v477
    %494 = vst [vmem:[#allocation2 + $0x60] sm:$0xff] %v478
    %495 = vst [vmem:[#allocation2 + $0x68] sm:$0xff] %v479
    %496 = vst [vmem:[#allocation2 + $0x70] sm:$0xff] %v480
    %497 = vst [vmem:[#allocation2 + $0x78] sm:$0xff] %v481
    // Predicated region
    $region26: #{bottleneck_forward.3} parent=1 // pred_check
      _
    $region27: #{bottleneck_forward.3} parent=1 // pred_check_branch
      %499 = sbr.rel (0) target = $region29
    $region28: #{bottleneck_forward.3} parent=1 // pred_region
      %s501 = ssub.s32 2048, 2048
      %502 = vsyncadd [#allocation3], %s501
      %s503 = sshll.u32 [#allocation2], 4
      %s504 = int_to_ptr.vmem [resolvable:$true] %s503
      %509 = dma.vmem_to_hbm [thread:$0]  %s504, 2048, %s6, [#allocation3], 128, 128, 8
    $region29: #{bottleneck_forward.3} parent=1 // pred_fallthru
      _
    // Predicated region
    $region30: #{bottleneck_forward.3} parent=1 // pred_check
      _
    $region31: #{bottleneck_forward.3} parent=1 // pred_check_branch
      %511 = sbr.rel (0) target = $region33
    $region32: #{bottleneck_forward.3} parent=1 // pred_region
      %512 = dma.done [#allocation3], 2048
    $region33: #{bottleneck_forward.3} parent=1 // pred_fallthru
      _
    %513 = vsyncpa [#allocation3], 1

// kernel: bottleneck_forward.2
$region0: #{bottleneck_forward.2}
  #allocation0 [shape = 'u32[]', space=smem, size = 0x4, offset = 0x4, fixed_abs, tag = 'smem constant byte address 0x4 - core index']
  #allocation1 [shape = 'u32[144,128]{1,0:T(1,128)}', space=vmem, size = 0x12000, scoped, tag = 'internal scratch']
  #allocation2 [shape = 'f32[4,160,128]{2,1,0:T(8,128)}', space=vmem, size = 0x50000, scoped, tag = 'scratch operand']
  %s0 = inlined_call_operand.vmem [shape: bf16[2,4,160,16], index: 0, kind: input, shape index: {}]
  %s1 = inlined_call_operand.vmem [shape: f32[4,160,1], index: 1, kind: input, shape index: {}]
  %s2 = inlined_call_operand.vmem [shape: bf16[16,128], index: 2, kind: input, shape index: {}]
  %s3 = inlined_call_operand.vmem [shape: f32[1,128], index: 3, kind: input, shape index: {}]
  %s4 = inlined_call_operand.vmem [shape: bf16[1152,128], index: 4, kind: input, shape index: {}]
  %s5 = inlined_call_operand.vmem [shape: f32[1,128], index: 5, kind: input, shape index: {}]
  %s6 = inlined_call_operand.vmem [shape: bf16[2,64,128], index: 6, kind: output, shape index: {}]
  %s7 = sld [smem:[#allocation0]]
  $region57: #{bottleneck_forward.2} parent=0
    _
  %s9 = ssub.s32 1, %s7
  %s10 = scalar_select 0, %s9, %s7
  loop: start=0, step=1, limit=4
  $region2: #{bottleneck_forward.2} parent=0 // loop_pre_header
    _
  $region3: #{bottleneck_forward.2} parent=0 // loop_header
    %s12 = sphi 0, %s16
    %p13 = scmp.ge.s32.totalorder %s12, 4
    %s22 = sphi 0, %s24
    %s25 = sphi 0, %s22
    %s26 = sphi 0, %s25
    %s42 = sphi 0, %s26
    %s46 = sphi 0, %s46
    %s48 = sphi 0, %s46
    %s49 = sphi 0, %s48
    %s63 = sphi 0, %s49
    %s67 = sphi 0, %s67
    %s69 = sphi 0, %s67
    %s70 = sphi 0, %s69
    %s84 = sphi 0, %s70
    %s88 = sphi 0, %s88
    %s90 = sphi 0, %s88
    %s91 = sphi 0, %s90
    %s105 = sphi 0, %s91
    %s109 = sphi 0, %s109
    %s111 = sphi 0, %s109
    %s112 = sphi 0, %s111
    %s126 = sphi 0, %s112
    %s130 = sphi 0, %s130
    %s132 = sphi 0, %s130
    %s133 = sphi 0, %s132
    %s147 = sphi 0, %s133
    %s153 = sphi 0, %s155
    %s156 = sphi 0, %s153
    %s157 = sphi 0, %s156
    %s173 = sphi 0, %s157
  $region4: #{bottleneck_forward.2} parent=0 // loop_header_branch
    %15 = sbr.rel (%p13) target = $region8
  $region5: #{bottleneck_forward.2} parent=0 // loop_body
    %s17 = ssub.s32 %s12, 1
    %s18 = ssub.s32 %s12, 2
    %s19 = sadd.s32 %s12, 1
    %s20 = ssub.s32 %s12, %s19
    %p21 = scmp.eq.s32.totalorder %s20, 0
    %s23 = sadd.s32 %s22, 1
    %s24 = scalar_select %p21, %s22, %s23
    %p27 = pneg %p21
    %p28 = scmp.eq.s32.totalorder %s12, 1
    %p29 = por %p27, %p28
    %p30 = scmp.ne.s32.totalorder %s22, %s25
    %p31 = scmp.eq.s32.totalorder %s12, 0
    %p32 = por %p30, %p31
    %p33 = scmp.ne.s32.totalorder %s22, %s25
    %p34 = scmp.eq.s32.totalorder %s17, 1
    %p35 = por %p33, %p34
    %p36 = scmp.ne.s32.totalorder %s25, %s26
    %p37 = scmp.eq.s32.totalorder %s17, 0
    %p38 = por %p36, %p37
    %p39 = scmp.ne.s32.totalorder %s25, %s26
    %p40 = scmp.eq.s32.totalorder %s18, 1
    %p41 = por %p39, %p40
    %p43 = scmp.ne.s32.totalorder %s26, %s42
    %p44 = scmp.eq.s32.totalorder %s18, 0
    %p45 = por %p43, %p44
    %s47 = sadd.s32 %s46, 1
    %p50 = scmp.eq.s32.totalorder %s12, 1
    %p51 = scmp.ne.s32.totalorder %s46, %s48
    %p52 = scmp.eq.s32.totalorder %s12, 0
    %p53 = por %p51, %p52
    %p54 = scmp.ne.s32.totalorder %s46, %s48
    %p55 = scmp.eq.s32.totalorder %s17, 1
    %p56 = por %p54, %p55
    %p57 = scmp.ne.s32.totalorder %s48, %s49
    %p58 = scmp.eq.s32.totalorder %s17, 0
    %p59 = por %p57, %p58
    %p60 = scmp.ne.s32.totalorder %s48, %s49
    %p61 = scmp.eq.s32.totalorder %s18, 1
    %p62 = por %p60, %p61
    %p64 = scmp.ne.s32.totalorder %s49, %s63
    %p65 = scmp.eq.s32.totalorder %s18, 0
    %p66 = por %p64, %p65
    %s68 = sadd.s32 %s67, 1
    %p71 = scmp.eq.s32.totalorder %s12, 1
    %p72 = scmp.ne.s32.totalorder %s67, %s69
    %p73 = scmp.eq.s32.totalorder %s12, 0
    %p74 = por %p72, %p73
    %p75 = scmp.ne.s32.totalorder %s67, %s69
    %p76 = scmp.eq.s32.totalorder %s17, 1
    %p77 = por %p75, %p76
    %p78 = scmp.ne.s32.totalorder %s69, %s70
    %p79 = scmp.eq.s32.totalorder %s17, 0
    %p80 = por %p78, %p79
    %p81 = scmp.ne.s32.totalorder %s69, %s70
    %p82 = scmp.eq.s32.totalorder %s18, 1
    %p83 = por %p81, %p82
    %p85 = scmp.ne.s32.totalorder %s70, %s84
    %p86 = scmp.eq.s32.totalorder %s18, 0
    %p87 = por %p85, %p86
    %s89 = sadd.s32 %s88, 1
    %p92 = scmp.eq.s32.totalorder %s12, 1
    %p93 = scmp.ne.s32.totalorder %s88, %s90
    %p94 = scmp.eq.s32.totalorder %s12, 0
    %p95 = por %p93, %p94
    %p96 = scmp.ne.s32.totalorder %s88, %s90
    %p97 = scmp.eq.s32.totalorder %s17, 1
    %p98 = por %p96, %p97
    %p99 = scmp.ne.s32.totalorder %s90, %s91
    %p100 = scmp.eq.s32.totalorder %s17, 0
    %p101 = por %p99, %p100
    %p102 = scmp.ne.s32.totalorder %s90, %s91
    %p103 = scmp.eq.s32.totalorder %s18, 1
    %p104 = por %p102, %p103
    %p106 = scmp.ne.s32.totalorder %s91, %s105
    %p107 = scmp.eq.s32.totalorder %s18, 0
    %p108 = por %p106, %p107
    %s110 = sadd.s32 %s109, 1
    %p113 = scmp.eq.s32.totalorder %s12, 1
    %p114 = scmp.ne.s32.totalorder %s109, %s111
    %p115 = scmp.eq.s32.totalorder %s12, 0
    %p116 = por %p114, %p115
    %p117 = scmp.ne.s32.totalorder %s109, %s111
    %p118 = scmp.eq.s32.totalorder %s17, 1
    %p119 = por %p117, %p118
    %p120 = scmp.ne.s32.totalorder %s111, %s112
    %p121 = scmp.eq.s32.totalorder %s17, 0
    %p122 = por %p120, %p121
    %p123 = scmp.ne.s32.totalorder %s111, %s112
    %p124 = scmp.eq.s32.totalorder %s18, 1
    %p125 = por %p123, %p124
    %p127 = scmp.ne.s32.totalorder %s112, %s126
    %p128 = scmp.eq.s32.totalorder %s18, 0
    %p129 = por %p127, %p128
    %s131 = sadd.s32 %s130, 1
    %p134 = scmp.eq.s32.totalorder %s12, 1
    %p135 = scmp.ne.s32.totalorder %s130, %s132
    %p136 = scmp.eq.s32.totalorder %s12, 0
    %p137 = por %p135, %p136
    %p138 = scmp.ne.s32.totalorder %s130, %s132
    %p139 = scmp.eq.s32.totalorder %s17, 1
    %p140 = por %p138, %p139
    %p141 = scmp.ne.s32.totalorder %s132, %s133
    %p142 = scmp.eq.s32.totalorder %s17, 0
    %p143 = por %p141, %p142
    %p144 = scmp.ne.s32.totalorder %s132, %s133
    %p145 = scmp.eq.s32.totalorder %s18, 1
    %p146 = por %p144, %p145
    %p148 = scmp.ne.s32.totalorder %s133, %s147
    %p149 = scmp.eq.s32.totalorder %s18, 0
    %p150 = por %p148, %p149
    %s151 = ssub.s32 %s12, %s19
    %p152 = scmp.eq.s32.totalorder %s151, 0
    %s154 = sadd.s32 %s153, 1
    %s155 = scalar_select %p152, %s153, %s154
    %p158 = pneg %p152
    %p159 = scmp.eq.s32.totalorder %s12, 1
    %p160 = por %p158, %p159
    %p161 = scmp.ne.s32.totalorder %s153, %s156
    %p162 = scmp.eq.s32.totalorder %s12, 0
    %p163 = por %p161, %p162
    %p164 = scmp.ne.s32.totalorder %s153, %s156
    %p165 = scmp.eq.s32.totalorder %s17, 1
    %p166 = por %p164, %p165
    %p167 = scmp.ne.s32.totalorder %s156, %s157
    %p168 = scmp.eq.s32.totalorder %s17, 0
    %p169 = por %p167, %p168
    %p170 = scmp.ne.s32.totalorder %s156, %s157
    %p171 = scmp.eq.s32.totalorder %s18, 1
    %p172 = por %p170, %p171
    %p174 = scmp.ne.s32.totalorder %s157, %s173
    %p175 = scmp.eq.s32.totalorder %s18, 0
    %p176 = por %p174, %p175
    %p177 = scmp.le.s32.totalorder 1, %s12
    %p178 = scmp.lt.s32.totalorder %s12, 3
    %p179 = pnand %p177, %p178
    %p180 = pneg %p179
    // Predicated region
    $region9: #{bottleneck_forward.2} parent=5 // pred_check
      _
    $region10: #{bottleneck_forward.2} parent=5 // pred_check_branch
      %182 = sbr.rel (%p179) target = $region12
    $region11: #{bottleneck_forward.2} parent=5 // pred_region
      %s183 = ssub.s32 %s12, 1
      // Predicated region
      $region13: #{bottleneck_forward.2} parent=11 // pred_check
        %p184 = pneg %p59
      $region14: #{bottleneck_forward.2} parent=11 // pred_check_branch
        %186 = sbr.rel (%p184) target = $region16
      $region15: #{bottleneck_forward.2} parent=11 // pred_region
        _
      $region16: #{bottleneck_forward.2} parent=11 // pred_fallthru
        _
      // Predicated region
      $region17: #{bottleneck_forward.2} parent=11 // pred_check
        %p187 = pneg %p80
      $region18: #{bottleneck_forward.2} parent=11 // pred_check_branch
        %189 = sbr.rel (%p187) target = $region20
      $region19: #{bottleneck_forward.2} parent=11 // pred_region
        _
      $region20: #{bottleneck_forward.2} parent=11 // pred_fallthru
        _
      // Predicated region
      $region21: #{bottleneck_forward.2} parent=11 // pred_check
        %p190 = pneg %p101
      $region22: #{bottleneck_forward.2} parent=11 // pred_check_branch
        %192 = sbr.rel (%p190) target = $region24
      $region23: #{bottleneck_forward.2} parent=11 // pred_region
        _
      $region24: #{bottleneck_forward.2} parent=11 // pred_fallthru
        _
      // Predicated region
      $region25: #{bottleneck_forward.2} parent=11 // pred_check
        %p193 = pneg %p122
      $region26: #{bottleneck_forward.2} parent=11 // pred_check_branch
        %195 = sbr.rel (%p193) target = $region28
      $region27: #{bottleneck_forward.2} parent=11 // pred_region
        _
      $region28: #{bottleneck_forward.2} parent=11 // pred_fallthru
        _
      // Predicated region
      $region29: #{bottleneck_forward.2} parent=11 // pred_check
        %p196 = pneg %p143
      $region30: #{bottleneck_forward.2} parent=11 // pred_check_branch
        %198 = sbr.rel (%p196) target = $region32
      $region31: #{bottleneck_forward.2} parent=11 // pred_region
        _
      $region32: #{bottleneck_forward.2} parent=11 // pred_fallthru
        _
    $region12: #{bottleneck_forward.2} parent=5 // pred_fallthru
      _
    %p199 = scmp.lt.s32.totalorder %s12, 2
    // Predicated region
    $region33: #{bottleneck_forward.2} parent=5 // pred_check
      %p200 = pneg %p199
    $region34: #{bottleneck_forward.2} parent=5 // pred_check_branch
      %202 = sbr.rel (%p200) target = $region36
    $region35: #{bottleneck_forward.2} parent=5 // pred_region
      // Predicated region
      $region37: #{bottleneck_forward.2} parent=35 // pred_check
        %p203 = pneg %p32
      $region38: #{bottleneck_forward.2} parent=35 // pred_check_branch
        %205 = sbr.rel (%p203) target = $region40
      $region39: #{bottleneck_forward.2} parent=35 // pred_region
        %p206 = scmp.lt.s32.totalorder %s12, 1
        %s207 = scalar_select %p206, %s12, 1
        %s208 = smul.addr %s207, 80
        %s209 = smul.addr %s208, 4
        %s210 = scalar_lea.vmem %s0, %s209
      $region40: #{bottleneck_forward.2} parent=35 // pred_fallthru
        _
    $region36: #{bottleneck_forward.2} parent=5 // pred_fallthru
      _
    %p211 = scmp.le.s32.totalorder 1, %s12
    %p212 = scmp.lt.s32.totalorder %s12, 3
    %p213 = pnand %p211, %p212
    %p214 = pneg %p213
    // Predicated region
    $region41: #{bottleneck_forward.2} parent=5 // pred_check
      _
    $region42: #{bottleneck_forward.2} parent=5 // pred_check_branch
      %216 = sbr.rel (%p213) target = $region44
    $region43: #{bottleneck_forward.2} parent=5 // pred_region
      %s217 = ssub.s32 %s12, 1
      %p218 = scmp.lt.s32.totalorder %s17, 1
      %s219 = scalar_select %p218, %s17, 1
      %s220 = smul.addr %s219, 80
      %s221 = smul.addr %s220, 4
      %s222 = scalar_lea.vmem %s0, %s221
      %p223 = pneg %p38
      %p224 = pneg %p35
      %p225 = pneg %p59
      %p226 = pneg %p56
      %p227 = pneg %p80
      %p228 = pneg %p77
      %p229 = pneg %p101
      %p230 = pneg %p98
      %p231 = pneg %p122
      %p232 = pneg %p119
      %p233 = pneg %p143
      %p234 = pneg %p140
      %p235 = pneg %p169
      %p236 = pneg %p166
      %p237 = scmp.lt.s32.totalorder %s17, 1
      %s238 = scalar_select %p237, %s17, 1
      %s239 = smul.addr %s238, 8
      %s240 = smul.addr %s239, 4
      %s241 = scalar_lea.vmem %s6, %s240
      %p242 = scmp.lt.s32.totalorder %s17, 1
      %s243 = scalar_select %p242, %s17, 1
      %s244 = smul.addr %s243, 80
      %s245 = smul.addr %s244, 4
      %s246 = scalar_lea.vmem %s0, %s245
      %p247 = scmp.lt.s32.totalorder %s17, 1
      %s248 = scalar_select %p247, %s17, 1
      %s249 = smul.addr %s248, 8
      %s250 = smul.addr %s249, 4
      %s251 = scalar_lea.vmem %s6, %s250
      %v253 = vld [vmem:[%s246] sm:$0xf]
      %v254 = vld [vmem:[%s246 + $0x4] sm:$0xf]
      %v255 = vld [vmem:[%s246 + $0x8] sm:$0xf]
      %v256 = vld [vmem:[%s246 + $0xc] sm:$0xf]
      %v257 = vld [vmem:[%s246 + $0x10] sm:$0xf]
      %v258 = vld [vmem:[%s246 + $0x14] sm:$0xf]
      %v259 = vld [vmem:[%s246 + $0x18] sm:$0xf]
      %v260 = vld [vmem:[%s246 + $0x1c] sm:$0xf]
      %v261 = vld [vmem:[%s246 + $0x20] sm:$0xf]
      %v262 = vld [vmem:[%s246 + $0x24] sm:$0xf]
      %v263 = vld [vmem:[%s246 + $0x28] sm:$0xf]
      %v264 = vld [vmem:[%s246 + $0x2c] sm:$0xf]
      %v265 = vld [vmem:[%s246 + $0x30] sm:$0xf]
      %v266 = vld [vmem:[%s246 + $0x34] sm:$0xf]
      %v267 = vld [vmem:[%s246 + $0x38] sm:$0xf]
      %v268 = vld [vmem:[%s246 + $0x3c] sm:$0xf]
      %v269 = vld [vmem:[%s246 + $0x40] sm:$0xf]
      %v270 = vld [vmem:[%s246 + $0x44] sm:$0xf]
      %v271 = vld [vmem:[%s246 + $0x48] sm:$0xf]
      %v272 = vld [vmem:[%s246 + $0x4c] sm:$0xf]
      %v273 = vld [vmem:[%s2] sm:$0xf]
      %v274 = vld [vmem:[%s2 + $0x4] sm:$0xf]
      %v275 = vld [vmem:[%s3] sm:$0x1]
      %v277 = vlaneseq
      %v278 = vshrl.u32 %v277, 7
      %v279 = vsub.s32 0, %v278
      %v280 = vrot.slane %v275, %v279
      %v302 = vunpack.c.l.b16 %v253
      %v303 = vunpack.c.l.b16 %v254
      %v304 = vunpack.c.l.b16 %v255
      %v305 = vunpack.c.l.b16 %v256
      %v306 = vunpack.c.l.b16 %v257
      %v307 = vunpack.c.l.b16 %v258
      %v308 = vunpack.c.l.b16 %v259
      %v309 = vunpack.c.l.b16 %v260
      %v310 = vunpack.c.l.b16 %v261
      %v311 = vunpack.c.l.b16 %v262
      %v312 = vunpack.c.l.b16 %v263
      %v313 = vunpack.c.l.b16 %v264
      %v314 = vunpack.c.l.b16 %v265
      %v315 = vunpack.c.l.b16 %v266
      %v316 = vunpack.c.l.b16 %v267
      %v317 = vunpack.c.l.b16 %v268
      %v318 = vunpack.c.l.b16 %v269
      %v319 = vunpack.c.l.b16 %v270
      %v320 = vunpack.c.l.b16 %v271
      %v321 = vunpack.c.l.b16 %v272
      %v322 = vpack.c.b16 %v303, %v302
      %v323 = vpack.c.b16 %v305, %v304
      %v324 = vpack.c.b16 %v307, %v306
      %v325 = vpack.c.b16 %v309, %v308
      %v326 = vpack.c.b16 %v311, %v310
      %v327 = vpack.c.b16 %v313, %v312
      %v328 = vpack.c.b16 %v315, %v314
      %v329 = vpack.c.b16 %v317, %v316
      %v330 = vpack.c.b16 %v319, %v318
      %v331 = vpack.c.b16 %v321, %v320
      %v334 = vunpack.c.l.b16 %v273
      %v335 = vunpack.c.l.b16 %v274
      %v336 = vpack.c.b16 %v335, %v334
      %vm338 = vcmask 130048
      %v340 = vsel %vm338, %v322, 0
      %v343 = vsel %vm338, %v323, 0
      %v346 = vsel %vm338, %v324, 0
      %v349 = vsel %vm338, %v325, 0
      %v352 = vsel %vm338, %v326, 0
      %v355 = vsel %vm338, %v327, 0
      %v358 = vsel %vm338, %v328, 0
      %v361 = vsel %vm338, %v329, 0
      %v364 = vsel %vm338, %v330, 0
      %v367 = vsel %vm338, %v331, 0
      %369 = vmatprep.subr.bf16.mxu0 0
      %370 = vmatpush1.bf16.msra.mxu0 %v336
      %371 = vmatprep.subr.bf16.mxu0 0
      %372 = vmatpush1.bf16.msra.mxu0 0
      %373 = vmatprep.subr.bf16.mxu0 0
      %374 = vmatpush1.bf16.msra.mxu0 0
      %375 = vmatprep.subr.bf16.mxu0 0
      %376 = vmatpush1.bf16.msra.mxu0 0
      %377 = vmatprep.subr.bf16.mxu0 0
      %378 = vmatpush1.bf16.msra.mxu0 0
      %379 = vmatprep.subr.bf16.mxu0 0
      %380 = vmatpush1.bf16.msra.mxu0 0
      %381 = vmatprep.subr.bf16.mxu0 0
      %382 = vmatpush1.bf16.msra.mxu0 0
      %383 = vmatprep.subr.bf16.mxu0 0
      %384 = vmatpush1.bf16.msra.mxu0 0
      %385 = vmatprep.subr.bf16.mxu0 0
      %386 = vmatpush1.bf16.msra.mxu0 0
      %387 = vmatprep.subr.bf16.mxu0 0
      %388 = vmatpush1.bf16.msra.mxu0 0
      %389 = vmatprep.subr.bf16.mxu0 0
      %390 = vmatpush1.bf16.msra.mxu0 0
      %391 = vmatprep.subr.bf16.mxu0 0
      %392 = vmatpush1.bf16.msra.mxu0 0
      %393 = vmatprep.subr.bf16.mxu0 0
      %394 = vmatpush1.bf16.msra.mxu0 0
      %395 = vmatprep.subr.bf16.mxu0 0
      %396 = vmatpush1.bf16.msra.mxu0 0
      %397 = vmatprep.subr.bf16.mxu0 0
      %398 = vmatpush1.bf16.msra.mxu0 0
      %399 = vmatprep.subr.bf16.mxu0 0
      %400 = vmatpush1.bf16.msra.mxu0 0
      %401 = vmatprep.mubr.bf16.mxu0 0
      %402 = vmatmul.mubr.bf16.gmra.mrb[0].mxu0 %v340
      %v403 = vpop.f32.mrb[0].mxu0
      %v404 = vadd.f32 %v280, %v403
      %v405 = vpop.f32.mrb[0].mxu0
      %v406 = vpop.f32.mrb[0].mxu0
      %v407 = vadd.f32 %v280, %v406
      %v408 = vpop.f32.mrb[0].mxu0
      %409 = vmatprep.mubr.bf16.mxu0 0
      %410 = vmatmul.mubr.bf16.gmra.mrb[0].mxu0 %v343
      %v411 = vpop.f32.mrb[0].mxu0
      %v412 = vadd.f32 %v280, %v411
      %v413 = vpop.f32.mrb[0].mxu0
      %v414 = vpop.f32.mrb[0].mxu0
      %v415 = vadd.f32 %v280, %v414
      %v416 = vpop.f32.mrb[0].mxu0
      %417 = vmatprep.mubr.bf16.mxu0 0
      %418 = vmatmul.mubr.bf16.gmra.mrb[0].mxu0 %v346
      %v419 = vpop.f32.mrb[0].mxu0
      %v420 = vadd.f32 %v280, %v419
      %v421 = vpop.f32.mrb[0].mxu0
      %v422 = vpop.f32.mrb[0].mxu0
      %v423 = vadd.f32 %v280, %v422
      %v424 = vpop.f32.mrb[0].mxu0
      %425 = vmatprep.mubr.bf16.mxu0 0
      %426 = vmatmul.mubr.bf16.gmra.mrb[0].mxu0 %v349
      %v427 = vpop.f32.mrb[0].mxu0
      %v428 = vadd.f32 %v280, %v427
      %v429 = vpop.f32.mrb[0].mxu0
      %v430 = vpop.f32.mrb[0].mxu0
      %v431 = vadd.f32 %v280, %v430
      %v432 = vpop.f32.mrb[0].mxu0
      %433 = vmatprep.mubr.bf16.mxu0 0
      %434 = vmatmul.mubr.bf16.gmra.mrb[0].mxu0 %v352
      %v435 = vpop.f32.mrb[0].mxu0
      %v436 = vadd.f32 %v280, %v435
      %v437 = vpop.f32.mrb[0].mxu0
      %v438 = vpop.f32.mrb[0].mxu0
      %v439 = vadd.f32 %v280, %v438
      %v440 = vpop.f32.mrb[0].mxu0
      %441 = vmatprep.mubr.bf16.mxu0 0
      %442 = vmatmul.mubr.bf16.gmra.mrb[0].mxu0 %v355
      %v443 = vpop.f32.mrb[0].mxu0
      %v444 = vadd.f32 %v280, %v443
      %v445 = vpop.f32.mrb[0].mxu0
      %v446 = vpop.f32.mrb[0].mxu0
      %v447 = vadd.f32 %v280, %v446
      %v448 = vpop.f32.mrb[0].mxu0
      %449 = vmatprep.mubr.bf16.mxu0 0
      %450 = vmatmul.mubr.bf16.gmra.mrb[0].mxu0 %v358
      %v451 = vpop.f32.mrb[0].mxu0
      %v452 = vadd.f32 %v280, %v451
      %v453 = vpop.f32.mrb[0].mxu0
      %v454 = vpop.f32.mrb[0].mxu0
      %v455 = vadd.f32 %v280, %v454
      %v456 = vpop.f32.mrb[0].mxu0
      %457 = vmatprep.mubr.bf16.mxu0 0
      %458 = vmatmul.mubr.bf16.gmra.mrb[0].mxu0 %v361
      %v459 = vpop.f32.mrb[0].mxu0
      %v460 = vadd.f32 %v280, %v459
      %v461 = vpop.f32.mrb[0].mxu0
      %v462 = vpop.f32.mrb[0].mxu0
      %v463 = vadd.f32 %v280, %v462
      %v464 = vpop.f32.mrb[0].mxu0
      %465 = vmatprep.mubr.bf16.mxu0 0
      %466 = vmatmul.mubr.bf16.gmra.mrb[0].mxu0 %v364
      %v467 = vpop.f32.mrb[0].mxu0
      %v468 = vadd.f32 %v280, %v467
      %v469 = vpop.f32.mrb[0].mxu0
      %v470 = vpop.f32.mrb[0].mxu0
      %v471 = vadd.f32 %v280, %v470
      %v472 = vpop.f32.mrb[0].mxu0
      %473 = vmatprep.mubr.bf16.mxu0 0
      %474 = vmatmul.mubr.bf16.gmra.mrb[0].mxu0 %v367
      %v475 = vpop.f32.mrb[0].mxu0
      %v476 = vadd.f32 %v280, %v475
      %v477 = vpop.f32.mrb[0].mxu0
      %v478 = vpop.f32.mrb[0].mxu0
      %v479 = vadd.f32 %v280, %v478
      %v480 = vpop.f32.mrb[0].mxu0
      %481 = vdwg.mxu0
      %v482 = vmax.f32 %v404, 0.0
      %v483 = vmax.f32 %v407, 0.0
      %v484 = vmax.f32 %v412, 0.0
      %v485 = vmax.f32 %v415, 0.0
      %v486 = vmax.f32 %v420, 0.0
      %v487 = vmax.f32 %v423, 0.0
      %v488 = vmax.f32 %v428, 0.0
      %v489 = vmax.f32 %v431, 0.0
      %v490 = vmax.f32 %v436, 0.0
      %v491 = vmax.f32 %v439, 0.0
      %v492 = vmax.f32 %v444, 0.0
      %v493 = vmax.f32 %v447, 0.0
      %v494 = vmax.f32 %v452, 0.0
      %v495 = vmax.f32 %v455, 0.0
      %v496 = vmax.f32 %v460, 0.0
      %v497 = vmax.f32 %v463, 0.0
      %v498 = vmax.f32 %v468, 0.0
      %v499 = vmax.f32 %v471, 0.0
      %v500 = vmax.f32 %v476, 0.0
      %v501 = vmax.f32 %v479, 0.0
      %v502 = vld [vmem:[%s1] sm:$0xff]
      %v503 = vld [vmem:[%s1 + $0x8] sm:$0xff]
      %v504 = vld [vmem:[%s1 + $0x10] sm:$0xff]
      %v505 = vld [vmem:[%s1 + $0x18] sm:$0xff]
      %v506 = vld [vmem:[%s1 + $0x20] sm:$0xff]
      %v507 = vld [vmem:[%s1 + $0x28] sm:$0xff]
      %v508 = vld [vmem:[%s1 + $0x30] sm:$0xff]
      %v509 = vld [vmem:[%s1 + $0x38] sm:$0xff]
      %v510 = vld [vmem:[%s1 + $0x40] sm:$0xff]
      %v511 = vld [vmem:[%s1 + $0x48] sm:$0xff]
      %v512 = vld [vmem:[%s1 + $0x50] sm:$0xff]
      %v513 = vld [vmem:[%s1 + $0x58] sm:$0xff]
      %v514 = vld [vmem:[%s1 + $0x60] sm:$0xff]
      %v515 = vld [vmem:[%s1 + $0x68] sm:$0xff]
      %v516 = vld [vmem:[%s1 + $0x70] sm:$0xff]
      %v517 = vld [vmem:[%s1 + $0x78] sm:$0xff]
      %v518 = vld [vmem:[%s1 + $0x80] sm:$0xff]
      %v519 = vld [vmem:[%s1 + $0x88] sm:$0xff]
      %v520 = vld [vmem:[%s1 + $0x90] sm:$0xff]
      %v521 = vld [vmem:[%s1 + $0x98] sm:$0xff]
      %523 = vset.pattern.permute.xlu0 0
      %524 = vperm.xlu0 %523, %v502
      %v525 = vpop.permute.xlu0 %524
      %528 = vset.pattern.permute.xlu0 0
      %529 = vperm.xlu0 %528, %v503
      %v530 = vpop.permute.xlu0 %529
      %533 = vset.pattern.permute.xlu0 0
      %534 = vperm.xlu0 %533, %v504
      %v535 = vpop.permute.xlu0 %534
      %538 = vset.pattern.permute.xlu0 0
      %539 = vperm.xlu0 %538, %v505
      %v540 = vpop.permute.xlu0 %539
      %543 = vset.pattern.permute.xlu0 0
      %544 = vperm.xlu0 %543, %v506
      %v545 = vpop.permute.xlu0 %544
      %548 = vset.pattern.permute.xlu0 0
      %549 = vperm.xlu0 %548, %v507
      %v550 = vpop.permute.xlu0 %549
      %553 = vset.pattern.permute.xlu0 0
      %554 = vperm.xlu0 %553, %v508
      %v555 = vpop.permute.xlu0 %554
      %558 = vset.pattern.permute.xlu0 0
      %559 = vperm.xlu0 %558, %v509
      %v560 = vpop.permute.xlu0 %559
      %563 = vset.pattern.permute.xlu0 0
      %564 = vperm.xlu0 %563, %v510
      %v565 = vpop.permute.xlu0 %564
      %568 = vset.pattern.permute.xlu0 0
      %569 = vperm.xlu0 %568, %v511
      %v570 = vpop.permute.xlu0 %569
      %573 = vset.pattern.permute.xlu0 0
      %574 = vperm.xlu0 %573, %v512
      %v575 = vpop.permute.xlu0 %574
      %578 = vset.pattern.permute.xlu0 0
      %579 = vperm.xlu0 %578, %v513
      %v580 = vpop.permute.xlu0 %579
      %583 = vset.pattern.permute.xlu0 0
      %584 = vperm.xlu0 %583, %v514
      %v585 = vpop.permute.xlu0 %584
      %588 = vset.pattern.permute.xlu0 0
      %589 = vperm.xlu0 %588, %v515
      %v590 = vpop.permute.xlu0 %589
      %593 = vset.pattern.permute.xlu0 0
      %594 = vperm.xlu0 %593, %v516
      %v595 = vpop.permute.xlu0 %594
      %598 = vset.pattern.permute.xlu0 0
      %599 = vperm.xlu0 %598, %v517
      %v600 = vpop.permute.xlu0 %599
      %603 = vset.pattern.permute.xlu0 0
      %604 = vperm.xlu0 %603, %v518
      %v605 = vpop.permute.xlu0 %604
      %608 = vset.pattern.permute.xlu0 0
      %609 = vperm.xlu0 %608, %v519
      %v610 = vpop.permute.xlu0 %609
      %613 = vset.pattern.permute.xlu0 0
      %614 = vperm.xlu0 %613, %v520
      %v615 = vpop.permute.xlu0 %614
      %618 = vset.pattern.permute.xlu0 0
      %619 = vperm.xlu0 %618, %v521
      %v620 = vpop.permute.xlu0 %619
      %v622 = vmul.f32 %v482, %v525
      %v623 = vmul.f32 %v483, %v530
      %v624 = vmul.f32 %v484, %v535
      %v625 = vmul.f32 %v485, %v540
      %v626 = vmul.f32 %v486, %v545
      %v627 = vmul.f32 %v487, %v550
      %v628 = vmul.f32 %v488, %v555
      %v629 = vmul.f32 %v489, %v560
      %v630 = vmul.f32 %v490, %v565
      %v631 = vmul.f32 %v491, %v570
      %v632 = vmul.f32 %v492, %v575
      %v633 = vmul.f32 %v493, %v580
      %v634 = vmul.f32 %v494, %v585
      %v635 = vmul.f32 %v495, %v590
      %v636 = vmul.f32 %v496, %v595
      %v637 = vmul.f32 %v497, %v600
      %v638 = vmul.f32 %v498, %v605
      %v639 = vmul.f32 %v499, %v610
      %v640 = vmul.f32 %v500, %v615
      %v641 = vmul.f32 %v501, %v620
      %642 = vst [vmem:[#allocation2] sm:$0xff] %v622
      %643 = vst [vmem:[#allocation2 + $0x8] sm:$0xff] %v623
      %644 = vst [vmem:[#allocation2 + $0x10] sm:$0xff] %v624
      %645 = vst [vmem:[#allocation2 + $0x18] sm:$0xff] %v625
      %646 = vst [vmem:[#allocation2 + $0x20] sm:$0xff] %v626
      %647 = vst [vmem:[#allocation2 + $0x28] sm:$0xff] %v627
      %648 = vst [vmem:[#allocation2 + $0x30] sm:$0xff] %v628
      %649 = vst [vmem:[#allocation2 + $0x38] sm:$0xff] %v629
      %650 = vst [vmem:[#allocation2 + $0x40] sm:$0xff] %v630
      %651 = vst [vmem:[#allocation2 + $0x48] sm:$0xff] %v631
      %652 = vst [vmem:[#allocation2 + $0x50] sm:$0xff] %v632
      %653 = vst [vmem:[#allocation2 + $0x58] sm:$0xff] %v633
      %654 = vst [vmem:[#allocation2 + $0x60] sm:$0xff] %v634
      %655 = vst [vmem:[#allocation2 + $0x68] sm:$0xff] %v635
      %656 = vst [vmem:[#allocation2 + $0x70] sm:$0xff] %v636
      %657 = vst [vmem:[#allocation2 + $0x78] sm:$0xff] %v637
      %658 = vst [vmem:[#allocation2 + $0x80] sm:$0xff] %v638
      %659 = vst [vmem:[#allocation2 + $0x88] sm:$0xff] %v639
      %660 = vst [vmem:[#allocation2 + $0x90] sm:$0xff] %v640
      %661 = vst [vmem:[#allocation2 + $0x98] sm:$0xff] %v641
      %s662 = scalar_lea.vmem %s246, 80
      %v663 = vld [vmem:[%s662] sm:$0xf]
      %v664 = vld [vmem:[%s662 + $0x4] sm:$0xf]
      %v665 = vld [vmem:[%s662 + $0x8] sm:$0xf]
      %v666 = vld [vmem:[%s662 + $0xc] sm:$0xf]
      %v667 = vld [vmem:[%s662 + $0x10] sm:$0xf]
      %v668 = vld [vmem:[%s662 + $0x14] sm:$0xf]
      %v669 = vld [vmem:[%s662 + $0x18] sm:$0xf]
      %v670 = vld [vmem:[%s662 + $0x1c] sm:$0xf]
      %v671 = vld [vmem:[%s662 + $0x20] sm:$0xf]
      %v672 = vld [vmem:[%s662 + $0x24] sm:$0xf]
      %v673 = vld [vmem:[%s662 + $0x28] sm:$0xf]
      %v674 = vld [vmem:[%s662 + $0x2c] sm:$0xf]
      %v675 = vld [vmem:[%s662 + $0x30] sm:$0xf]
      %v676 = vld [vmem:[%s662 + $0x34] sm:$0xf]
      %v677 = vld [vmem:[%s662 + $0x38] sm:$0xf]
      %v678 = vld [vmem:[%s662 + $0x3c] sm:$0xf]
      %v679 = vld [vmem:[%s662 + $0x40] sm:$0xf]
      %v680 = vld [vmem:[%s662 + $0x44] sm:$0xf]
      %v681 = vld [vmem:[%s662 + $0x48] sm:$0xf]
      %v682 = vld [vmem:[%s662 + $0x4c] sm:$0xf]
      %v683 = vld [vmem:[%s2] sm:$0xf]
      %v684 = vld [vmem:[%s2 + $0x4] sm:$0xf]
      %v685 = vld [vmem:[%s3] sm:$0x1]
      %v687 = vlaneseq
      %v688 = vshrl.u32 %v687, 7
      %v689 = vsub.s32 0, %v688
      %v690 = vrot.slane %v685, %v689
      %v712 = vunpack.c.l.b16 %v663
      %v713 = vunpack.c.l.b16 %v664
      %v714 = vunpack.c.l.b16 %v665
      %v715 = vunpack.c.l.b16 %v666
      %v716 = vunpack.c.l.b16 %v667
      %v717 = vunpack.c.l.b16 %v668
      %v718 = vunpack.c.l.b16 %v669
      %v719 = vunpack.c.l.b16 %v670
      %v720 = vunpack.c.l.b16 %v671
      %v721 = vunpack.c.l.b16 %v672
      %v722 = vunpack.c.l.b16 %v673
      %v723 = vunpack.c.l.b16 %v674
      %v724 = vunpack.c.l.b16 %v675
      %v725 = vunpack.c.l.b16 %v676
      %v726 = vunpack.c.l.b16 %v677
      %v727 = vunpack.c.l.b16 %v678
      %v728 = vunpack.c.l.b16 %v679
      %v729 = vunpack.c.l.b16 %v680
      %v730 = vunpack.c.l.b16 %v681
      %v731 = vunpack.c.l.b16 %v682
      %v732 = vpack.c.b16 %v713, %v712
      %v733 = vpack.c.b16 %v715, %v714
      %v734 = vpack.c.b16 %v717, %v716
      %v735 = vpack.c.b16 %v719, %v718
      %v736 = vpack.c.b16 %v721, %v720
      %v737 = vpack.c.b16 %v723, %v722
      %v738 = vpack.c.b16 %v725, %v724
      %v739 = vpack.c.b16 %v727, %v726
      %v740 = vpack.c.b16 %v729, %v728
      %v741 = vpack.c.b16 %v731, %v730
      %v744 = vunpack.c.l.b16 %v683
      %v745 = vunpack.c.l.b16 %v684
      %v746 = vpack.c.b16 %v745, %v744
      %v749 = vsel %vm338, %v732, 0
      %v752 = vsel %vm338, %v733, 0
      %v755 = vsel %vm338, %v734, 0
      %v758 = vsel %vm338, %v735, 0
      %v761 = vsel %vm338, %v736, 0
      %v764 = vsel %vm338, %v737, 0
      %v767 = vsel %vm338, %v738, 0
      %v770 = vsel %vm338, %v739, 0
      %v773 = vsel %vm338, %v740, 0
      %v776 = vsel %vm338, %v741, 0
      %778 = vmatprep.subr.bf16.mxu0 0
      %779 = vmatpush1.bf16.msra.mxu0 %v746
      %780 = vmatprep.subr.bf16.mxu0 0
      %781 = vmatpush1.bf16.msra.mxu0 0
      %782 = vmatprep.subr.bf16.mxu0 0
      %783 = vmatpush1.bf16.msra.mxu0 0
      %784 = vmatprep.subr.bf16.mxu0 0
      %785 = vmatpush1.bf16.msra.mxu0 0
      %786 = vmatprep.subr.bf16.mxu0 0
      %787 = vmatpush1.bf16.msra.mxu0 0
      %788 = vmatprep.subr.bf16.mxu0 0
      %789 = vmatpush1.bf16.msra.mxu0 0
      %790 = vmatprep.subr.bf16.mxu0 0
      %791 = vmatpush1.bf16.msra.mxu0 0
      %792 = vmatprep.subr.bf16.mxu0 0
      %793 = vmatpush1.bf16.msra.mxu0 0
      %794 = vmatprep.subr.bf16.mxu0 0
      %795 = vmatpush1.bf16.msra.mxu0 0
      %796 = vmatprep.subr.bf16.mxu0 0
      %797 = vmatpush1.bf16.msra.mxu0 0
      %798 = vmatprep.subr.bf16.mxu0 0
      %799 = vmatpush1.bf16.msra.mxu0 0
      %800 = vmatprep.subr.bf16.mxu0 0
      %801 = vmatpush1.bf16.msra.mxu0 0
      %802 = vmatprep.subr.bf16.mxu0 0
      %803 = vmatpush1.bf16.msra.mxu0 0
      %804 = vmatprep.subr.bf16.mxu0 0
      %805 = vmatpush1.bf16.msra.mxu0 0
      %806 = vmatprep.subr.bf16.mxu0 0
      %807 = vmatpush1.bf16.msra.mxu0 0
      %808 = vmatprep.subr.bf16.mxu0 0
      %809 = vmatpush1.bf16.msra.mxu0 0
      %810 = vmatprep.mubr.bf16.mxu0 0
      %811 = vmatmul.mubr.bf16.gmra.mrb[0].mxu0 %v749
      %v812 = vpop.f32.mrb[0].mxu0
      %v813 = vadd.f32 %v690, %v812
      %v814 = vpop.f32.mrb[0].mxu0
      %v815 = vpop.f32.mrb[0].mxu0
      %v816 = vadd.f32 %v690, %v815
      %v817 = vpop.f32.mrb[0].mxu0
      %818 = vmatprep.mubr.bf16.mxu0 0
      %819 = vmatmul.mubr.bf16.gmra.mrb[0].mxu0 %v752
      %v820 = vpop.f32.mrb[0].mxu0
      %v821 = vadd.f32 %v690, %v820
      %v822 = vpop.f32.mrb[0].mxu0
      %v823 = vpop.f32.mrb[0].mxu0
      %v824 = vadd.f32 %v690, %v823
      %v825 = vpop.f32.mrb[0].mxu0
      %826 = vmatprep.mubr.bf16.mxu0 0
      %827 = vmatmul.mubr.bf16.gmra.mrb[0].mxu0 %v755
      %v828 = vpop.f32.mrb[0].mxu0
      %v829 = vadd.f32 %v690, %v828
      %v830 = vpop.f32.mrb[0].mxu0
      %v831 = vpop.f32.mrb[0].mxu0
      %v832 = vadd.f32 %v690, %v831
      %v833 = vpop.f32.mrb[0].mxu0
      %834 = vmatprep.mubr.bf16.mxu0 0
      %835 = vmatmul.mubr.bf16.gmra.mrb[0].mxu0 %v758
      %v836 = vpop.f32.mrb[0].mxu0
      %v837 = vadd.f32 %v690, %v836
      %v838 = vpop.f32.mrb[0].mxu0
      %v839 = vpop.f32.mrb[0].mxu0
      %v840 = vadd.f32 %v690, %v839
      %v841 = vpop.f32.mrb[0].mxu0
      %842 = vmatprep.mubr.bf16.mxu0 0
      %843 = vmatmul.mubr.bf16.gmra.mrb[0].mxu0 %v761
      %v844 = vpop.f32.mrb[0].mxu0
      %v845 = vadd.f32 %v690, %v844
      %v846 = vpop.f32.mrb[0].mxu0
      %v847 = vpop.f32.mrb[0].mxu0
      %v848 = vadd.f32 %v690, %v847
      %v849 = vpop.f32.mrb[0].mxu0
      %850 = vmatprep.mubr.bf16.mxu0 0
      %851 = vmatmul.mubr.bf16.gmra.mrb[0].mxu0 %v764
      %v852 = vpop.f32.mrb[0].mxu0
      %v853 = vadd.f32 %v690, %v852
      %v854 = vpop.f32.mrb[0].mxu0
      %v855 = vpop.f32.mrb[0].mxu0
      %v856 = vadd.f32 %v690, %v855
      %v857 = vpop.f32.mrb[0].mxu0
      %858 = vmatprep.mubr.bf16.mxu0 0
      %859 = vmatmul.mubr.bf16.gmra.mrb[0].mxu0 %v767
      %v860 = vpop.f32.mrb[0].mxu0
      %v861 = vadd.f32 %v690, %v860
      %v862 = vpop.f32.mrb[0].mxu0
      %v863 = vpop.f32.mrb[0].mxu0
      %v864 = vadd.f32 %v690, %v863
      %v865 = vpop.f32.mrb[0].mxu0
      %866 = vmatprep.mubr.bf16.mxu0 0
      %867 = vmatmul.mubr.bf16.gmra.mrb[0].mxu0 %v770
      %v868 = vpop.f32.mrb[0].mxu0
      %v869 = vadd.f32 %v690, %v868
      %v870 = vpop.f32.mrb[0].mxu0
      %v871 = vpop.f32.mrb[0].mxu0
      %v872 = vadd.f32 %v690, %v871
      %v873 = vpop.f32.mrb[0].mxu0
      %874 = vmatprep.mubr.bf16.mxu0 0
      %875 = vmatmul.mubr.bf16.gmra.mrb[0].mxu0 %v773
      %v876 = vpop.f32.mrb[0].mxu0
      %v877 = vadd.f32 %v690, %v876
      %v878 = vpop.f32.mrb[0].mxu0
      %v879 = vpop.f32.mrb[0].mxu0
      %v880 = vadd.f32 %v690, %v879
      %v881 = vpop.f32.mrb[0].mxu0
      %882 = vmatprep.mubr.bf16.mxu0 0
      %883 = vmatmul.mubr.bf16.gmra.mrb[0].mxu0 %v776
      %v884 = vpop.f32.mrb[0].mxu0
      %v885 = vadd.f32 %v690, %v884
      %v886 = vpop.f32.mrb[0].mxu0
      %v887 = vpop.f32.mrb[0].mxu0
      %v888 = vadd.f32 %v690, %v887
      %v889 = vpop.f32.mrb[0].mxu0
      %890 = vdwg.mxu0
      %v891 = vmax.f32 %v813, 0.0
      %v892 = vmax.f32 %v816, 0.0
      %v893 = vmax.f32 %v821, 0.0
      %v894 = vmax.f32 %v824, 0.0
      %v895 = vmax.f32 %v829, 0.0
      %v896 = vmax.f32 %v832, 0.0
      %v897 = vmax.f32 %v837, 0.0
      %v898 = vmax.f32 %v840, 0.0
      %v899 = vmax.f32 %v845, 0.0
      %v900 = vmax.f32 %v848, 0.0
      %v901 = vmax.f32 %v853, 0.0
      %v902 = vmax.f32 %v856, 0.0
      %v903 = vmax.f32 %v861, 0.0
      %v904 = vmax.f32 %v864, 0.0
      %v905 = vmax.f32 %v869, 0.0
      %v906 = vmax.f32 %v872, 0.0
      %v907 = vmax.f32 %v877, 0.0
      %v908 = vmax.f32 %v880, 0.0
      %v909 = vmax.f32 %v885, 0.0
      %v910 = vmax.f32 %v888, 0.0
      %s911 = scalar_lea.vmem %s1, 160
      %v912 = vld [vmem:[%s911] sm:$0xff]
      %v913 = vld [vmem:[%s911 + $0x8] sm:$0xff]
      %v914 = vld [vmem:[%s911 + $0x10] sm:$0xff]
      %v915 = vld [vmem:[%s911 + $0x18] sm:$0xff]
      %v916 = vld [vmem:[%s911 + $0x20] sm:$0xff]
      %v917 = vld [vmem:[%s911 + $0x28] sm:$0xff]
      %v918 = vld [vmem:[%s911 + $0x30] sm:$0xff]
      %v919 = vld [vmem:[%s911 + $0x38] sm:$0xff]
      %v920 = vld [vmem:[%s911 + $0x40] sm:$0xff]
      %v921 = vld [vmem:[%s911 + $0x48] sm:$0xff]
      %v922 = vld [vmem:[%s911 + $0x50] sm:$0xff]
      %v923 = vld [vmem:[%s911 + $0x58] sm:$0xff]
      %v924 = vld [vmem:[%s911 + $0x60] sm:$0xff]
      %v925 = vld [vmem:[%s911 + $0x68] sm:$0xff]
      %v926 = vld [vmem:[%s911 + $0x70] sm:$0xff]
      %v927 = vld [vmem:[%s911 + $0x78] sm:$0xff]
      %v928 = vld [vmem:[%s911 + $0x80] sm:$0xff]
      %v929 = vld [vmem:[%s911 + $0x88] sm:$0xff]
      %v930 = vld [vmem:[%s911 + $0x90] sm:$0xff]
      %v931 = vld [vmem:[%s911 + $0x98] sm:$0xff]
      %933 = vset.pattern.permute.xlu0 0
      %934 = vperm.xlu0 %933, %v912
      %v935 = vpop.permute.xlu0 %934
      %938 = vset.pattern.permute.xlu0 0
      %939 = vperm.xlu0 %938, %v913
      %v940 = vpop.permute.xlu0 %939
      %943 = vset.pattern.permute.xlu0 0
      %944 = vperm.xlu0 %943, %v914
      %v945 = vpop.permute.xlu0 %944
      %948 = vset.pattern.permute.xlu0 0
      %949 = vperm.xlu0 %948, %v915
      %v950 = vpop.permute.xlu0 %949
      %953 = vset.pattern.permute.xlu0 0
      %954 = vperm.xlu0 %953, %v916
      %v955 = vpop.permute.xlu0 %954
      %958 = vset.pattern.permute.xlu0 0
      %959 = vperm.xlu0 %958, %v917
      %v960 = vpop.permute.xlu0 %959
      %963 = vset.pattern.permute.xlu0 0
      %964 = vperm.xlu0 %963, %v918
      %v965 = vpop.permute.xlu0 %964
      %968 = vset.pattern.permute.xlu0 0
      %969 = vperm.xlu0 %968, %v919
      %v970 = vpop.permute.xlu0 %969
      %973 = vset.pattern.permute.xlu0 0
      %974 = vperm.xlu0 %973, %v920
      %v975 = vpop.permute.xlu0 %974
      %978 = vset.pattern.permute.xlu0 0
      %979 = vperm.xlu0 %978, %v921
      %v980 = vpop.permute.xlu0 %979
      %983 = vset.pattern.permute.xlu0 0
      %984 = vperm.xlu0 %983, %v922
      %v985 = vpop.permute.xlu0 %984
      %988 = vset.pattern.permute.xlu0 0
      %989 = vperm.xlu0 %988, %v923
      %v990 = vpop.permute.xlu0 %989
      %993 = vset.pattern.permute.xlu0 0
      %994 = vperm.xlu0 %993, %v924
      %v995 = vpop.permute.xlu0 %994
      %998 = vset.pattern.permute.xlu0 0
      %999 = vperm.xlu0 %998, %v925
      %v1000 = vpop.permute.xlu0 %999
      %1003 = vset.pattern.permute.xlu0 0
      %1004 = vperm.xlu0 %1003, %v926
      %v1005 = vpop.permute.xlu0 %1004
      %1008 = vset.pattern.permute.xlu0 0
      %1009 = vperm.xlu0 %1008, %v927
      %v1010 = vpop.permute.xlu0 %1009
      %1013 = vset.pattern.permute.xlu0 0
      %1014 = vperm.xlu0 %1013, %v928
      %v1015 = vpop.permute.xlu0 %1014
      %1018 = vset.pattern.permute.xlu0 0
      %1019 = vperm.xlu0 %1018, %v929
      %v1020 = vpop.permute.xlu0 %1019
      %1023 = vset.pattern.permute.xlu0 0
      %1024 = vperm.xlu0 %1023, %v930
      %v1025 = vpop.permute.xlu0 %1024
      %1028 = vset.pattern.permute.xlu0 0
      %1029 = vperm.xlu0 %1028, %v931
      %v1030 = vpop.permute.xlu0 %1029
      %v1032 = vmul.f32 %v891, %v935
      %v1033 = vmul.f32 %v892, %v940
      %v1034 = vmul.f32 %v893, %v945
      %v1035 = vmul.f32 %v894, %v950
      %v1036 = vmul.f32 %v895, %v955
      %v1037 = vmul.f32 %v896, %v960
      %v1038 = vmul.f32 %v897, %v965
      %v1039 = vmul.f32 %v898, %v970
      %v1040 = vmul.f32 %v899, %v975
      %v1041 = vmul.f32 %v900, %v980
      %v1042 = vmul.f32 %v901, %v985
      %v1043 = vmul.f32 %v902, %v990
      %v1044 = vmul.f32 %v903, %v995
      %v1045 = vmul.f32 %v904, %v1000
      %v1046 = vmul.f32 %v905, %v1005
      %v1047 = vmul.f32 %v906, %v1010
      %v1048 = vmul.f32 %v907, %v1015
      %v1049 = vmul.f32 %v908, %v1020
      %v1050 = vmul.f32 %v909, %v1025
      %v1051 = vmul.f32 %v910, %v1030
      %s1052 = scalar_lea.vmem [#allocation2], 160
      %1053 = vst [vmem:[%s1052] sm:$0xff] %v1032
      %1054 = vst [vmem:[%s1052 + $0x8] sm:$0xff] %v1033
      %1055 = vst [vmem:[%s1052 + $0x10] sm:$0xff] %v1034
      %1056 = vst [vmem:[%s1052 + $0x18] sm:$0xff] %v1035
      %1057 = vst [vmem:[%s1052 + $0x20] sm:$0xff] %v1036
      %1058 = vst [vmem:[%s1052 + $0x28] sm:$0xff] %v1037
      %1059 = vst [vmem:[%s1052 + $0x30] sm:$0xff] %v1038
      %1060 = vst [vmem:[%s1052 + $0x38] sm:$0xff] %v1039
      %1061 = vst [vmem:[%s1052 + $0x40] sm:$0xff] %v1040
      %1062 = vst [vmem:[%s1052 + $0x48] sm:$0xff] %v1041
      %1063 = vst [vmem:[%s1052 + $0x50] sm:$0xff] %v1042
      %1064 = vst [vmem:[%s1052 + $0x58] sm:$0xff] %v1043
      %1065 = vst [vmem:[%s1052 + $0x60] sm:$0xff] %v1044
      %1066 = vst [vmem:[%s1052 + $0x68] sm:$0xff] %v1045
      %1067 = vst [vmem:[%s1052 + $0x70] sm:$0xff] %v1046
      %1068 = vst [vmem:[%s1052 + $0x78] sm:$0xff] %v1047
      %1069 = vst [vmem:[%s1052 + $0x80] sm:$0xff] %v1048
      %1070 = vst [vmem:[%s1052 + $0x88] sm:$0xff] %v1049
      %1071 = vst [vmem:[%s1052 + $0x90] sm:$0xff] %v1050
      %1072 = vst [vmem:[%s1052 + $0x98] sm:$0xff] %v1051
      %s1073 = scalar_lea.vmem %s246, 160
      %v1074 = vld [vmem:[%s1073] sm:$0xf]
      %v1075 = vld [vmem:[%s1073 + $0x4] sm:$0xf]
      %v1076 = vld [vmem:[%s1073 + $0x8] sm:$0xf]
      %v1077 = vld [vmem:[%s1073 + $0xc] sm:$0xf]
      %v1078 = vld [vmem:[%s1073 + $0x10] sm:$0xf]
      %v1079 = vld [vmem:[%s1073 + $0x14] sm:$0xf]
      %v1080 = vld [vmem:[%s1073 + $0x18] sm:$0xf]
      %v1081 = vld [vmem:[%s1073 + $0x1c] sm:$0xf]
      %v1082 = vld [vmem:[%s1073 + $0x20] sm:$0xf]
      %v1083 = vld [vmem:[%s1073 + $0x24] sm:$0xf]
      %v1084 = vld [vmem:[%s1073 + $0x28] sm:$0xf]
      %v1085 = vld [vmem:[%s1073 + $0x2c] sm:$0xf]
      %v1086 = vld [vmem:[%s1073 + $0x30] sm:$0xf]
      %v1087 = vld [vmem:[%s1073 + $0x34] sm:$0xf]
      %v1088 = vld [vmem:[%s1073 + $0x38] sm:$0xf]
      %v1089 = vld [vmem:[%s1073 + $0x3c] sm:$0xf]
      %v1090 = vld [vmem:[%s1073 + $0x40] sm:$0xf]
      %v1091 = vld [vmem:[%s1073 + $0x44] sm:$0xf]
      %v1092 = vld [vmem:[%s1073 + $0x48] sm:$0xf]
      %v1093 = vld [vmem:[%s1073 + $0x4c] sm:$0xf]
      %v1094 = vld [vmem:[%s2] sm:$0xf]
      %v1095 = vld [vmem:[%s2 + $0x4] sm:$0xf]
      %v1096 = vld [vmem:[%s3] sm:$0x1]
      %v1098 = vlaneseq
      %v1099 = vshrl.u32 %v1098, 7
      %v1100 = vsub.s32 0, %v1099
      %v1101 = vrot.slane %v1096, %v1100
      %v1123 = vunpack.c.l.b16 %v1074
      %v1124 = vunpack.c.l.b16 %v1075
      %v1125 = vunpack.c.l.b16 %v1076
      %v1126 = vunpack.c.l.b16 %v1077
      %v1127 = vunpack.c.l.b16 %v1078
      %v1128 = vunpack.c.l.b16 %v1079
      %v1129 = vunpack.c.l.b16 %v1080
      %v1130 = vunpack.c.l.b16 %v1081
      %v1131 = vunpack.c.l.b16 %v1082
      %v1132 = vunpack.c.l.b16 %v1083
      %v1133 = vunpack.c.l.b16 %v1084
      %v1134 = vunpack.c.l.b16 %v1085
      %v1135 = vunpack.c.l.b16 %v1086
      %v1136 = vunpack.c.l.b16 %v1087
      %v1137 = vunpack.c.l.b16 %v1088
      %v1138 = vunpack.c.l.b16 %v1089
      %v1139 = vunpack.c.l.b16 %v1090
      %v1140 = vunpack.c.l.b16 %v1091
      %v1141 = vunpack.c.l.b16 %v1092
      %v1142 = vunpack.c.l.b16 %v1093
      %v1143 = vpack.c.b16 %v1124, %v1123
      %v1144 = vpack.c.b16 %v1126, %v1125
      %v1145 = vpack.c.b16 %v1128, %v1127
      %v1146 = vpack.c.b16 %v1130, %v1129
      %v1147 = vpack.c.b16 %v1132, %v1131
      %v1148 = vpack.c.b16 %v1134, %v1133
      %v1149 = vpack.c.b16 %v1136, %v1135
      %v1150 = vpack.c.b16 %v1138, %v1137
      %v1151 = vpack.c.b16 %v1140, %v1139
      %v1152 = vpack.c.b16 %v1142, %v1141
      %v1155 = vunpack.c.l.b16 %v1094
      %v1156 = vunpack.c.l.b16 %v1095
      %v1157 = vpack.c.b16 %v1156, %v1155
      %v1160 = vsel %vm338, %v1143, 0
      %v1163 = vsel %vm338, %v1144, 0
      %v1166 = vsel %vm338, %v1145, 0
      %v1169 = vsel %vm338, %v1146, 0
      %v1172 = vsel %vm338, %v1147, 0
      %v1175 = vsel %vm338, %v1148, 0
      %v1178 = vsel %vm338, %v1149, 0
      %v1181 = vsel %vm338, %v1150, 0
      %v1184 = vsel %vm338, %v1151, 0
      %v1187 = vsel %vm338, %v1152, 0
      %1189 = vmatprep.subr.bf16.mxu0 0
      %1190 = vmatpush1.bf16.msra.mxu0 %v1157
      %1191 = vmatprep.subr.bf16.mxu0 0
      %1192 = vmatpush1.bf16.msra.mxu0 0
      %1193 = vmatprep.subr.bf16.mxu0 0
      %1194 = vmatpush1.bf16.msra.mxu0 0
      %1195 = vmatprep.subr.bf16.mxu0 0
      %1196 = vmatpush1.bf16.msra.mxu0 0
      %1197 = vmatprep.subr.bf16.mxu0 0
      %1198 = vmatpush1.bf16.msra.mxu0 0
      %1199 = vmatprep.subr.bf16.mxu0 0
      %1200 = vmatpush1.bf16.msra.mxu0 0
      %1201 = vmatprep.subr.bf16.mxu0 0
      %1202 = vmatpush1.bf16.msra.mxu0 0
      %1203 = vmatprep.subr.bf16.mxu0 0
      %1204 = vmatpush1.bf16.msra.mxu0 0
      %1205 = vmatprep.subr.bf16.mxu0 0
      %1206 = vmatpush1.bf16.msra.mxu0 0
      %1207 = vmatprep.subr.bf16.mxu0 0
      %1208 = vmatpush1.bf16.msra.mxu0 0
      %1209 = vmatprep.subr.bf16.mxu0 0
      %1210 = vmatpush1.bf16.msra.mxu0 0
      %1211 = vmatprep.subr.bf16.mxu0 0
      %1212 = vmatpush1.bf16.msra.mxu0 0
      %1213 = vmatprep.subr.bf16.mxu0 0
      %1214 = vmatpush1.bf16.msra.mxu0 0
      %1215 = vmatprep.subr.bf16.mxu0 0
      %1216 = vmatpush1.bf16.msra.mxu0 0
      %1217 = vmatprep.subr.bf16.mxu0 0
      %1218 = vmatpush1.bf16.msra.mxu0 0
      %1219 = vmatprep.subr.bf16.mxu0 0
      %1220 = vmatpush1.bf16.msra.mxu0 0
      %1221 = vmatprep.mubr.bf16.mxu0 0
      %1222 = vmatmul.mubr.bf16.gmra.mrb[0].mxu0 %v1160
      %v1223 = vpop.f32.mrb[0].mxu0
      %v1224 = vadd.f32 %v1101, %v1223
      %v1225 = vpop.f32.mrb[0].mxu0
      %v1226 = vpop.f32.mrb[0].mxu0
      %v1227 = vadd.f32 %v1101, %v1226
      %v1228 = vpop.f32.mrb[0].mxu0
      %1229 = vmatprep.mubr.bf16.mxu0 0
      %1230 = vmatmul.mubr.bf16.gmra.mrb[0].mxu0 %v1163
      %v1231 = vpop.f32.mrb[0].mxu0
      %v1232 = vadd.f32 %v1101, %v1231
      %v1233 = vpop.f32.mrb[0].mxu0
      %v1234 = vpop.f32.mrb[0].mxu0
      %v1235 = vadd.f32 %v1101, %v1234
      %v1236 = vpop.f32.mrb[0].mxu0
      %1237 = vmatprep.mubr.bf16.mxu0 0
      %1238 = vmatmul.mubr.bf16.gmra.mrb[0].mxu0 %v1166
      %v1239 = vpop.f32.mrb[0].mxu0
      %v1240 = vadd.f32 %v1101, %v1239
      %v1241 = vpop.f32.mrb[0].mxu0
      %v1242 = vpop.f32.mrb[0].mxu0
      %v1243 = vadd.f32 %v1101, %v1242
      %v1244 = vpop.f32.mrb[0].mxu0
      %1245 = vmatprep.mubr.bf16.mxu0 0
      %1246 = vmatmul.mubr.bf16.gmra.mrb[0].mxu0 %v1169
      %v1247 = vpop.f32.mrb[0].mxu0
      %v1248 = vadd.f32 %v1101, %v1247
      %v1249 = vpop.f32.mrb[0].mxu0
      %v1250 = vpop.f32.mrb[0].mxu0
      %v1251 = vadd.f32 %v1101, %v1250
      %v1252 = vpop.f32.mrb[0].mxu0
      %1253 = vmatprep.mubr.bf16.mxu0 0
      %1254 = vmatmul.mubr.bf16.gmra.mrb[0].mxu0 %v1172
      %v1255 = vpop.f32.mrb[0].mxu0
      %v1256 = vadd.f32 %v1101, %v1255
      %v1257 = vpop.f32.mrb[0].mxu0
      %v1258 = vpop.f32.mrb[0].mxu0
      %v1259 = vadd.f32 %v1101, %v1258
      %v1260 = vpop.f32.mrb[0].mxu0
      %1261 = vmatprep.mubr.bf16.mxu0 0
      %1262 = vmatmul.mubr.bf16.gmra.mrb[0].mxu0 %v1175
      %v1263 = vpop.f32.mrb[0].mxu0
      %v1264 = vadd.f32 %v1101, %v1263
      %v1265 = vpop.f32.mrb[0].mxu0
      %v1266 = vpop.f32.mrb[0].mxu0
      %v1267 = vadd.f32 %v1101, %v1266
      %v1268 = vpop.f32.mrb[0].mxu0
      %1269 = vmatprep.mubr.bf16.mxu0 0
      %1270 = vmatmul.mubr.bf16.gmra.mrb[0].mxu0 %v1178
      %v1271 = vpop.f32.mrb[0].mxu0
      %v1272 = vadd.f32 %v1101, %v1271
      %v1273 = vpop.f32.mrb[0].mxu0
      %v1274 = vpop.f32.mrb[0].mxu0
      %v1275 = vadd.f32 %v1101, %v1274
      %v1276 = vpop.f32.mrb[0].mxu0
      %1277 = vmatprep.mubr.bf16.mxu0 0
      %1278 = vmatmul.mubr.bf16.gmra.mrb[0].mxu0 %v1181
      %v1279 = vpop.f32.mrb[0].mxu0
      %v1280 = vadd.f32 %v1101, %v1279
      %v1281 = vpop.f32.mrb[0].mxu0
      %v1282 = vpop.f32.mrb[0].mxu0
      %v1283 = vadd.f32 %v1101, %v1282
      %v1284 = vpop.f32.mrb[0].mxu0
      %1285 = vmatprep.mubr.bf16.mxu0 0
      %1286 = vmatmul.mubr.bf16.gmra.mrb[0].mxu0 %v1184
      %v1287 = vpop.f32.mrb[0].mxu0
      %v1288 = vadd.f32 %v1101, %v1287
      %v1289 = vpop.f32.mrb[0].mxu0
      %v1290 = vpop.f32.mrb[0].mxu0
      %v1291 = vadd.f32 %v1101, %v1290
      %v1292 = vpop.f32.mrb[0].mxu0
      %1293 = vmatprep.mubr.bf16.mxu0 0
      %1294 = vmatmul.mubr.bf16.gmra.mrb[0].mxu0 %v1187
      %v1295 = vpop.f32.mrb[0].mxu0
      %v1296 = vadd.f32 %v1101, %v1295
      %v1297 = vpop.f32.mrb[0].mxu0
      %v1298 = vpop.f32.mrb[0].mxu0
      %v1299 = vadd.f32 %v1101, %v1298
      %v1300 = vpop.f32.mrb[0].mxu0
      %1301 = vdwg.mxu0
      %v1302 = vmax.f32 %v1224, 0.0
      %v1303 = vmax.f32 %v1227, 0.0
      %v1304 = vmax.f32 %v1232, 0.0
      %v1305 = vmax.f32 %v1235, 0.0
      %v1306 = vmax.f32 %v1240, 0.0
      %v1307 = vmax.f32 %v1243, 0.0
      %v1308 = vmax.f32 %v1248, 0.0
      %v1309 = vmax.f32 %v1251, 0.0
      %v1310 = vmax.f32 %v1256, 0.0
      %v1311 = vmax.f32 %v1259, 0.0
      %v1312 = vmax.f32 %v1264, 0.0
      %v1313 = vmax.f32 %v1267, 0.0
      %v1314 = vmax.f32 %v1272, 0.0
      %v1315 = vmax.f32 %v1275, 0.0
      %v1316 = vmax.f32 %v1280, 0.0
      %v1317 = vmax.f32 %v1283, 0.0
      %v1318 = vmax.f32 %v1288, 0.0
      %v1319 = vmax.f32 %v1291, 0.0
      %v1320 = vmax.f32 %v1296, 0.0
      %v1321 = vmax.f32 %v1299, 0.0
      %s1322 = scalar_lea.vmem %s1, 320
      %v1323 = vld [vmem:[%s1322] sm:$0xff]
      %v1324 = vld [vmem:[%s1322 + $0x8] sm:$0xff]
      %v1325 = vld [vmem:[%s1322 + $0x10] sm:$0xff]
      %v1326 = vld [vmem:[%s1322 + $0x18] sm:$0xff]
      %v1327 = vld [vmem:[%s1322 + $0x20] sm:$0xff]
      %v1328 = vld [vmem:[%s1322 + $0x28] sm:$0xff]
      %v1329 = vld [vmem:[%s1322 + $0x30] sm:$0xff]
      %v1330 = vld [vmem:[%s1322 + $0x38] sm:$0xff]
      %v1331 = vld [vmem:[%s1322 + $0x40] sm:$0xff]
      %v1332 = vld [vmem:[%s1322 + $0x48] sm:$0xff]
      %v1333 = vld [vmem:[%s1322 + $0x50] sm:$0xff]
      %v1334 = vld [vmem:[%s1322 + $0x58] sm:$0xff]
      %v1335 = vld [vmem:[%s1322 + $0x60] sm:$0xff]
      %v1336 = vld [vmem:[%s1322 + $0x68] sm:$0xff]
      %v1337 = vld [vmem:[%s1322 + $0x70] sm:$0xff]
      %v1338 = vld [vmem:[%s1322 + $0x78] sm:$0xff]
      %v1339 = vld [vmem:[%s1322 + $0x80] sm:$0xff]
      %v1340 = vld [vmem:[%s1322 + $0x88] sm:$0xff]
      %v1341 = vld [vmem:[%s1322 + $0x90] sm:$0xff]
      %v1342 = vld [vmem:[%s1322 + $0x98] sm:$0xff]
      %1344 = vset.pattern.permute.xlu0 0
      %1345 = vperm.xlu0 %1344, %v1323
      %v1346 = vpop.permute.xlu0 %1345
      %1349 = vset.pattern.permute.xlu0 0
      %1350 = vperm.xlu0 %1349, %v1324
      %v1351 = vpop.permute.xlu0 %1350
      %1354 = vset.pattern.permute.xlu0 0
      %1355 = vperm.xlu0 %1354, %v1325
      %v1356 = vpop.permute.xlu0 %1355
      %1359 = vset.pattern.permute.xlu0 0
      %1360 = vperm.xlu0 %1359, %v1326
      %v1361 = vpop.permute.xlu0 %1360
      %1364 = vset.pattern.permute.xlu0 0
      %1365 = vperm.xlu0 %1364, %v1327
      %v1366 = vpop.permute.xlu0 %1365
      %1369 = vset.pattern.permute.xlu0 0
      %1370 = vperm.xlu0 %1369, %v1328
      %v1371 = vpop.permute.xlu0 %1370
      %1374 = vset.pattern.permute.xlu0 0
      %1375 = vperm.xlu0 %1374, %v1329
      %v1376 = vpop.permute.xlu0 %1375
      %1379 = vset.pattern.permute.xlu0 0
      %1380 = vperm.xlu0 %1379, %v1330
      %v1381 = vpop.permute.xlu0 %1380
      %1384 = vset.pattern.permute.xlu0 0
      %1385 = vperm.xlu0 %1384, %v1331
      %v1386 = vpop.permute.xlu0 %1385
      %1389 = vset.pattern.permute.xlu0 0
      %1390 = vperm.xlu0 %1389, %v1332
      %v1391 = vpop.permute.xlu0 %1390
      %1394 = vset.pattern.permute.xlu0 0
      %1395 = vperm.xlu0 %1394, %v1333
      %v1396 = vpop.permute.xlu0 %1395
      %1399 = vset.pattern.permute.xlu0 0
      %1400 = vperm.xlu0 %1399, %v1334
      %v1401 = vpop.permute.xlu0 %1400
      %1404 = vset.pattern.permute.xlu0 0
      %1405 = vperm.xlu0 %1404, %v1335
      %v1406 = vpop.permute.xlu0 %1405
      %1409 = vset.pattern.permute.xlu0 0
      %1410 = vperm.xlu0 %1409, %v1336
      %v1411 = vpop.permute.xlu0 %1410
      %1414 = vset.pattern.permute.xlu0 0
      %1415 = vperm.xlu0 %1414, %v1337
      %v1416 = vpop.permute.xlu0 %1415
      %1419 = vset.pattern.permute.xlu0 0
      %1420 = vperm.xlu0 %1419, %v1338
      %v1421 = vpop.permute.xlu0 %1420
      %1424 = vset.pattern.permute.xlu0 0
      %1425 = vperm.xlu0 %1424, %v1339
      %v1426 = vpop.permute.xlu0 %1425
      %1429 = vset.pattern.permute.xlu0 0
      %1430 = vperm.xlu0 %1429, %v1340
      %v1431 = vpop.permute.xlu0 %1430
      %1434 = vset.pattern.permute.xlu0 0
      %1435 = vperm.xlu0 %1434, %v1341
      %v1436 = vpop.permute.xlu0 %1435
      %1439 = vset.pattern.permute.xlu0 0
      %1440 = vperm.xlu0 %1439, %v1342
      %v1441 = vpop.permute.xlu0 %1440
      %v1443 = vmul.f32 %v1302, %v1346
      %v1444 = vmul.f32 %v1303, %v1351
      %v1445 = vmul.f32 %v1304, %v1356
      %v1446 = vmul.f32 %v1305, %v1361
      %v1447 = vmul.f32 %v1306, %v1366
      %v1448 = vmul.f32 %v1307, %v1371
      %v1449 = vmul.f32 %v1308, %v1376
      %v1450 = vmul.f32 %v1309, %v1381
      %v1451 = vmul.f32 %v1310, %v1386
      %v1452 = vmul.f32 %v1311, %v1391
      %v1453 = vmul.f32 %v1312, %v1396
      %v1454 = vmul.f32 %v1313, %v1401
      %v1455 = vmul.f32 %v1314, %v1406
      %v1456 = vmul.f32 %v1315, %v1411
      %v1457 = vmul.f32 %v1316, %v1416
      %v1458 = vmul.f32 %v1317, %v1421
      %v1459 = vmul.f32 %v1318, %v1426
      %v1460 = vmul.f32 %v1319, %v1431
      %v1461 = vmul.f32 %v1320, %v1436
      %v1462 = vmul.f32 %v1321, %v1441
      %s1463 = scalar_lea.vmem [#allocation2], 320
      %1464 = vst [vmem:[%s1463] sm:$0xff] %v1443
      %1465 = vst [vmem:[%s1463 + $0x8] sm:$0xff] %v1444
      %1466 = vst [vmem:[%s1463 + $0x10] sm:$0xff] %v1445
      %1467 = vst [vmem:[%s1463 + $0x18] sm:$0xff] %v1446
      %1468 = vst [vmem:[%s1463 + $0x20] sm:$0xff] %v1447
      %1469 = vst [vmem:[%s1463 + $0x28] sm:$0xff] %v1448
      %1470 = vst [vmem:[%s1463 + $0x30] sm:$0xff] %v1449
      %1471 = vst [vmem:[%s1463 + $0x38] sm:$0xff] %v1450
      %1472 = vst [vmem:[%s1463 + $0x40] sm:$0xff] %v1451
      %1473 = vst [vmem:[%s1463 + $0x48] sm:$0xff] %v1452
      %1474 = vst [vmem:[%s1463 + $0x50] sm:$0xff] %v1453
      %1475 = vst [vmem:[%s1463 + $0x58] sm:$0xff] %v1454
      %1476 = vst [vmem:[%s1463 + $0x60] sm:$0xff] %v1455
      %1477 = vst [vmem:[%s1463 + $0x68] sm:$0xff] %v1456
      %1478 = vst [vmem:[%s1463 + $0x70] sm:$0xff] %v1457
      %1479 = vst [vmem:[%s1463 + $0x78] sm:$0xff] %v1458
      %1480 = vst [vmem:[%s1463 + $0x80] sm:$0xff] %v1459
      %1481 = vst [vmem:[%s1463 + $0x88] sm:$0xff] %v1460
      %1482 = vst [vmem:[%s1463 + $0x90] sm:$0xff] %v1461
      %1483 = vst [vmem:[%s1463 + $0x98] sm:$0xff] %v1462
      %s1484 = scalar_lea.vmem %s246, 240
      %v1485 = vld [vmem:[%s1484] sm:$0xf]
      %v1486 = vld [vmem:[%s1484 + $0x4] sm:$0xf]
      %v1487 = vld [vmem:[%s1484 + $0x8] sm:$0xf]
      %v1488 = vld [vmem:[%s1484 + $0xc] sm:$0xf]
      %v1489 = vld [vmem:[%s1484 + $0x10] sm:$0xf]
      %v1490 = vld [vmem:[%s1484 + $0x14] sm:$0xf]
      %v1491 = vld [vmem:[%s1484 + $0x18] sm:$0xf]
      %v1492 = vld [vmem:[%s1484 + $0x1c] sm:$0xf]
      %v1493 = vld [vmem:[%s1484 + $0x20] sm:$0xf]
      %v1494 = vld [vmem:[%s1484 + $0x24] sm:$0xf]
      %v1495 = vld [vmem:[%s1484 + $0x28] sm:$0xf]
      %v1496 = vld [vmem:[%s1484 + $0x2c] sm:$0xf]
      %v1497 = vld [vmem:[%s1484 + $0x30] sm:$0xf]
      %v1498 = vld [vmem:[%s1484 + $0x34] sm:$0xf]
      %v1499 = vld [vmem:[%s1484 + $0x38] sm:$0xf]
      %v1500 = vld [vmem:[%s1484 + $0x3c] sm:$0xf]
      %v1501 = vld [vmem:[%s1484 + $0x40] sm:$0xf]
      %v1502 = vld [vmem:[%s1484 + $0x44] sm:$0xf]
      %v1503 = vld [vmem:[%s1484 + $0x48] sm:$0xf]
      %v1504 = vld [vmem:[%s1484 + $0x4c] sm:$0xf]
      %v1505 = vld [vmem:[%s2] sm:$0xf]
      %v1506 = vld [vmem:[%s2 + $0x4] sm:$0xf]
      %v1507 = vld [vmem:[%s3] sm:$0x1]
      %v1509 = vlaneseq
      %v1510 = vshrl.u32 %v1509, 7
      %v1511 = vsub.s32 0, %v1510
      %v1512 = vrot.slane %v1507, %v1511
      %v1534 = vunpack.c.l.b16 %v1485
      %v1535 = vunpack.c.l.b16 %v1486
      %v1536 = vunpack.c.l.b16 %v1487
      %v1537 = vunpack.c.l.b16 %v1488
      %v1538 = vunpack.c.l.b16 %v1489
      %v1539 = vunpack.c.l.b16 %v1490
      %v1540 = vunpack.c.l.b16 %v1491
      %v1541 = vunpack.c.l.b16 %v1492
      %v1542 = vunpack.c.l.b16 %v1493
      %v1543 = vunpack.c.l.b16 %v1494
      %v1544 = vunpack.c.l.b16 %v1495
      %v1545 = vunpack.c.l.b16 %v1496
      %v1546 = vunpack.c.l.b16 %v1497
      %v1547 = vunpack.c.l.b16 %v1498
      %v1548 = vunpack.c.l.b16 %v1499
      %v1549 = vunpack.c.l.b16 %v1500
      %v1550 = vunpack.c.l.b16 %v1501
      %v1551 = vunpack.c.l.b16 %v1502
      %v1552 = vunpack.c.l.b16 %v1503
      %v1553 = vunpack.c.l.b16 %v1504
      %v1554 = vpack.c.b16 %v1535, %v1534
      %v1555 = vpack.c.b16 %v1537, %v1536
      %v1556 = vpack.c.b16 %v1539, %v1538
      %v1557 = vpack.c.b16 %v1541, %v1540
      %v1558 = vpack.c.b16 %v1543, %v1542
      %v1559 = vpack.c.b16 %v1545, %v1544
      %v1560 = vpack.c.b16 %v1547, %v1546
      %v1561 = vpack.c.b16 %v1549, %v1548
      %v1562 = vpack.c.b16 %v1551, %v1550
      %v1563 = vpack.c.b16 %v1553, %v1552
      %v1566 = vunpack.c.l.b16 %v1505
      %v1567 = vunpack.c.l.b16 %v1506
      %v1568 = vpack.c.b16 %v1567, %v1566
      %v1571 = vsel %vm338, %v1554, 0
      %v1574 = vsel %vm338, %v1555, 0
      %v1577 = vsel %vm338, %v1556, 0
      %v1580 = vsel %vm338, %v1557, 0
      %v1583 = vsel %vm338, %v1558, 0
      %v1586 = vsel %vm338, %v1559, 0
      %v1589 = vsel %vm338, %v1560, 0
      %v1592 = vsel %vm338, %v1561, 0
      %v1595 = vsel %vm338, %v1562, 0
      %v1598 = vsel %vm338, %v1563, 0
      %1600 = vmatprep.subr.bf16.mxu0 0
      %1601 = vmatpush1.bf16.msra.mxu0 %v1568
      %1602 = vmatprep.subr.bf16.mxu0 0
      %1603 = vmatpush1.bf16.msra.mxu0 0
      %1604 = vmatprep.subr.bf16.mxu0 0
      %1605 = vmatpush1.bf16.msra.mxu0 0
      %1606 = vmatprep.subr.bf16.mxu0 0
      %1607 = vmatpush1.bf16.msra.mxu0 0
      %1608 = vmatprep.subr.bf16.mxu0 0
      %1609 = vmatpush1.bf16.msra.mxu0 0
      %1610 = vmatprep.subr.bf16.mxu0 0
      %1611 = vmatpush1.bf16.msra.mxu0 0
      %1612 = vmatprep.subr.bf16.mxu0 0
      %1613 = vmatpush1.bf16.msra.mxu0 0
      %1614 = vmatprep.subr.bf16.mxu0 0
      %1615 = vmatpush1.bf16.msra.mxu0 0
      %1616 = vmatprep.subr.bf16.mxu0 0
      %1617 = vmatpush1.bf16.msra.mxu0 0
      %1618 = vmatprep.subr.bf16.mxu0 0
      %1619 = vmatpush1.bf16.msra.mxu0 0
      %1620 = vmatprep.subr.bf16.mxu0 0
      %1621 = vmatpush1.bf16.msra.mxu0 0
      %1622 = vmatprep.subr.bf16.mxu0 0
      %1623 = vmatpush1.bf16.msra.mxu0 0
      %1624 = vmatprep.subr.bf16.mxu0 0
      %1625 = vmatpush1.bf16.msra.mxu0 0
      %1626 = vmatprep.subr.bf16.mxu0 0
      %1627 = vmatpush1.bf16.msra.mxu0 0
      %1628 = vmatprep.subr.bf16.mxu0 0
      %1629 = vmatpush1.bf16.msra.mxu0 0
      %1630 = vmatprep.subr.bf16.mxu0 0
      %1631 = vmatpush1.bf16.msra.mxu0 0
      %1632 = vmatprep.mubr.bf16.mxu0 0
      %1633 = vmatmul.mubr.bf16.gmra.mrb[0].mxu0 %v1571
      %v1634 = vpop.f32.mrb[0].mxu0
      %v1635 = vadd.f32 %v1512, %v1634
      %v1636 = vpop.f32.mrb[0].mxu0
      %v1637 = vpop.f32.mrb[0].mxu0
      %v1638 = vadd.f32 %v1512, %v1637
      %v1639 = vpop.f32.mrb[0].mxu0
      %1640 = vmatprep.mubr.bf16.mxu0 0
      %1641 = vmatmul.mubr.bf16.gmra.mrb[0].mxu0 %v1574
      %v1642 = vpop.f32.mrb[0].mxu0
      %v1643 = vadd.f32 %v1512, %v1642
      %v1644 = vpop.f32.mrb[0].mxu0
      %v1645 = vpop.f32.mrb[0].mxu0
      %v1646 = vadd.f32 %v1512, %v1645
      %v1647 = vpop.f32.mrb[0].mxu0
      %1648 = vmatprep.mubr.bf16.mxu0 0
      %1649 = vmatmul.mubr.bf16.gmra.mrb[0].mxu0 %v1577
      %v1650 = vpop.f32.mrb[0].mxu0
      %v1651 = vadd.f32 %v1512, %v1650
      %v1652 = vpop.f32.mrb[0].mxu0
      %v1653 = vpop.f32.mrb[0].mxu0
      %v1654 = vadd.f32 %v1512, %v1653
      %v1655 = vpop.f32.mrb[0].mxu0
      %1656 = vmatprep.mubr.bf16.mxu0 0
      %1657 = vmatmul.mubr.bf16.gmra.mrb[0].mxu0 %v1580
      %v1658 = vpop.f32.mrb[0].mxu0
      %v1659 = vadd.f32 %v1512, %v1658
      %v1660 = vpop.f32.mrb[0].mxu0
      %v1661 = vpop.f32.mrb[0].mxu0
      %v1662 = vadd.f32 %v1512, %v1661
      %v1663 = vpop.f32.mrb[0].mxu0
      %1664 = vmatprep.mubr.bf16.mxu0 0
      %1665 = vmatmul.mubr.bf16.gmra.mrb[0].mxu0 %v1583
      %v1666 = vpop.f32.mrb[0].mxu0
      %v1667 = vadd.f32 %v1512, %v1666
      %v1668 = vpop.f32.mrb[0].mxu0
      %v1669 = vpop.f32.mrb[0].mxu0
      %v1670 = vadd.f32 %v1512, %v1669
      %v1671 = vpop.f32.mrb[0].mxu0
      %1672 = vmatprep.mubr.bf16.mxu0 0
      %1673 = vmatmul.mubr.bf16.gmra.mrb[0].mxu0 %v1586
      %v1674 = vpop.f32.mrb[0].mxu0
      %v1675 = vadd.f32 %v1512, %v1674
      %v1676 = vpop.f32.mrb[0].mxu0
      %v1677 = vpop.f32.mrb[0].mxu0
      %v1678 = vadd.f32 %v1512, %v1677
      %v1679 = vpop.f32.mrb[0].mxu0
      %1680 = vmatprep.mubr.bf16.mxu0 0
      %1681 = vmatmul.mubr.bf16.gmra.mrb[0].mxu0 %v1589
      %v1682 = vpop.f32.mrb[0].mxu0
      %v1683 = vadd.f32 %v1512, %v1682
      %v1684 = vpop.f32.mrb[0].mxu0
      %v1685 = vpop.f32.mrb[0].mxu0
      %v1686 = vadd.f32 %v1512, %v1685
      %v1687 = vpop.f32.mrb[0].mxu0
      %1688 = vmatprep.mubr.bf16.mxu0 0
      %1689 = vmatmul.mubr.bf16.gmra.mrb[0].mxu0 %v1592
      %v1690 = vpop.f32.mrb[0].mxu0
      %v1691 = vadd.f32 %v1512, %v1690
      %v1692 = vpop.f32.mrb[0].mxu0
      %v1693 = vpop.f32.mrb[0].mxu0
      %v1694 = vadd.f32 %v1512, %v1693
      %v1695 = vpop.f32.mrb[0].mxu0
      %1696 = vmatprep.mubr.bf16.mxu0 0
      %1697 = vmatmul.mubr.bf16.gmra.mrb[0].mxu0 %v1595
      %v1698 = vpop.f32.mrb[0].mxu0
      %v1699 = vadd.f32 %v1512, %v1698
      %v1700 = vpop.f32.mrb[0].mxu0
      %v1701 = vpop.f32.mrb[0].mxu0
      %v1702 = vadd.f32 %v1512, %v1701
      %v1703 = vpop.f32.mrb[0].mxu0
      %1704 = vmatprep.mubr.bf16.mxu0 0
      %1705 = vmatmul.mubr.bf16.gmra.mrb[0].mxu0 %v1598
      %v1706 = vpop.f32.mrb[0].mxu0
      %v1707 = vadd.f32 %v1512, %v1706
      %v1708 = vpop.f32.mrb[0].mxu0
      %v1709 = vpop.f32.mrb[0].mxu0
      %v1710 = vadd.f32 %v1512, %v1709
      %v1711 = vpop.f32.mrb[0].mxu0
      %1712 = vdwg.mxu0
      %v1713 = vmax.f32 %v1635, 0.0
      %v1714 = vmax.f32 %v1638, 0.0
      %v1715 = vmax.f32 %v1643, 0.0
      %v1716 = vmax.f32 %v1646, 0.0
      %v1717 = vmax.f32 %v1651, 0.0
      %v1718 = vmax.f32 %v1654, 0.0
      %v1719 = vmax.f32 %v1659, 0.0
      %v1720 = vmax.f32 %v1662, 0.0
      %v1721 = vmax.f32 %v1667, 0.0
      %v1722 = vmax.f32 %v1670, 0.0
      %v1723 = vmax.f32 %v1675, 0.0
      %v1724 = vmax.f32 %v1678, 0.0
      %v1725 = vmax.f32 %v1683, 0.0
      %v1726 = vmax.f32 %v1686, 0.0
      %v1727 = vmax.f32 %v1691, 0.0
      %v1728 = vmax.f32 %v1694, 0.0
      %v1729 = vmax.f32 %v1699, 0.0
      %v1730 = vmax.f32 %v1702, 0.0
      %v1731 = vmax.f32 %v1707, 0.0
      %v1732 = vmax.f32 %v1710, 0.0
      %s1733 = scalar_lea.vmem %s1, 480
      %v1734 = vld [vmem:[%s1733] sm:$0xff]
      %v1735 = vld [vmem:[%s1733 + $0x8] sm:$0xff]
      %v1736 = vld [vmem:[%s1733 + $0x10] sm:$0xff]
      %v1737 = vld [vmem:[%s1733 + $0x18] sm:$0xff]
      %v1738 = vld [vmem:[%s1733 + $0x20] sm:$0xff]
      %v1739 = vld [vmem:[%s1733 + $0x28] sm:$0xff]
      %v1740 = vld [vmem:[%s1733 + $0x30] sm:$0xff]
      %v1741 = vld [vmem:[%s1733 + $0x38] sm:$0xff]
      %v1742 = vld [vmem:[%s1733 + $0x40] sm:$0xff]
      %v1743 = vld [vmem:[%s1733 + $0x48] sm:$0xff]
      %v1744 = vld [vmem:[%s1733 + $0x50] sm:$0xff]
      %v1745 = vld [vmem:[%s1733 + $0x58] sm:$0xff]
      %v1746 = vld [vmem:[%s1733 + $0x60] sm:$0xff]
      %v1747 = vld [vmem:[%s1733 + $0x68] sm:$0xff]
      %v1748 = vld [vmem:[%s1733 + $0x70] sm:$0xff]
      %v1749 = vld [vmem:[%s1733 + $0x78] sm:$0xff]
      %v1750 = vld [vmem:[%s1733 + $0x80] sm:$0xff]
      %v1751 = vld [vmem:[%s1733 + $0x88] sm:$0xff]
      %v1752 = vld [vmem:[%s1733 + $0x90] sm:$0xff]
      %v1753 = vld [vmem:[%s1733 + $0x98] sm:$0xff]
      %1755 = vset.pattern.permute.xlu0 0
      %1756 = vperm.xlu0 %1755, %v1734
      %v1757 = vpop.permute.xlu0 %1756
      %1760 = vset.pattern.permute.xlu0 0
      %1761 = vperm.xlu0 %1760, %v1735
      %v1762 = vpop.permute.xlu0 %1761
      %1765 = vset.pattern.permute.xlu0 0
      %1766 = vperm.xlu0 %1765, %v1736
      %v1767 = vpop.permute.xlu0 %1766
      %1770 = vset.pattern.permute.xlu0 0
      %1771 = vperm.xlu0 %1770, %v1737
      %v1772 = vpop.permute.xlu0 %1771
      %1775 = vset.pattern.permute.xlu0 0
      %1776 = vperm.xlu0 %1775, %v1738
      %v1777 = vpop.permute.xlu0 %1776
      %1780 = vset.pattern.permute.xlu0 0
      %1781 = vperm.xlu0 %1780, %v1739
      %v1782 = vpop.permute.xlu0 %1781
      %1785 = vset.pattern.permute.xlu0 0
      %1786 = vperm.xlu0 %1785, %v1740
      %v1787 = vpop.permute.xlu0 %1786
      %1790 = vset.pattern.permute.xlu0 0
      %1791 = vperm.xlu0 %1790, %v1741
      %v1792 = vpop.permute.xlu0 %1791
      %1795 = vset.pattern.permute.xlu0 0
      %1796 = vperm.xlu0 %1795, %v1742
      %v1797 = vpop.permute.xlu0 %1796
      %1800 = vset.pattern.permute.xlu0 0
      %1801 = vperm.xlu0 %1800, %v1743
      %v1802 = vpop.permute.xlu0 %1801
      %1805 = vset.pattern.permute.xlu0 0
      %1806 = vperm.xlu0 %1805, %v1744
      %v1807 = vpop.permute.xlu0 %1806
      %1810 = vset.pattern.permute.xlu0 0
      %1811 = vperm.xlu0 %1810, %v1745
      %v1812 = vpop.permute.xlu0 %1811
      %1815 = vset.pattern.permute.xlu0 0
      %1816 = vperm.xlu0 %1815, %v1746
      %v1817 = vpop.permute.xlu0 %1816
      %1820 = vset.pattern.permute.xlu0 0
      %1821 = vperm.xlu0 %1820, %v1747
      %v1822 = vpop.permute.xlu0 %1821
      %1825 = vset.pattern.permute.xlu0 0
      %1826 = vperm.xlu0 %1825, %v1748
      %v1827 = vpop.permute.xlu0 %1826
      %1830 = vset.pattern.permute.xlu0 0
      %1831 = vperm.xlu0 %1830, %v1749
      %v1832 = vpop.permute.xlu0 %1831
      %1835 = vset.pattern.permute.xlu0 0
      %1836 = vperm.xlu0 %1835, %v1750
      %v1837 = vpop.permute.xlu0 %1836
      %1840 = vset.pattern.permute.xlu0 0
      %1841 = vperm.xlu0 %1840, %v1751
      %v1842 = vpop.permute.xlu0 %1841
      %1845 = vset.pattern.permute.xlu0 0
      %1846 = vperm.xlu0 %1845, %v1752
      %v1847 = vpop.permute.xlu0 %1846
      %1850 = vset.pattern.permute.xlu0 0
      %1851 = vperm.xlu0 %1850, %v1753
      %v1852 = vpop.permute.xlu0 %1851
      %v1854 = vmul.f32 %v1713, %v1757
      %v1855 = vmul.f32 %v1714, %v1762
      %v1856 = vmul.f32 %v1715, %v1767
      %v1857 = vmul.f32 %v1716, %v1772
      %v1858 = vmul.f32 %v1717, %v1777
      %v1859 = vmul.f32 %v1718, %v1782
      %v1860 = vmul.f32 %v1719, %v1787
      %v1861 = vmul.f32 %v1720, %v1792
      %v1862 = vmul.f32 %v1721, %v1797
      %v1863 = vmul.f32 %v1722, %v1802
      %v1864 = vmul.f32 %v1723, %v1807
      %v1865 = vmul.f32 %v1724, %v1812
      %v1866 = vmul.f32 %v1725, %v1817
      %v1867 = vmul.f32 %v1726, %v1822
      %v1868 = vmul.f32 %v1727, %v1827
      %v1869 = vmul.f32 %v1728, %v1832
      %v1870 = vmul.f32 %v1729, %v1837
      %v1871 = vmul.f32 %v1730, %v1842
      %v1872 = vmul.f32 %v1731, %v1847
      %v1873 = vmul.f32 %v1732, %v1852
      %s1874 = scalar_lea.vmem [#allocation2], 480
      %1875 = vst [vmem:[%s1874] sm:$0xff] %v1854
      %1876 = vst [vmem:[%s1874 + $0x8] sm:$0xff] %v1855
      %1877 = vst [vmem:[%s1874 + $0x10] sm:$0xff] %v1856
      %1878 = vst [vmem:[%s1874 + $0x18] sm:$0xff] %v1857
      %1879 = vst [vmem:[%s1874 + $0x20] sm:$0xff] %v1858
      %1880 = vst [vmem:[%s1874 + $0x28] sm:$0xff] %v1859
      %1881 = vst [vmem:[%s1874 + $0x30] sm:$0xff] %v1860
      %1882 = vst [vmem:[%s1874 + $0x38] sm:$0xff] %v1861
      %1883 = vst [vmem:[%s1874 + $0x40] sm:$0xff] %v1862
      %1884 = vst [vmem:[%s1874 + $0x48] sm:$0xff] %v1863
      %1885 = vst [vmem:[%s1874 + $0x50] sm:$0xff] %v1864
      %1886 = vst [vmem:[%s1874 + $0x58] sm:$0xff] %v1865
      %1887 = vst [vmem:[%s1874 + $0x60] sm:$0xff] %v1866
      %1888 = vst [vmem:[%s1874 + $0x68] sm:$0xff] %v1867
      %1889 = vst [vmem:[%s1874 + $0x70] sm:$0xff] %v1868
      %1890 = vst [vmem:[%s1874 + $0x78] sm:$0xff] %v1869
      %1891 = vst [vmem:[%s1874 + $0x80] sm:$0xff] %v1870
      %1892 = vst [vmem:[%s1874 + $0x88] sm:$0xff] %v1871
      %1893 = vst [vmem:[%s1874 + $0x90] sm:$0xff] %v1872
      %1894 = vst [vmem:[%s1874 + $0x98] sm:$0xff] %v1873
      %v1895 = vld [vmem:[#allocation2] sm:$0xff]
      %v1896 = vld [vmem:[#allocation2 + $0x8] sm:$0xff]
      %v1897 = vld [vmem:[#allocation2 + $0x10] sm:$0xff]
      %v1898 = vld [vmem:[#allocation2 + $0x18] sm:$0xff]
      %v1899 = vld [vmem:[#allocation2 + $0x20] sm:$0xff]
      %v1900 = vld [vmem:[#allocation2 + $0x28] sm:$0xff]
      %v1901 = vld [vmem:[#allocation2 + $0x30] sm:$0xff]
      %v1902 = vld [vmem:[#allocation2 + $0x38] sm:$0xff]
      %v1903 = vld [vmem:[#allocation2 + $0x40] sm:$0xff]
      %v1904 = vld [vmem:[#allocation2 + $0x48] sm:$0xff]
      %v1905 = vld [vmem:[#allocation2 + $0x50] sm:$0xff]
      %v1906 = vld [vmem:[#allocation2 + $0x58] sm:$0xff]
      %v1907 = vld [vmem:[#allocation2 + $0x60] sm:$0xff]
      %v1908 = vld [vmem:[#allocation2 + $0x68] sm:$0xff]
      %v1909 = vld [vmem:[#allocation2 + $0x70] sm:$0xff]
      %v1910 = vld [vmem:[#allocation2 + $0x78] sm:$0xff]
      %v1911 = vpack.c.bf16 %v1896, %v1895
      %v1912 = vpack.c.bf16 %v1898, %v1897
      %v1913 = vpack.c.bf16 %v1900, %v1899
      %v1914 = vpack.c.bf16 %v1902, %v1901
      %v1915 = vpack.c.bf16 %v1904, %v1903
      %v1916 = vpack.c.bf16 %v1906, %v1905
      %v1917 = vpack.c.bf16 %v1908, %v1907
      %v1918 = vpack.c.bf16 %v1910, %v1909
      %v1919 = vld [vmem:[%s4] sm:$0xf]
      %v1920 = vld [vmem:[%s4 + $0x4] sm:$0xf]
      %v1921 = vld [vmem:[%s4 + $0x8] sm:$0xf]
      %v1922 = vld [vmem:[%s4 + $0xc] sm:$0xf]
      %v1923 = vld [vmem:[%s4 + $0x10] sm:$0xf]
      %v1924 = vld [vmem:[%s4 + $0x14] sm:$0xf]
      %v1925 = vld [vmem:[%s4 + $0x18] sm:$0xf]
      %v1926 = vld [vmem:[%s4 + $0x1c] sm:$0xf]
      %v1927 = vld [vmem:[%s4 + $0x20] sm:$0xf]
      %v1928 = vld [vmem:[%s4 + $0x24] sm:$0xf]
      %v1929 = vld [vmem:[%s4 + $0x28] sm:$0xf]
      %v1930 = vld [vmem:[%s4 + $0x2c] sm:$0xf]
      %v1931 = vld [vmem:[%s4 + $0x30] sm:$0xf]
      %v1932 = vld [vmem:[%s4 + $0x34] sm:$0xf]
      %v1933 = vld [vmem:[%s4 + $0x38] sm:$0xf]
      %v1934 = vld [vmem:[%s4 + $0x3c] sm:$0xf]
      %v1935 = vld [vmem:[%s1052] sm:$0xff]
      %v1936 = vld [vmem:[%s1052 + $0x8] sm:$0xff]
      %v1937 = vld [vmem:[%s1052 + $0x10] sm:$0xff]
      %v1938 = vld [vmem:[%s1052 + $0x18] sm:$0xff]
      %v1939 = vld [vmem:[%s1052 + $0x20] sm:$0xff]
      %v1940 = vld [vmem:[%s1052 + $0x28] sm:$0xff]
      %v1941 = vld [vmem:[%s1052 + $0x30] sm:$0xff]
      %v1942 = vld [vmem:[%s1052 + $0x38] sm:$0xff]
      %v1943 = vld [vmem:[%s1052 + $0x40] sm:$0xff]
      %v1944 = vld [vmem:[%s1052 + $0x48] sm:$0xff]
      %v1945 = vld [vmem:[%s1052 + $0x50] sm:$0xff]
      %v1946 = vld [vmem:[%s1052 + $0x58] sm:$0xff]
      %v1947 = vld [vmem:[%s1052 + $0x60] sm:$0xff]
      %v1948 = vld [vmem:[%s1052 + $0x68] sm:$0xff]
      %v1949 = vld [vmem:[%s1052 + $0x70] sm:$0xff]
      %v1950 = vld [vmem:[%s1052 + $0x78] sm:$0xff]
      %v1951 = vpack.c.bf16 %v1936, %v1935
      %v1952 = vpack.c.bf16 %v1938, %v1937
      %v1953 = vpack.c.bf16 %v1940, %v1939
      %v1954 = vpack.c.bf16 %v1942, %v1941
      %v1955 = vpack.c.bf16 %v1944, %v1943
      %v1956 = vpack.c.bf16 %v1946, %v1945
      %v1957 = vpack.c.bf16 %v1948, %v1947
      %v1958 = vpack.c.bf16 %v1950, %v1949
      %v1959 = vld [vmem:[%s4 + $0x40] sm:$0xf]
      %v1960 = vld [vmem:[%s4 + $0x44] sm:$0xf]
      %v1961 = vld [vmem:[%s4 + $0x48] sm:$0xf]
      %v1962 = vld [vmem:[%s4 + $0x4c] sm:$0xf]
      %v1963 = vld [vmem:[%s4 + $0x50] sm:$0xf]
      %v1964 = vld [vmem:[%s4 + $0x54] sm:$0xf]
      %v1965 = vld [vmem:[%s4 + $0x58] sm:$0xf]
      %v1966 = vld [vmem:[%s4 + $0x5c] sm:$0xf]
      %v1967 = vld [vmem:[%s4 + $0x60] sm:$0xf]
      %v1968 = vld [vmem:[%s4 + $0x64] sm:$0xf]
      %v1969 = vld [vmem:[%s4 + $0x68] sm:$0xf]
      %v1970 = vld [vmem:[%s4 + $0x6c] sm:$0xf]
      %v1971 = vld [vmem:[%s4 + $0x70] sm:$0xf]
      %v1972 = vld [vmem:[%s4 + $0x74] sm:$0xf]
      %v1973 = vld [vmem:[%s4 + $0x78] sm:$0xf]
      %v1974 = vld [vmem:[%s4 + $0x7c] sm:$0xf]
      %v1991 = vunpack.c.l.b16 %v1959
      %v1992 = vunpack.c.l.b16 %v1960
      %v1993 = vunpack.c.l.b16 %v1961
      %v1994 = vunpack.c.l.b16 %v1962
      %v1995 = vunpack.c.l.b16 %v1963
      %v1996 = vunpack.c.l.b16 %v1964
      %v1997 = vunpack.c.l.b16 %v1965
      %v1998 = vunpack.c.l.b16 %v1966
      %v1999 = vunpack.c.l.b16 %v1967
      %v2000 = vunpack.c.l.b16 %v1968
      %v2001 = vunpack.c.l.b16 %v1969
      %v2002 = vunpack.c.l.b16 %v1970
      %v2003 = vunpack.c.l.b16 %v1971
      %v2004 = vunpack.c.l.b16 %v1972
      %v2005 = vunpack.c.l.b16 %v1973
      %v2006 = vunpack.c.l.b16 %v1974
      %v2007 = vpack.c.b16 %v1992, %v1991
      %v2008 = vpack.c.b16 %v1994, %v1993
      %v2009 = vpack.c.b16 %v1996, %v1995
      %v2010 = vpack.c.b16 %v1998, %v1997
      %v2011 = vpack.c.b16 %v2000, %v1999
      %v2012 = vpack.c.b16 %v2002, %v2001
      %v2013 = vpack.c.b16 %v2004, %v2003
      %v2014 = vpack.c.b16 %v2006, %v2005
      %2023 = vmatprep.subr.bf16.mxu0 0
      %2024 = vmatpush1.bf16.msra.mxu0 %v2007
      %2025 = vmatprep.subr.bf16.mxu0 0
      %2026 = vmatpush1.bf16.msra.mxu0 %v2008
      %2027 = vmatprep.subr.bf16.mxu0 0
      %2028 = vmatpush1.bf16.msra.mxu0 %v2009
      %2029 = vmatprep.subr.bf16.mxu0 0
      %2030 = vmatpush1.bf16.msra.mxu0 %v2010
      %2031 = vmatprep.subr.bf16.mxu0 0
      %2032 = vmatpush1.bf16.msra.mxu0 %v2011
      %2033 = vmatprep.subr.bf16.mxu0 0
      %2034 = vmatpush1.bf16.msra.mxu0 %v2012
      %2035 = vmatprep.subr.bf16.mxu0 0
      %2036 = vmatpush1.bf16.msra.mxu0 %v2013
      %2037 = vmatprep.subr.bf16.mxu0 0
      %2038 = vmatpush1.bf16.msra.mxu0 %v2014
      %2039 = vmatprep.subr.bf16.mxu0 0
      %2040 = vmatpush1.bf16.msra.mxu0 0
      %2041 = vmatprep.subr.bf16.mxu0 0
      %2042 = vmatpush1.bf16.msra.mxu0 0
      %2043 = vmatprep.subr.bf16.mxu0 0
      %2044 = vmatpush1.bf16.msra.mxu0 0
      %2045 = vmatprep.subr.bf16.mxu0 0
      %2046 = vmatpush1.bf16.msra.mxu0 0
      %2047 = vmatprep.subr.bf16.mxu0 0
      %2048 = vmatpush1.bf16.msra.mxu0 0
      %2049 = vmatprep.subr.bf16.mxu0 0
      %2050 = vmatpush1.bf16.msra.mxu0 0
      %2051 = vmatprep.subr.bf16.mxu0 0
      %2052 = vmatpush1.bf16.msra.mxu0 0
      %2053 = vmatprep.subr.bf16.mxu0 0
      %2054 = vmatpush1.bf16.msra.mxu0 0
      %2055 = vmatprep.mubr.bf16.mxu0 0
      %2056 = vmatmul.mubr.bf16.gmra.mrb[0].mxu0 %v1951
      %v2057 = vpop.f32.mrb[0].mxu0
      %v2058 = vadd.f32 0.0, %v2057
      %v2059 = vpop.f32.mrb[0].mxu0
      %v2060 = vpop.f32.mrb[0].mxu0
      %v2061 = vpop.f32.mrb[0].mxu0
      %2062 = vmatprep.mubr.bf16.mxu0 0
      %2063 = vmatmul.mubr.bf16.gmra.mrb[0].mxu0 %v1952
      %v2064 = vpop.f32.mrb[0].mxu0
      %v2065 = vadd.f32 0.0, %v2064
      %v2066 = vpop.f32.mrb[0].mxu0
      %v2067 = vpop.f32.mrb[0].mxu0
      %v2068 = vpop.f32.mrb[0].mxu0
      %2069 = vmatprep.mubr.bf16.mxu0 0
      %2070 = vmatmul.mubr.bf16.gmra.mrb[0].mxu0 %v1953
      %v2071 = vpop.f32.mrb[0].mxu0
      %v2072 = vadd.f32 0.0, %v2071
      %v2073 = vpop.f32.mrb[0].mxu0
      %v2074 = vpop.f32.mrb[0].mxu0
      %v2075 = vpop.f32.mrb[0].mxu0
      %2076 = vmatprep.mubr.bf16.mxu0 0
      %2077 = vmatmul.mubr.bf16.gmra.mrb[0].mxu0 %v1954
      %v2078 = vpop.f32.mrb[0].mxu0
      %v2079 = vadd.f32 0.0, %v2078
      %v2080 = vpop.f32.mrb[0].mxu0
      %v2081 = vpop.f32.mrb[0].mxu0
      %v2082 = vpop.f32.mrb[0].mxu0
      %2083 = vmatprep.mubr.bf16.mxu0 0
      %2084 = vmatmul.mubr.bf16.gmra.mrb[0].mxu0 %v1955
      %v2085 = vpop.f32.mrb[0].mxu0
      %v2086 = vadd.f32 0.0, %v2085
      %v2087 = vpop.f32.mrb[0].mxu0
      %v2088 = vpop.f32.mrb[0].mxu0
      %v2089 = vpop.f32.mrb[0].mxu0
      %2090 = vmatprep.mubr.bf16.mxu0 0
      %2091 = vmatmul.mubr.bf16.gmra.mrb[0].mxu0 %v1956
      %v2092 = vpop.f32.mrb[0].mxu0
      %v2093 = vadd.f32 0.0, %v2092
      %v2094 = vpop.f32.mrb[0].mxu0
      %v2095 = vpop.f32.mrb[0].mxu0
      %v2096 = vpop.f32.mrb[0].mxu0
      %2097 = vmatprep.mubr.bf16.mxu0 0
      %2098 = vmatmul.mubr.bf16.gmra.mrb[0].mxu0 %v1957
      %v2099 = vpop.f32.mrb[0].mxu0
      %v2100 = vadd.f32 0.0, %v2099
      %v2101 = vpop.f32.mrb[0].mxu0
      %v2102 = vpop.f32.mrb[0].mxu0
      %v2103 = vpop.f32.mrb[0].mxu0
      %2104 = vmatprep.mubr.bf16.mxu0 0
      %2105 = vmatmul.mubr.bf16.gmra.mrb[0].mxu0 %v1958
      %v2106 = vpop.f32.mrb[0].mxu0
      %v2107 = vadd.f32 0.0, %v2106
      %v2108 = vpop.f32.mrb[0].mxu0
      %v2109 = vpop.f32.mrb[0].mxu0
      %v2110 = vpop.f32.mrb[0].mxu0
      %2111 = vdwg.mxu0
      %v2128 = vunpack.c.l.b16 %v1919
      %v2129 = vunpack.c.l.b16 %v1920
      %v2130 = vunpack.c.l.b16 %v1921
      %v2131 = vunpack.c.l.b16 %v1922
      %v2132 = vunpack.c.l.b16 %v1923
      %v2133 = vunpack.c.l.b16 %v1924
      %v2134 = vunpack.c.l.b16 %v1925
      %v2135 = vunpack.c.l.b16 %v1926
      %v2136 = vunpack.c.l.b16 %v1927
      %v2137 = vunpack.c.l.b16 %v1928
      %v2138 = vunpack.c.l.b16 %v1929
      %v2139 = vunpack.c.l.b16 %v1930
      %v2140 = vunpack.c.l.b16 %v1931
      %v2141 = vunpack.c.l.b16 %v1932
      %v2142 = vunpack.c.l.b16 %v1933
      %v2143 = vunpack.c.l.b16 %v1934
      %v2144 = vpack.c.b16 %v2129, %v2128
      %v2145 = vpack.c.b16 %v2131, %v2130
      %v2146 = vpack.c.b16 %v2133, %v2132
      %v2147 = vpack.c.b16 %v2135, %v2134
      %v2148 = vpack.c.b16 %v2137, %v2136
      %v2149 = vpack.c.b16 %v2139, %v2138
      %v2150 = vpack.c.b16 %v2141, %v2140
      %v2151 = vpack.c.b16 %v2143, %v2142
      %2160 = vmatprep.subr.bf16.mxu0 0
      %2161 = vmatpush1.bf16.msra.mxu0 %v2144
      %2162 = vmatprep.subr.bf16.mxu0 0
      %2163 = vmatpush1.bf16.msra.mxu0 %v2145
      %2164 = vmatprep.subr.bf16.mxu0 0
      %2165 = vmatpush1.bf16.msra.mxu0 %v2146
      %2166 = vmatprep.subr.bf16.mxu0 0
      %2167 = vmatpush1.bf16.msra.mxu0 %v2147
      %2168 = vmatprep.subr.bf16.mxu0 0
      %2169 = vmatpush1.bf16.msra.mxu0 %v2148
      %2170 = vmatprep.subr.bf16.mxu0 0
      %2171 = vmatpush1.bf16.msra.mxu0 %v2149
      %2172 = vmatprep.subr.bf16.mxu0 0
      %2173 = vmatpush1.bf16.msra.mxu0 %v2150
      %2174 = vmatprep.subr.bf16.mxu0 0
      %2175 = vmatpush1.bf16.msra.mxu0 %v2151
      %2176 = vmatprep.subr.bf16.mxu0 0
      %2177 = vmatpush1.bf16.msra.mxu0 0
      %2178 = vmatprep.subr.bf16.mxu0 0
      %2179 = vmatpush1.bf16.msra.mxu0 0
      %2180 = vmatprep.subr.bf16.mxu0 0
      %2181 = vmatpush1.bf16.msra.mxu0 0
      %2182 = vmatprep.subr.bf16.mxu0 0
      %2183 = vmatpush1.bf16.msra.mxu0 0
      %2184 = vmatprep.subr.bf16.mxu0 0
      %2185 = vmatpush1.bf16.msra.mxu0 0
      %2186 = vmatprep.subr.bf16.mxu0 0
      %2187 = vmatpush1.bf16.msra.mxu0 0
      %2188 = vmatprep.subr.bf16.mxu0 0
      %2189 = vmatpush1.bf16.msra.mxu0 0
      %2190 = vmatprep.subr.bf16.mxu0 0
      %2191 = vmatpush1.bf16.msra.mxu0 0
      %2192 = vmatprep.mubr.bf16.mxu0 0
      %2193 = vmatmul.mubr.bf16.gmra.mrb[0].mxu0 %v1911
      %v2194 = vpop.f32.mrb[0].mxu0
      %v2195 = vadd.f32 %v2058, %v2194
      %v2196 = vpop.f32.mrb[0].mxu0
      %v2197 = vpop.f32.mrb[0].mxu0
      %v2198 = vpop.f32.mrb[0].mxu0
      %2199 = vmatprep.mubr.bf16.mxu0 0
      %2200 = vmatmul.mubr.bf16.gmra.mrb[0].mxu0 %v1912
      %v2201 = vpop.f32.mrb[0].mxu0
      %v2202 = vadd.f32 %v2065, %v2201
      %v2203 = vpop.f32.mrb[0].mxu0
      %v2204 = vpop.f32.mrb[0].mxu0
      %v2205 = vpop.f32.mrb[0].mxu0
      %2206 = vmatprep.mubr.bf16.mxu0 0
      %2207 = vmatmul.mubr.bf16.gmra.mrb[0].mxu0 %v1913
      %v2208 = vpop.f32.mrb[0].mxu0
      %v2209 = vadd.f32 %v2072, %v2208
      %v2210 = vpop.f32.mrb[0].mxu0
      %v2211 = vpop.f32.mrb[0].mxu0
      %v2212 = vpop.f32.mrb[0].mxu0
      %2213 = vmatprep.mubr.bf16.mxu0 0
      %2214 = vmatmul.mubr.bf16.gmra.mrb[0].mxu0 %v1914
      %v2215 = vpop.f32.mrb[0].mxu0
      %v2216 = vadd.f32 %v2079, %v2215
      %v2217 = vpop.f32.mrb[0].mxu0
      %v2218 = vpop.f32.mrb[0].mxu0
      %v2219 = vpop.f32.mrb[0].mxu0
      %2220 = vmatprep.mubr.bf16.mxu0 0
      %2221 = vmatmul.mubr.bf16.gmra.mrb[0].mxu0 %v1915
      %v2222 = vpop.f32.mrb[0].mxu0
      %v2223 = vadd.f32 %v2086, %v2222
      %v2224 = vpop.f32.mrb[0].mxu0
      %v2225 = vpop.f32.mrb[0].mxu0
      %v2226 = vpop.f32.mrb[0].mxu0
      %2227 = vmatprep.mubr.bf16.mxu0 0
      %2228 = vmatmul.mubr.bf16.gmra.mrb[0].mxu0 %v1916
      %v2229 = vpop.f32.mrb[0].mxu0
      %v2230 = vadd.f32 %v2093, %v2229
      %v2231 = vpop.f32.mrb[0].mxu0
      %v2232 = vpop.f32.mrb[0].mxu0
      %v2233 = vpop.f32.mrb[0].mxu0
      %2234 = vmatprep.mubr.bf16.mxu0 0
      %2235 = vmatmul.mubr.bf16.gmra.mrb[0].mxu0 %v1917
      %v2236 = vpop.f32.mrb[0].mxu0
      %v2237 = vadd.f32 %v2100, %v2236
      %v2238 = vpop.f32.mrb[0].mxu0
      %v2239 = vpop.f32.mrb[0].mxu0
      %v2240 = vpop.f32.mrb[0].mxu0
      %2241 = vmatprep.mubr.bf16.mxu0 0
      %2242 = vmatmul.mubr.bf16.gmra.mrb[0].mxu0 %v1918
      %v2243 = vpop.f32.mrb[0].mxu0
      %v2244 = vadd.f32 %v2107, %v2243
      %v2245 = vpop.f32.mrb[0].mxu0
      %v2246 = vpop.f32.mrb[0].mxu0
      %v2247 = vpop.f32.mrb[0].mxu0
      %2248 = vdwg.mxu0
      %v2249 = vld [vmem:[#allocation2 + $0x1] sm:$0xff]
      %v2250 = vld [vmem:[#allocation2 + $0x9] sm:$0xff]
      %v2251 = vld [vmem:[#allocation2 + $0x11] sm:$0xff]
      %v2252 = vld [vmem:[#allocation2 + $0x19] sm:$0xff]
      %v2253 = vld [vmem:[#allocation2 + $0x21] sm:$0xff]
      %v2254 = vld [vmem:[#allocation2 + $0x29] sm:$0xff]
      %v2255 = vld [vmem:[#allocation2 + $0x31] sm:$0xff]
      %v2256 = vld [vmem:[#allocation2 + $0x39] sm:$0xff]
      %v2257 = vld [vmem:[#allocation2 + $0x41] sm:$0xff]
      %v2258 = vld [vmem:[#allocation2 + $0x49] sm:$0xff]
      %v2259 = vld [vmem:[#allocation2 + $0x51] sm:$0xff]
      %v2260 = vld [vmem:[#allocation2 + $0x59] sm:$0xff]
      %v2261 = vld [vmem:[#allocation2 + $0x61] sm:$0xff]
      %v2262 = vld [vmem:[#allocation2 + $0x69] sm:$0xff]
      %v2263 = vld [vmem:[#allocation2 + $0x71] sm:$0xff]
      %v2264 = vld [vmem:[#allocation2 + $0x79] sm:$0xff]
      %v2265 = vpack.c.bf16 %v2250, %v2249
      %v2266 = vpack.c.bf16 %v2252, %v2251
      %v2267 = vpack.c.bf16 %v2254, %v2253
      %v2268 = vpack.c.bf16 %v2256, %v2255
      %v2269 = vpack.c.bf16 %v2258, %v2257
      %v2270 = vpack.c.bf16 %v2260, %v2259
      %v2271 = vpack.c.bf16 %v2262, %v2261
      %v2272 = vpack.c.bf16 %v2264, %v2263
      %v2273 = vld [vmem:[%s4 + $0x80] sm:$0xf]
      %v2274 = vld [vmem:[%s4 + $0x84] sm:$0xf]
      %v2275 = vld [vmem:[%s4 + $0x88] sm:$0xf]
      %v2276 = vld [vmem:[%s4 + $0x8c] sm:$0xf]
      %v2277 = vld [vmem:[%s4 + $0x90] sm:$0xf]
      %v2278 = vld [vmem:[%s4 + $0x94] sm:$0xf]
      %v2279 = vld [vmem:[%s4 + $0x98] sm:$0xf]
      %v2280 = vld [vmem:[%s4 + $0x9c] sm:$0xf]
      %v2281 = vld [vmem:[%s4 + $0xa0] sm:$0xf]
      %v2282 = vld [vmem:[%s4 + $0xa4] sm:$0xf]
      %v2283 = vld [vmem:[%s4 + $0xa8] sm:$0xf]
      %v2284 = vld [vmem:[%s4 + $0xac] sm:$0xf]
      %v2285 = vld [vmem:[%s4 + $0xb0] sm:$0xf]
      %v2286 = vld [vmem:[%s4 + $0xb4] sm:$0xf]
      %v2287 = vld [vmem:[%s4 + $0xb8] sm:$0xf]
      %v2288 = vld [vmem:[%s4 + $0xbc] sm:$0xf]
      %v2305 = vunpack.c.l.b16 %v2273
      %v2306 = vunpack.c.l.b16 %v2274
      %v2307 = vunpack.c.l.b16 %v2275
      %v2308 = vunpack.c.l.b16 %v2276
      %v2309 = vunpack.c.l.b16 %v2277
      %v2310 = vunpack.c.l.b16 %v2278
      %v2311 = vunpack.c.l.b16 %v2279
      %v2312 = vunpack.c.l.b16 %v2280
      %v2313 = vunpack.c.l.b16 %v2281
      %v2314 = vunpack.c.l.b16 %v2282
      %v2315 = vunpack.c.l.b16 %v2283
      %v2316 = vunpack.c.l.b16 %v2284
      %v2317 = vunpack.c.l.b16 %v2285
      %v2318 = vunpack.c.l.b16 %v2286
      %v2319 = vunpack.c.l.b16 %v2287
      %v2320 = vunpack.c.l.b16 %v2288
      %v2321 = vpack.c.b16 %v2306, %v2305
      %v2322 = vpack.c.b16 %v2308, %v2307
      %v2323 = vpack.c.b16 %v2310, %v2309
      %v2324 = vpack.c.b16 %v2312, %v2311
      %v2325 = vpack.c.b16 %v2314, %v2313
      %v2326 = vpack.c.b16 %v2316, %v2315
      %v2327 = vpack.c.b16 %v2318, %v2317
      %v2328 = vpack.c.b16 %v2320, %v2319
      %2337 = vmatprep.subr.bf16.mxu0 0
      %2338 = vmatpush1.bf16.msra.mxu0 %v2321
      %2339 = vmatprep.subr.bf16.mxu0 0
      %2340 = vmatpush1.bf16.msra.mxu0 %v2322
      %2341 = vmatprep.subr.bf16.mxu0 0
      %2342 = vmatpush1.bf16.msra.mxu0 %v2323
      %2343 = vmatprep.subr.bf16.mxu0 0
      %2344 = vmatpush1.bf16.msra.mxu0 %v2324
      %2345 = vmatprep.subr.bf16.mxu0 0
      %2346 = vmatpush1.bf16.msra.mxu0 %v2325
      %2347 = vmatprep.subr.bf16.mxu0 0
      %2348 = vmatpush1.bf16.msra.mxu0 %v2326
      %2349 = vmatprep.subr.bf16.mxu0 0
      %2350 = vmatpush1.bf16.msra.mxu0 %v2327
      %2351 = vmatprep.subr.bf16.mxu0 0
      %2352 = vmatpush1.bf16.msra.mxu0 %v2328
      %2353 = vmatprep.subr.bf16.mxu0 0
      %2354 = vmatpush1.bf16.msra.mxu0 0
      %2355 = vmatprep.subr.bf16.mxu0 0
      %2356 = vmatpush1.bf16.msra.mxu0 0
      %2357 = vmatprep.subr.bf16.mxu0 0
      %2358 = vmatpush1.bf16.msra.mxu0 0
      %2359 = vmatprep.subr.bf16.mxu0 0
      %2360 = vmatpush1.bf16.msra.mxu0 0
      %2361 = vmatprep.subr.bf16.mxu0 0
      %2362 = vmatpush1.bf16.msra.mxu0 0
      %2363 = vmatprep.subr.bf16.mxu0 0
      %2364 = vmatpush1.bf16.msra.mxu0 0
      %2365 = vmatprep.subr.bf16.mxu0 0
      %2366 = vmatpush1.bf16.msra.mxu0 0
      %2367 = vmatprep.subr.bf16.mxu0 0
      %2368 = vmatpush1.bf16.msra.mxu0 0
      %2369 = vmatprep.mubr.bf16.mxu0 0
      %2370 = vmatmul.mubr.bf16.gmra.mrb[0].mxu0 %v2265
      %v2371 = vpop.f32.mrb[0].mxu0
      %v2372 = vadd.f32 0.0, %v2371
      %v2373 = vpop.f32.mrb[0].mxu0
      %v2374 = vpop.f32.mrb[0].mxu0
      %v2375 = vpop.f32.mrb[0].mxu0
      %2376 = vmatprep.mubr.bf16.mxu0 0
      %2377 = vmatmul.mubr.bf16.gmra.mrb[0].mxu0 %v2266
      %v2378 = vpop.f32.mrb[0].mxu0
      %v2379 = vadd.f32 0.0, %v2378
      %v2380 = vpop.f32.mrb[0].mxu0
      %v2381 = vpop.f32.mrb[0].mxu0
      %v2382 = vpop.f32.mrb[0].mxu0
      %2383 = vmatprep.mubr.bf16.mxu0 0
      %2384 = vmatmul.mubr.bf16.gmra.mrb[0].mxu0 %v2267
      %v2385 = vpop.f32.mrb[0].mxu0
      %v2386 = vadd.f32 0.0, %v2385
      %v2387 = vpop.f32.mrb[0].mxu0
      %v2388 = vpop.f32.mrb[0].mxu0
      %v2389 = vpop.f32.mrb[0].mxu0
      %2390 = vmatprep.mubr.bf16.mxu0 0
      %2391 = vmatmul.mubr.bf16.gmra.mrb[0].mxu0 %v2268
      %v2392 = vpop.f32.mrb[0].mxu0
      %v2393 = vadd.f32 0.0, %v2392
      %v2394 = vpop.f32.mrb[0].mxu0
      %v2395 = vpop.f32.mrb[0].mxu0
      %v2396 = vpop.f32.mrb[0].mxu0
      %2397 = vmatprep.mubr.bf16.mxu0 0
      %2398 = vmatmul.mubr.bf16.gmra.mrb[0].mxu0 %v2269
      %v2399 = vpop.f32.mrb[0].mxu0
      %v2400 = vadd.f32 0.0, %v2399
      %v2401 = vpop.f32.mrb[0].mxu0
      %v2402 = vpop.f32.mrb[0].mxu0
      %v2403 = vpop.f32.mrb[0].mxu0
      %2404 = vmatprep.mubr.bf16.mxu0 0
      %2405 = vmatmul.mubr.bf16.gmra.mrb[0].mxu0 %v2270
      %v2406 = vpop.f32.mrb[0].mxu0
      %v2407 = vadd.f32 0.0, %v2406
      %v2408 = vpop.f32.mrb[0].mxu0
      %v2409 = vpop.f32.mrb[0].mxu0
      %v2410 = vpop.f32.mrb[0].mxu0
      %2411 = vmatprep.mubr.bf16.mxu0 0
      %2412 = vmatmul.mubr.bf16.gmra.mrb[0].mxu0 %v2271
      %v2413 = vpop.f32.mrb[0].mxu0
      %v2414 = vadd.f32 0.0, %v2413
      %v2415 = vpop.f32.mrb[0].mxu0
      %v2416 = vpop.f32.mrb[0].mxu0
      %v2417 = vpop.f32.mrb[0].mxu0
      %2418 = vmatprep.mubr.bf16.mxu0 0
      %2419 = vmatmul.mubr.bf16.gmra.mrb[0].mxu0 %v2272
      %v2420 = vpop.f32.mrb[0].mxu0
      %v2421 = vadd.f32 0.0, %v2420
      %v2422 = vpop.f32.mrb[0].mxu0
      %v2423 = vpop.f32.mrb[0].mxu0
      %v2424 = vpop.f32.mrb[0].mxu0
      %2425 = vdwg.mxu0
      %v2426 = vadd.f32 %v2195, %v2372
      %v2427 = vadd.f32 %v2202, %v2379
      %v2428 = vadd.f32 %v2209, %v2386
      %v2429 = vadd.f32 %v2216, %v2393
      %v2430 = vadd.f32 %v2223, %v2400
      %v2431 = vadd.f32 %v2230, %v2407
      %v2432 = vadd.f32 %v2237, %v2414
      %v2433 = vadd.f32 %v2244, %v2421
      %v2434 = vld [vmem:[%s1463] sm:$0xff]
      %v2435 = vld [vmem:[%s1463 + $0x8] sm:$0xff]
      %v2436 = vld [vmem:[%s1463 + $0x10] sm:$0xff]
      %v2437 = vld [vmem:[%s1463 + $0x18] sm:$0xff]
      %v2438 = vld [vmem:[%s1463 + $0x20] sm:$0xff]
      %v2439 = vld [vmem:[%s1463 + $0x28] sm:$0xff]
      %v2440 = vld [vmem:[%s1463 + $0x30] sm:$0xff]
      %v2441 = vld [vmem:[%s1463 + $0x38] sm:$0xff]
      %v2442 = vld [vmem:[%s1463 + $0x40] sm:$0xff]
      %v2443 = vld [vmem:[%s1463 + $0x48] sm:$0xff]
      %v2444 = vld [vmem:[%s1463 + $0x50] sm:$0xff]
      %v2445 = vld [vmem:[%s1463 + $0x58] sm:$0xff]
      %v2446 = vld [vmem:[%s1463 + $0x60] sm:$0xff]
      %v2447 = vld [vmem:[%s1463 + $0x68] sm:$0xff]
      %v2448 = vld [vmem:[%s1463 + $0x70] sm:$0xff]
      %v2449 = vld [vmem:[%s1463 + $0x78] sm:$0xff]
      %v2450 = vpack.c.bf16 %v2435, %v2434
      %v2451 = vpack.c.bf16 %v2437, %v2436
      %v2452 = vpack.c.bf16 %v2439, %v2438
      %v2453 = vpack.c.bf16 %v2441, %v2440
      %v2454 = vpack.c.bf16 %v2443, %v2442
      %v2455 = vpack.c.bf16 %v2445, %v2444
      %v2456 = vpack.c.bf16 %v2447, %v2446
      %v2457 = vpack.c.bf16 %v2449, %v2448
      %v2458 = vld [vmem:[%s4 + $0xc0] sm:$0xf]
      %v2459 = vld [vmem:[%s4 + $0xc4] sm:$0xf]
      %v2460 = vld [vmem:[%s4 + $0xc8] sm:$0xf]
      %v2461 = vld [vmem:[%s4 + $0xcc] sm:$0xf]
      %v2462 = vld [vmem:[%s4 + $0xd0] sm:$0xf]
      %v2463 = vld [vmem:[%s4 + $0xd4] sm:$0xf]
      %v2464 = vld [vmem:[%s4 + $0xd8] sm:$0xf]
      %v2465 = vld [vmem:[%s4 + $0xdc] sm:$0xf]
      %v2466 = vld [vmem:[%s4 + $0xe0] sm:$0xf]
      %v2467 = vld [vmem:[%s4 + $0xe4] sm:$0xf]
      %v2468 = vld [vmem:[%s4 + $0xe8] sm:$0xf]
      %v2469 = vld [vmem:[%s4 + $0xec] sm:$0xf]
      %v2470 = vld [vmem:[%s4 + $0xf0] sm:$0xf]
      %v2471 = vld [vmem:[%s4 + $0xf4] sm:$0xf]
      %v2472 = vld [vmem:[%s4 + $0xf8] sm:$0xf]
      %v2473 = vld [vmem:[%s4 + $0xfc] sm:$0xf]
      %v2490 = vunpack.c.l.b16 %v2458
      %v2491 = vunpack.c.l.b16 %v2459
      %v2492 = vunpack.c.l.b16 %v2460
      %v2493 = vunpack.c.l.b16 %v2461
      %v2494 = vunpack.c.l.b16 %v2462
      %v2495 = vunpack.c.l.b16 %v2463
      %v2496 = vunpack.c.l.b16 %v2464
      %v2497 = vunpack.c.l.b16 %v2465
      %v2498 = vunpack.c.l.b16 %v2466
      %v2499 = vunpack.c.l.b16 %v2467
      %v2500 = vunpack.c.l.b16 %v2468
      %v2501 = vunpack.c.l.b16 %v2469
      %v2502 = vunpack.c.l.b16 %v2470
      %v2503 = vunpack.c.l.b16 %v2471
      %v2504 = vunpack.c.l.b16 %v2472
      %v2505 = vunpack.c.l.b16 %v2473
      %v2506 = vpack.c.b16 %v2491, %v2490
      %v2507 = vpack.c.b16 %v2493, %v2492
      %v2508 = vpack.c.b16 %v2495, %v2494
      %v2509 = vpack.c.b16 %v2497, %v2496
      %v2510 = vpack.c.b16 %v2499, %v2498
      %v2511 = vpack.c.b16 %v2501, %v2500
      %v2512 = vpack.c.b16 %v2503, %v2502
      %v2513 = vpack.c.b16 %v2505, %v2504
      %2522 = vmatprep.subr.bf16.mxu0 0
      %2523 = vmatpush1.bf16.msra.mxu0 %v2506
      %2524 = vmatprep.subr.bf16.mxu0 0
      %2525 = vmatpush1.bf16.msra.mxu0 %v2507
      %2526 = vmatprep.subr.bf16.mxu0 0
      %2527 = vmatpush1.bf16.msra.mxu0 %v2508
      %2528 = vmatprep.subr.bf16.mxu0 0
      %2529 = vmatpush1.bf16.msra.mxu0 %v2509
      %2530 = vmatprep.subr.bf16.mxu0 0
      %2531 = vmatpush1.bf16.msra.mxu0 %v2510
      %2532 = vmatprep.subr.bf16.mxu0 0
      %2533 = vmatpush1.bf16.msra.mxu0 %v2511
      %2534 = vmatprep.subr.bf16.mxu0 0
      %2535 = vmatpush1.bf16.msra.mxu0 %v2512
      %2536 = vmatprep.subr.bf16.mxu0 0
      %2537 = vmatpush1.bf16.msra.mxu0 %v2513
      %2538 = vmatprep.subr.bf16.mxu0 0
      %2539 = vmatpush1.bf16.msra.mxu0 0
      %2540 = vmatprep.subr.bf16.mxu0 0
      %2541 = vmatpush1.bf16.msra.mxu0 0
      %2542 = vmatprep.subr.bf16.mxu0 0
      %2543 = vmatpush1.bf16.msra.mxu0 0
      %2544 = vmatprep.subr.bf16.mxu0 0
      %2545 = vmatpush1.bf16.msra.mxu0 0
      %2546 = vmatprep.subr.bf16.mxu0 0
      %2547 = vmatpush1.bf16.msra.mxu0 0
      %2548 = vmatprep.subr.bf16.mxu0 0
      %2549 = vmatpush1.bf16.msra.mxu0 0
      %2550 = vmatprep.subr.bf16.mxu0 0
      %2551 = vmatpush1.bf16.msra.mxu0 0
      %2552 = vmatprep.subr.bf16.mxu0 0
      %2553 = vmatpush1.bf16.msra.mxu0 0
      %2554 = vmatprep.mubr.bf16.mxu0 0
      %2555 = vmatmul.mubr.bf16.gmra.mrb[0].mxu0 %v2450
      %v2556 = vpop.f32.mrb[0].mxu0
      %v2557 = vadd.f32 0.0, %v2556
      %v2558 = vpop.f32.mrb[0].mxu0
      %v2559 = vpop.f32.mrb[0].mxu0
      %v2560 = vpop.f32.mrb[0].mxu0
      %2561 = vmatprep.mubr.bf16.mxu0 0
      %2562 = vmatmul.mubr.bf16.gmra.mrb[0].mxu0 %v2451
      %v2563 = vpop.f32.mrb[0].mxu0
      %v2564 = vadd.f32 0.0, %v2563
      %v2565 = vpop.f32.mrb[0].mxu0
      %v2566 = vpop.f32.mrb[0].mxu0
      %v2567 = vpop.f32.mrb[0].mxu0
      %2568 = vmatprep.mubr.bf16.mxu0 0
      %2569 = vmatmul.mubr.bf16.gmra.mrb[0].mxu0 %v2452
      %v2570 = vpop.f32.mrb[0].mxu0
      %v2571 = vadd.f32 0.0, %v2570
      %v2572 = vpop.f32.mrb[0].mxu0
      %v2573 = vpop.f32.mrb[0].mxu0
      %v2574 = vpop.f32.mrb[0].mxu0
      %2575 = vmatprep.mubr.bf16.mxu0 0
      %2576 = vmatmul.mubr.bf16.gmra.mrb[0].mxu0 %v2453
      %v2577 = vpop.f32.mrb[0].mxu0
      %v2578 = vadd.f32 0.0, %v2577
      %v2579 = vpop.f32.mrb[0].mxu0
      %v2580 = vpop.f32.mrb[0].mxu0
      %v2581 = vpop.f32.mrb[0].mxu0
      %2582 = vmatprep.mubr.bf16.mxu0 0
      %2583 = vmatmul.mubr.bf16.gmra.mrb[0].mxu0 %v2454
      %v2584 = vpop.f32.mrb[0].mxu0
      %v2585 = vadd.f32 0.0, %v2584
      %v2586 = vpop.f32.mrb[0].mxu0
      %v2587 = vpop.f32.mrb[0].mxu0
      %v2588 = vpop.f32.mrb[0].mxu0
      %2589 = vmatprep.mubr.bf16.mxu0 0
      %2590 = vmatmul.mubr.bf16.gmra.mrb[0].mxu0 %v2455
      %v2591 = vpop.f32.mrb[0].mxu0
      %v2592 = vadd.f32 0.0, %v2591
      %v2593 = vpop.f32.mrb[0].mxu0
      %v2594 = vpop.f32.mrb[0].mxu0
      %v2595 = vpop.f32.mrb[0].mxu0
      %2596 = vmatprep.mubr.bf16.mxu0 0
      %2597 = vmatmul.mubr.bf16.gmra.mrb[0].mxu0 %v2456
      %v2598 = vpop.f32.mrb[0].mxu0
      %v2599 = vadd.f32 0.0, %v2598
      %v2600 = vpop.f32.mrb[0].mxu0
      %v2601 = vpop.f32.mrb[0].mxu0
      %v2602 = vpop.f32.mrb[0].mxu0
      %2603 = vmatprep.mubr.bf16.mxu0 0
      %2604 = vmatmul.mubr.bf16.gmra.mrb[0].mxu0 %v2457
      %v2605 = vpop.f32.mrb[0].mxu0
      %v2606 = vadd.f32 0.0, %v2605
      %v2607 = vpop.f32.mrb[0].mxu0
      %v2608 = vpop.f32.mrb[0].mxu0
      %v2609 = vpop.f32.mrb[0].mxu0
      %2610 = vdwg.mxu0
      %v2611 = vadd.f32 %v2426, %v2557
      %v2612 = vadd.f32 %v2427, %v2564
      %v2613 = vadd.f32 %v2428, %v2571
      %v2614 = vadd.f32 %v2429, %v2578
      %v2615 = vadd.f32 %v2430, %v2585
      %v2616 = vadd.f32 %v2431, %v2592
      %v2617 = vadd.f32 %v2432, %v2599
      %v2618 = vadd.f32 %v2433, %v2606
      %v2619 = vld [vmem:[%s1874] sm:$0xff]
      %v2620 = vld [vmem:[%s1874 + $0x8] sm:$0xff]
      %v2621 = vld [vmem:[%s1874 + $0x10] sm:$0xff]
      %v2622 = vld [vmem:[%s1874 + $0x18] sm:$0xff]
      %v2623 = vld [vmem:[%s1874 + $0x20] sm:$0xff]
      %v2624 = vld [vmem:[%s1874 + $0x28] sm:$0xff]
      %v2625 = vld [vmem:[%s1874 + $0x30] sm:$0xff]
      %v2626 = vld [vmem:[%s1874 + $0x38] sm:$0xff]
      %v2627 = vld [vmem:[%s1874 + $0x40] sm:$0xff]
      %v2628 = vld [vmem:[%s1874 + $0x48] sm:$0xff]
      %v2629 = vld [vmem:[%s1874 + $0x50] sm:$0xff]
      %v2630 = vld [vmem:[%s1874 + $0x58] sm:$0xff]
      %v2631 = vld [vmem:[%s1874 + $0x60] sm:$0xff]
      %v2632 = vld [vmem:[%s1874 + $0x68] sm:$0xff]
      %v2633 = vld [vmem:[%s1874 + $0x70] sm:$0xff]
      %v2634 = vld [vmem:[%s1874 + $0x78] sm:$0xff]
      %v2635 = vpack.c.bf16 %v2620, %v2619
      %v2636 = vpack.c.bf16 %v2622, %v2621
      %v2637 = vpack.c.bf16 %v2624, %v2623
      %v2638 = vpack.c.bf16 %v2626, %v2625
      %v2639 = vpack.c.bf16 %v2628, %v2627
      %v2640 = vpack.c.bf16 %v2630, %v2629
      %v2641 = vpack.c.bf16 %v2632, %v2631
      %v2642 = vpack.c.bf16 %v2634, %v2633
      %v2643 = vld [vmem:[%s4 + $0x100] sm:$0xf]
      %v2644 = vld [vmem:[%s4 + $0x104] sm:$0xf]
      %v2645 = vld [vmem:[%s4 + $0x108] sm:$0xf]
      %v2646 = vld [vmem:[%s4 + $0x10c] sm:$0xf]
      %v2647 = vld [vmem:[%s4 + $0x110] sm:$0xf]
      %v2648 = vld [vmem:[%s4 + $0x114] sm:$0xf]
      %v2649 = vld [vmem:[%s4 + $0x118] sm:$0xf]
      %v2650 = vld [vmem:[%s4 + $0x11c] sm:$0xf]
      %v2651 = vld [vmem:[%s4 + $0x120] sm:$0xf]
      %v2652 = vld [vmem:[%s4 + $0x124] sm:$0xf]
      %v2653 = vld [vmem:[%s4 + $0x128] sm:$0xf]
      %v2654 = vld [vmem:[%s4 + $0x12c] sm:$0xf]
      %v2655 = vld [vmem:[%s4 + $0x130] sm:$0xf]
      %v2656 = vld [vmem:[%s4 + $0x134] sm:$0xf]
      %v2657 = vld [vmem:[%s4 + $0x138] sm:$0xf]
      %v2658 = vld [vmem:[%s4 + $0x13c] sm:$0xf]
      %v2675 = vunpack.c.l.b16 %v2643
      %v2676 = vunpack.c.l.b16 %v2644
      %v2677 = vunpack.c.l.b16 %v2645
      %v2678 = vunpack.c.l.b16 %v2646
      %v2679 = vunpack.c.l.b16 %v2647
      %v2680 = vunpack.c.l.b16 %v2648
      %v2681 = vunpack.c.l.b16 %v2649
      %v2682 = vunpack.c.l.b16 %v2650
      %v2683 = vunpack.c.l.b16 %v2651
      %v2684 = vunpack.c.l.b16 %v2652
      %v2685 = vunpack.c.l.b16 %v2653
      %v2686 = vunpack.c.l.b16 %v2654
      %v2687 = vunpack.c.l.b16 %v2655
      %v2688 = vunpack.c.l.b16 %v2656
      %v2689 = vunpack.c.l.b16 %v2657
      %v2690 = vunpack.c.l.b16 %v2658
      %v2691 = vpack.c.b16 %v2676, %v2675
      %v2692 = vpack.c.b16 %v2678, %v2677
      %v2693 = vpack.c.b16 %v2680, %v2679
      %v2694 = vpack.c.b16 %v2682, %v2681
      %v2695 = vpack.c.b16 %v2684, %v2683
      %v2696 = vpack.c.b16 %v2686, %v2685
      %v2697 = vpack.c.b16 %v2688, %v2687
      %v2698 = vpack.c.b16 %v2690, %v2689
      %2707 = vmatprep.subr.bf16.mxu0 0
      %2708 = vmatpush1.bf16.msra.mxu0 %v2691
      %2709 = vmatprep.subr.bf16.mxu0 0
      %2710 = vmatpush1.bf16.msra.mxu0 %v2692
      %2711 = vmatprep.subr.bf16.mxu0 0
      %2712 = vmatpush1.bf16.msra.mxu0 %v2693
      %2713 = vmatprep.subr.bf16.mxu0 0
      %2714 = vmatpush1.bf16.msra.mxu0 %v2694
      %2715 = vmatprep.subr.bf16.mxu0 0
      %2716 = vmatpush1.bf16.msra.mxu0 %v2695
      %2717 = vmatprep.subr.bf16.mxu0 0
      %2718 = vmatpush1.bf16.msra.mxu0 %v2696
      %2719 = vmatprep.subr.bf16.mxu0 0
      %2720 = vmatpush1.bf16.msra.mxu0 %v2697
      %2721 = vmatprep.subr.bf16.mxu0 0
      %2722 = vmatpush1.bf16.msra.mxu0 %v2698
      %2723 = vmatprep.subr.bf16.mxu0 0
      %2724 = vmatpush1.bf16.msra.mxu0 0
      %2725 = vmatprep.subr.bf16.mxu0 0
      %2726 = vmatpush1.bf16.msra.mxu0 0
      %2727 = vmatprep.subr.bf16.mxu0 0
      %2728 = vmatpush1.bf16.msra.mxu0 0
      %2729 = vmatprep.subr.bf16.mxu0 0
      %2730 = vmatpush1.bf16.msra.mxu0 0
      %2731 = vmatprep.subr.bf16.mxu0 0
      %2732 = vmatpush1.bf16.msra.mxu0 0
      %2733 = vmatprep.subr.bf16.mxu0 0
      %2734 = vmatpush1.bf16.msra.mxu0 0
      %2735 = vmatprep.subr.bf16.mxu0 0
      %2736 = vmatpush1.bf16.msra.mxu0 0
      %2737 = vmatprep.subr.bf16.mxu0 0
      %2738 = vmatpush1.bf16.msra.mxu0 0
      %2739 = vmatprep.mubr.bf16.mxu0 0
      %2740 = vmatmul.mubr.bf16.gmra.mrb[0].mxu0 %v2635
      %v2741 = vpop.f32.mrb[0].mxu0
      %v2742 = vadd.f32 0.0, %v2741
      %v2743 = vpop.f32.mrb[0].mxu0
      %v2744 = vpop.f32.mrb[0].mxu0
      %v2745 = vpop.f32.mrb[0].mxu0
      %2746 = vmatprep.mubr.bf16.mxu0 0
      %2747 = vmatmul.mubr.bf16.gmra.mrb[0].mxu0 %v2636
      %v2748 = vpop.f32.mrb[0].mxu0
      %v2749 = vadd.f32 0.0, %v2748
      %v2750 = vpop.f32.mrb[0].mxu0
      %v2751 = vpop.f32.mrb[0].mxu0
      %v2752 = vpop.f32.mrb[0].mxu0
      %2753 = vmatprep.mubr.bf16.mxu0 0
      %2754 = vmatmul.mubr.bf16.gmra.mrb[0].mxu0 %v2637
      %v2755 = vpop.f32.mrb[0].mxu0
      %v2756 = vadd.f32 0.0, %v2755
      %v2757 = vpop.f32.mrb[0].mxu0
      %v2758 = vpop.f32.mrb[0].mxu0
      %v2759 = vpop.f32.mrb[0].mxu0
      %2760 = vmatprep.mubr.bf16.mxu0 0
      %2761 = vmatmul.mubr.bf16.gmra.mrb[0].mxu0 %v2638
      %v2762 = vpop.f32.mrb[0].mxu0
      %v2763 = vadd.f32 0.0, %v2762
      %v2764 = vpop.f32.mrb[0].mxu0
      %v2765 = vpop.f32.mrb[0].mxu0
      %v2766 = vpop.f32.mrb[0].mxu0
      %2767 = vmatprep.mubr.bf16.mxu0 0
      %2768 = vmatmul.mubr.bf16.gmra.mrb[0].mxu0 %v2639
      %v2769 = vpop.f32.mrb[0].mxu0
      %v2770 = vadd.f32 0.0, %v2769
      %v2771 = vpop.f32.mrb[0].mxu0
      %v2772 = vpop.f32.mrb[0].mxu0
      %v2773 = vpop.f32.mrb[0].mxu0
      %2774 = vmatprep.mubr.bf16.mxu0 0
      %2775 = vmatmul.mubr.bf16.gmra.mrb[0].mxu0 %v2640
      %v2776 = vpop.f32.mrb[0].mxu0
      %v2777 = vadd.f32 0.0, %v2776
      %v2778 = vpop.f32.mrb[0].mxu0
      %v2779 = vpop.f32.mrb[0].mxu0
      %v2780 = vpop.f32.mrb[0].mxu0
      %2781 = vmatprep.mubr.bf16.mxu0 0
      %2782 = vmatmul.mubr.bf16.gmra.mrb[0].mxu0 %v2641
      %v2783 = vpop.f32.mrb[0].mxu0
      %v2784 = vadd.f32 0.0, %v2783
      %v2785 = vpop.f32.mrb[0].mxu0
      %v2786 = vpop.f32.mrb[0].mxu0
      %v2787 = vpop.f32.mrb[0].mxu0
      %2788 = vmatprep.mubr.bf16.mxu0 0
      %2789 = vmatmul.mubr.bf16.gmra.mrb[0].mxu0 %v2642
      %v2790 = vpop.f32.mrb[0].mxu0
      %v2791 = vadd.f32 0.0, %v2790
      %v2792 = vpop.f32.mrb[0].mxu0
      %v2793 = vpop.f32.mrb[0].mxu0
      %v2794 = vpop.f32.mrb[0].mxu0
      %2795 = vdwg.mxu0
      %v2796 = vadd.f32 %v2611, %v2742
      %v2797 = vadd.f32 %v2612, %v2749
      %v2798 = vadd.f32 %v2613, %v2756
      %v2799 = vadd.f32 %v2614, %v2763
      %v2800 = vadd.f32 %v2615, %v2770
      %v2801 = vadd.f32 %v2616, %v2777
      %v2802 = vadd.f32 %v2617, %v2784
      %v2803 = vadd.f32 %v2618, %v2791
      %v2804 = vld [vmem:[%s1463 + $0x1] sm:$0xff]
      %v2805 = vld [vmem:[%s1463 + $0x9] sm:$0xff]
      %v2806 = vld [vmem:[%s1463 + $0x11] sm:$0xff]
      %v2807 = vld [vmem:[%s1463 + $0x19] sm:$0xff]
      %v2808 = vld [vmem:[%s1463 + $0x21] sm:$0xff]
      %v2809 = vld [vmem:[%s1463 + $0x29] sm:$0xff]
      %v2810 = vld [vmem:[%s1463 + $0x31] sm:$0xff]
      %v2811 = vld [vmem:[%s1463 + $0x39] sm:$0xff]
      %v2812 = vld [vmem:[%s1463 + $0x41] sm:$0xff]
      %v2813 = vld [vmem:[%s1463 + $0x49] sm:$0xff]
      %v2814 = vld [vmem:[%s1463 + $0x51] sm:$0xff]
      %v2815 = vld [vmem:[%s1463 + $0x59] sm:$0xff]
      %v2816 = vld [vmem:[%s1463 + $0x61] sm:$0xff]
      %v2817 = vld [vmem:[%s1463 + $0x69] sm:$0xff]
      %v2818 = vld [vmem:[%s1463 + $0x71] sm:$0xff]
      %v2819 = vld [vmem:[%s1463 + $0x79] sm:$0xff]
      %v2820 = vpack.c.bf16 %v2805, %v2804
      %v2821 = vpack.c.bf16 %v2807, %v2806
      %v2822 = vpack.c.bf16 %v2809, %v2808
      %v2823 = vpack.c.bf16 %v2811, %v2810
      %v2824 = vpack.c.bf16 %v2813, %v2812
      %v2825 = vpack.c.bf16 %v2815, %v2814
      %v2826 = vpack.c.bf16 %v2817, %v2816
      %v2827 = vpack.c.bf16 %v2819, %v2818
      %v2828 = vld [vmem:[%s4 + $0x140] sm:$0xf]
      %v2829 = vld [vmem:[%s4 + $0x144] sm:$0xf]
      %v2830 = vld [vmem:[%s4 + $0x148] sm:$0xf]
      %v2831 = vld [vmem:[%s4 + $0x14c] sm:$0xf]
      %v2832 = vld [vmem:[%s4 + $0x150] sm:$0xf]
      %v2833 = vld [vmem:[%s4 + $0x154] sm:$0xf]
      %v2834 = vld [vmem:[%s4 + $0x158] sm:$0xf]
      %v2835 = vld [vmem:[%s4 + $0x15c] sm:$0xf]
      %v2836 = vld [vmem:[%s4 + $0x160] sm:$0xf]
      %v2837 = vld [vmem:[%s4 + $0x164] sm:$0xf]
      %v2838 = vld [vmem:[%s4 + $0x168] sm:$0xf]
      %v2839 = vld [vmem:[%s4 + $0x16c] sm:$0xf]
      %v2840 = vld [vmem:[%s4 + $0x170] sm:$0xf]
      %v2841 = vld [vmem:[%s4 + $0x174] sm:$0xf]
      %v2842 = vld [vmem:[%s4 + $0x178] sm:$0xf]
      %v2843 = vld [vmem:[%s4 + $0x17c] sm:$0xf]
      %v2860 = vunpack.c.l.b16 %v2828
      %v2861 = vunpack.c.l.b16 %v2829
      %v2862 = vunpack.c.l.b16 %v2830
      %v2863 = vunpack.c.l.b16 %v2831
      %v2864 = vunpack.c.l.b16 %v2832
      %v2865 = vunpack.c.l.b16 %v2833
      %v2866 = vunpack.c.l.b16 %v2834
      %v2867 = vunpack.c.l.b16 %v2835
      %v2868 = vunpack.c.l.b16 %v2836
      %v2869 = vunpack.c.l.b16 %v2837
      %v2870 = vunpack.c.l.b16 %v2838
      %v2871 = vunpack.c.l.b16 %v2839
      %v2872 = vunpack.c.l.b16 %v2840
      %v2873 = vunpack.c.l.b16 %v2841
      %v2874 = vunpack.c.l.b16 %v2842
      %v2875 = vunpack.c.l.b16 %v2843
      %v2876 = vpack.c.b16 %v2861, %v2860
      %v2877 = vpack.c.b16 %v2863, %v2862
      %v2878 = vpack.c.b16 %v2865, %v2864
      %v2879 = vpack.c.b16 %v2867, %v2866
      %v2880 = vpack.c.b16 %v2869, %v2868
      %v2881 = vpack.c.b16 %v2871, %v2870
      %v2882 = vpack.c.b16 %v2873, %v2872
      %v2883 = vpack.c.b16 %v2875, %v2874
      %2892 = vmatprep.subr.bf16.mxu0 0
      %2893 = vmatpush1.bf16.msra.mxu0 %v2876
      %2894 = vmatprep.subr.bf16.mxu0 0
      %2895 = vmatpush1.bf16.msra.mxu0 %v2877
      %2896 = vmatprep.subr.bf16.mxu0 0
      %2897 = vmatpush1.bf16.msra.mxu0 %v2878
      %2898 = vmatprep.subr.bf16.mxu0 0
      %2899 = vmatpush1.bf16.msra.mxu0 %v2879
      %2900 = vmatprep.subr.bf16.mxu0 0
      %2901 = vmatpush1.bf16.msra.mxu0 %v2880
      %2902 = vmatprep.subr.bf16.mxu0 0
      %2903 = vmatpush1.bf16.msra.mxu0 %v2881
      %2904 = vmatprep.subr.bf16.mxu0 0
      %2905 = vmatpush1.bf16.msra.mxu0 %v2882
      %2906 = vmatprep.subr.bf16.mxu0 0
      %2907 = vmatpush1.bf16.msra.mxu0 %v2883
      %2908 = vmatprep.subr.bf16.mxu0 0
      %2909 = vmatpush1.bf16.msra.mxu0 0
      %2910 = vmatprep.subr.bf16.mxu0 0
      %2911 = vmatpush1.bf16.msra.mxu0 0
      %2912 = vmatprep.subr.bf16.mxu0 0
      %2913 = vmatpush1.bf16.msra.mxu0 0
      %2914 = vmatprep.subr.bf16.mxu0 0
      %2915 = vmatpush1.bf16.msra.mxu0 0
      %2916 = vmatprep.subr.bf16.mxu0 0
      %2917 = vmatpush1.bf16.msra.mxu0 0
      %2918 = vmatprep.subr.bf16.mxu0 0
      %2919 = vmatpush1.bf16.msra.mxu0 0
      %2920 = vmatprep.subr.bf16.mxu0 0
      %2921 = vmatpush1.bf16.msra.mxu0 0
      %2922 = vmatprep.subr.bf16.mxu0 0
      %2923 = vmatpush1.bf16.msra.mxu0 0
      %2924 = vmatprep.mubr.bf16.mxu0 0
      %2925 = vmatmul.mubr.bf16.gmra.mrb[0].mxu0 %v2820
      %v2926 = vpop.f32.mrb[0].mxu0
      %v2927 = vadd.f32 0.0, %v2926
      %v2928 = vpop.f32.mrb[0].mxu0
      %v2929 = vpop.f32.mrb[0].mxu0
      %v2930 = vpop.f32.mrb[0].mxu0
      %2931 = vmatprep.mubr.bf16.mxu0 0
      %2932 = vmatmul.mubr.bf16.gmra.mrb[0].mxu0 %v2821
      %v2933 = vpop.f32.mrb[0].mxu0
      %v2934 = vadd.f32 0.0, %v2933
      %v2935 = vpop.f32.mrb[0].mxu0
      %v2936 = vpop.f32.mrb[0].mxu0
      %v2937 = vpop.f32.mrb[0].mxu0
      %2938 = vmatprep.mubr.bf16.mxu0 0
      %2939 = vmatmul.mubr.bf16.gmra.mrb[0].mxu0 %v2822
      %v2940 = vpop.f32.mrb[0].mxu0
      %v2941 = vadd.f32 0.0, %v2940
      %v2942 = vpop.f32.mrb[0].mxu0
      %v2943 = vpop.f32.mrb[0].mxu0
      %v2944 = vpop.f32.mrb[0].mxu0
      %2945 = vmatprep.mubr.bf16.mxu0 0
      %2946 = vmatmul.mubr.bf16.gmra.mrb[0].mxu0 %v2823
      %v2947 = vpop.f32.mrb[0].mxu0
      %v2948 = vadd.f32 0.0, %v2947
      %v2949 = vpop.f32.mrb[0].mxu0
      %v2950 = vpop.f32.mrb[0].mxu0
      %v2951 = vpop.f32.mrb[0].mxu0
      %2952 = vmatprep.mubr.bf16.mxu0 0
      %2953 = vmatmul.mubr.bf16.gmra.mrb[0].mxu0 %v2824
      %v2954 = vpop.f32.mrb[0].mxu0
      %v2955 = vadd.f32 0.0, %v2954
      %v2956 = vpop.f32.mrb[0].mxu0
      %v2957 = vpop.f32.mrb[0].mxu0
      %v2958 = vpop.f32.mrb[0].mxu0
      %2959 = vmatprep.mubr.bf16.mxu0 0
      %2960 = vmatmul.mubr.bf16.gmra.mrb[0].mxu0 %v2825
      %v2961 = vpop.f32.mrb[0].mxu0
      %v2962 = vadd.f32 0.0, %v2961
      %v2963 = vpop.f32.mrb[0].mxu0
      %v2964 = vpop.f32.mrb[0].mxu0
      %v2965 = vpop.f32.mrb[0].mxu0
      %2966 = vmatprep.mubr.bf16.mxu0 0
      %2967 = vmatmul.mubr.bf16.gmra.mrb[0].mxu0 %v2826
      %v2968 = vpop.f32.mrb[0].mxu0
      %v2969 = vadd.f32 0.0, %v2968
      %v2970 = vpop.f32.mrb[0].mxu0
      %v2971 = vpop.f32.mrb[0].mxu0
      %v2972 = vpop.f32.mrb[0].mxu0
      %2973 = vmatprep.mubr.bf16.mxu0 0
      %2974 = vmatmul.mubr.bf16.gmra.mrb[0].mxu0 %v2827
      %v2975 = vpop.f32.mrb[0].mxu0
      %v2976 = vadd.f32 0.0, %v2975
      %v2977 = vpop.f32.mrb[0].mxu0
      %v2978 = vpop.f32.mrb[0].mxu0
      %v2979 = vpop.f32.mrb[0].mxu0
      %2980 = vdwg.mxu0
      %v2981 = vadd.f32 %v2796, %v2927
      %v2982 = vadd.f32 %v2797, %v2934
      %v2983 = vadd.f32 %v2798, %v2941
      %v2984 = vadd.f32 %v2799, %v2948
      %v2985 = vadd.f32 %v2800, %v2955
      %v2986 = vadd.f32 %v2801, %v2962
      %v2987 = vadd.f32 %v2802, %v2969
      %v2988 = vadd.f32 %v2803, %v2976
      %v2989 = vld [vmem:[#allocation2 + $0x10] sm:$0xff]
      %v2990 = vld [vmem:[#allocation2 + $0x18] sm:$0xff]
      %v2991 = vld [vmem:[#allocation2 + $0x20] sm:$0xff]
      %v2992 = vld [vmem:[#allocation2 + $0x28] sm:$0xff]
      %v2993 = vld [vmem:[#allocation2 + $0x30] sm:$0xff]
      %v2994 = vld [vmem:[#allocation2 + $0x38] sm:$0xff]
      %v2995 = vld [vmem:[#allocation2 + $0x40] sm:$0xff]
      %v2996 = vld [vmem:[#allocation2 + $0x48] sm:$0xff]
      %v2997 = vld [vmem:[#allocation2 + $0x50] sm:$0xff]
      %v2998 = vld [vmem:[#allocation2 + $0x58] sm:$0xff]
      %v2999 = vld [vmem:[#allocation2 + $0x60] sm:$0xff]
      %v3000 = vld [vmem:[#allocation2 + $0x68] sm:$0xff]
      %v3001 = vld [vmem:[#allocation2 + $0x70] sm:$0xff]
      %v3002 = vld [vmem:[#allocation2 + $0x78] sm:$0xff]
      %v3003 = vld [vmem:[#allocation2 + $0x80] sm:$0xff]
      %v3004 = vld [vmem:[#allocation2 + $0x88] sm:$0xff]
      %v3005 = vpack.c.bf16 %v2990, %v2989
      %v3006 = vpack.c.bf16 %v2992, %v2991
      %v3007 = vpack.c.bf16 %v2994, %v2993
      %v3008 = vpack.c.bf16 %v2996, %v2995
      %v3009 = vpack.c.bf16 %v2998, %v2997
      %v3010 = vpack.c.bf16 %v3000, %v2999
      %v3011 = vpack.c.bf16 %v3002, %v3001
      %v3012 = vpack.c.bf16 %v3004, %v3003
      %v3013 = vld [vmem:[%s4 + $0x180] sm:$0xf]
      %v3014 = vld [vmem:[%s4 + $0x184] sm:$0xf]
      %v3015 = vld [vmem:[%s4 + $0x188] sm:$0xf]
      %v3016 = vld [vmem:[%s4 + $0x18c] sm:$0xf]
      %v3017 = vld [vmem:[%s4 + $0x190] sm:$0xf]
      %v3018 = vld [vmem:[%s4 + $0x194] sm:$0xf]
      %v3019 = vld [vmem:[%s4 + $0x198] sm:$0xf]
      %v3020 = vld [vmem:[%s4 + $0x19c] sm:$0xf]
      %v3021 = vld [vmem:[%s4 + $0x1a0] sm:$0xf]
      %v3022 = vld [vmem:[%s4 + $0x1a4] sm:$0xf]
      %v3023 = vld [vmem:[%s4 + $0x1a8] sm:$0xf]
      %v3024 = vld [vmem:[%s4 + $0x1ac] sm:$0xf]
      %v3025 = vld [vmem:[%s4 + $0x1b0] sm:$0xf]
      %v3026 = vld [vmem:[%s4 + $0x1b4] sm:$0xf]
      %v3027 = vld [vmem:[%s4 + $0x1b8] sm:$0xf]
      %v3028 = vld [vmem:[%s4 + $0x1bc] sm:$0xf]
      %v3045 = vunpack.c.l.b16 %v3013
      %v3046 = vunpack.c.l.b16 %v3014
      %v3047 = vunpack.c.l.b16 %v3015
      %v3048 = vunpack.c.l.b16 %v3016
      %v3049 = vunpack.c.l.b16 %v3017
      %v3050 = vunpack.c.l.b16 %v3018
      %v3051 = vunpack.c.l.b16 %v3019
      %v3052 = vunpack.c.l.b16 %v3020
      %v3053 = vunpack.c.l.b16 %v3021
      %v3054 = vunpack.c.l.b16 %v3022
      %v3055 = vunpack.c.l.b16 %v3023
      %v3056 = vunpack.c.l.b16 %v3024
      %v3057 = vunpack.c.l.b16 %v3025
      %v3058 = vunpack.c.l.b16 %v3026
      %v3059 = vunpack.c.l.b16 %v3027
      %v3060 = vunpack.c.l.b16 %v3028
      %v3061 = vpack.c.b16 %v3046, %v3045
      %v3062 = vpack.c.b16 %v3048, %v3047
      %v3063 = vpack.c.b16 %v3050, %v3049
      %v3064 = vpack.c.b16 %v3052, %v3051
      %v3065 = vpack.c.b16 %v3054, %v3053
      %v3066 = vpack.c.b16 %v3056, %v3055
      %v3067 = vpack.c.b16 %v3058, %v3057
      %v3068 = vpack.c.b16 %v3060, %v3059
      %3077 = vmatprep.subr.bf16.mxu0 0
      %3078 = vmatpush1.bf16.msra.mxu0 %v3061
      %3079 = vmatprep.subr.bf16.mxu0 0
      %3080 = vmatpush1.bf16.msra.mxu0 %v3062
      %3081 = vmatprep.subr.bf16.mxu0 0
      %3082 = vmatpush1.bf16.msra.mxu0 %v3063
      %3083 = vmatprep.subr.bf16.mxu0 0
      %3084 = vmatpush1.bf16.msra.mxu0 %v3064
      %3085 = vmatprep.subr.bf16.mxu0 0
      %3086 = vmatpush1.bf16.msra.mxu0 %v3065
      %3087 = vmatprep.subr.bf16.mxu0 0
      %3088 = vmatpush1.bf16.msra.mxu0 %v3066
      %3089 = vmatprep.subr.bf16.mxu0 0
      %3090 = vmatpush1.bf16.msra.mxu0 %v3067
      %3091 = vmatprep.subr.bf16.mxu0 0
      %3092 = vmatpush1.bf16.msra.mxu0 %v3068
      %3093 = vmatprep.subr.bf16.mxu0 0
      %3094 = vmatpush1.bf16.msra.mxu0 0
      %3095 = vmatprep.subr.bf16.mxu0 0
      %3096 = vmatpush1.bf16.msra.mxu0 0
      %3097 = vmatprep.subr.bf16.mxu0 0
      %3098 = vmatpush1.bf16.msra.mxu0 0
      %3099 = vmatprep.subr.bf16.mxu0 0
      %3100 = vmatpush1.bf16.msra.mxu0 0
      %3101 = vmatprep.subr.bf16.mxu0 0
      %3102 = vmatpush1.bf16.msra.mxu0 0
      %3103 = vmatprep.subr.bf16.mxu0 0
      %3104 = vmatpush1.bf16.msra.mxu0 0
      %3105 = vmatprep.subr.bf16.mxu0 0
      %3106 = vmatpush1.bf16.msra.mxu0 0
      %3107 = vmatprep.subr.bf16.mxu0 0
      %3108 = vmatpush1.bf16.msra.mxu0 0
      %3109 = vmatprep.mubr.bf16.mxu0 0
      %3110 = vmatmul.mubr.bf16.gmra.mrb[0].mxu0 %v3005
      %v3111 = vpop.f32.mrb[0].mxu0
      %v3112 = vadd.f32 0.0, %v3111
      %v3113 = vpop.f32.mrb[0].mxu0
      %v3114 = vpop.f32.mrb[0].mxu0
      %v3115 = vpop.f32.mrb[0].mxu0
      %3116 = vmatprep.mubr.bf16.mxu0 0
      %3117 = vmatmul.mubr.bf16.gmra.mrb[0].mxu0 %v3006
      %v3118 = vpop.f32.mrb[0].mxu0
      %v3119 = vadd.f32 0.0, %v3118
      %v3120 = vpop.f32.mrb[0].mxu0
      %v3121 = vpop.f32.mrb[0].mxu0
      %v3122 = vpop.f32.mrb[0].mxu0
      %3123 = vmatprep.mubr.bf16.mxu0 0
      %3124 = vmatmul.mubr.bf16.gmra.mrb[0].mxu0 %v3007
      %v3125 = vpop.f32.mrb[0].mxu0
      %v3126 = vadd.f32 0.0, %v3125
      %v3127 = vpop.f32.mrb[0].mxu0
      %v3128 = vpop.f32.mrb[0].mxu0
      %v3129 = vpop.f32.mrb[0].mxu0
      %3130 = vmatprep.mubr.bf16.mxu0 0
      %3131 = vmatmul.mubr.bf16.gmra.mrb[0].mxu0 %v3008
      %v3132 = vpop.f32.mrb[0].mxu0
      %v3133 = vadd.f32 0.0, %v3132
      %v3134 = vpop.f32.mrb[0].mxu0
      %v3135 = vpop.f32.mrb[0].mxu0
      %v3136 = vpop.f32.mrb[0].mxu0
      %3137 = vmatprep.mubr.bf16.mxu0 0
      %3138 = vmatmul.mubr.bf16.gmra.mrb[0].mxu0 %v3009
      %v3139 = vpop.f32.mrb[0].mxu0
      %v3140 = vadd.f32 0.0, %v3139
      %v3141 = vpop.f32.mrb[0].mxu0
      %v3142 = vpop.f32.mrb[0].mxu0
      %v3143 = vpop.f32.mrb[0].mxu0
      %3144 = vmatprep.mubr.bf16.mxu0 0
      %3145 = vmatmul.mubr.bf16.gmra.mrb[0].mxu0 %v3010
      %v3146 = vpop.f32.mrb[0].mxu0
      %v3147 = vadd.f32 0.0, %v3146
      %v3148 = vpop.f32.mrb[0].mxu0
      %v3149 = vpop.f32.mrb[0].mxu0
      %v3150 = vpop.f32.mrb[0].mxu0
      %3151 = vmatprep.mubr.bf16.mxu0 0
      %3152 = vmatmul.mubr.bf16.gmra.mrb[0].mxu0 %v3011
      %v3153 = vpop.f32.mrb[0].mxu0
      %v3154 = vadd.f32 0.0, %v3153
      %v3155 = vpop.f32.mrb[0].mxu0
      %v3156 = vpop.f32.mrb[0].mxu0
      %v3157 = vpop.f32.mrb[0].mxu0
      %3158 = vmatprep.mubr.bf16.mxu0 0
      %3159 = vmatmul.mubr.bf16.gmra.mrb[0].mxu0 %v3012
      %v3160 = vpop.f32.mrb[0].mxu0
      %v3161 = vadd.f32 0.0, %v3160
      %v3162 = vpop.f32.mrb[0].mxu0
      %v3163 = vpop.f32.mrb[0].mxu0
      %v3164 = vpop.f32.mrb[0].mxu0
      %3165 = vdwg.mxu0
      %v3166 = vadd.f32 %v2981, %v3112
      %v3167 = vadd.f32 %v2982, %v3119
      %v3168 = vadd.f32 %v2983, %v3126
      %v3169 = vadd.f32 %v2984, %v3133
      %v3170 = vadd.f32 %v2985, %v3140
      %v3171 = vadd.f32 %v2986, %v3147
      %v3172 = vadd.f32 %v2987, %v3154
      %v3173 = vadd.f32 %v2988, %v3161
      %v3174 = vld [vmem:[%s1052 + $0x10] sm:$0xff]
      %v3175 = vld [vmem:[%s1052 + $0x18] sm:$0xff]
      %v3176 = vld [vmem:[%s1052 + $0x20] sm:$0xff]
      %v3177 = vld [vmem:[%s1052 + $0x28] sm:$0xff]
      %v3178 = vld [vmem:[%s1052 + $0x30] sm:$0xff]
      %v3179 = vld [vmem:[%s1052 + $0x38] sm:$0xff]
      %v3180 = vld [vmem:[%s1052 + $0x40] sm:$0xff]
      %v3181 = vld [vmem:[%s1052 + $0x48] sm:$0xff]
      %v3182 = vld [vmem:[%s1052 + $0x50] sm:$0xff]
      %v3183 = vld [vmem:[%s1052 + $0x58] sm:$0xff]
      %v3184 = vld [vmem:[%s1052 + $0x60] sm:$0xff]
      %v3185 = vld [vmem:[%s1052 + $0x68] sm:$0xff]
      %v3186 = vld [vmem:[%s1052 + $0x70] sm:$0xff]
      %v3187 = vld [vmem:[%s1052 + $0x78] sm:$0xff]
      %v3188 = vld [vmem:[%s1052 + $0x80] sm:$0xff]
      %v3189 = vld [vmem:[%s1052 + $0x88] sm:$0xff]
      %v3190 = vpack.c.bf16 %v3175, %v3174
      %v3191 = vpack.c.bf16 %v3177, %v3176
      %v3192 = vpack.c.bf16 %v3179, %v3178
      %v3193 = vpack.c.bf16 %v3181, %v3180
      %v3194 = vpack.c.bf16 %v3183, %v3182
      %v3195 = vpack.c.bf16 %v3185, %v3184
      %v3196 = vpack.c.bf16 %v3187, %v3186
      %v3197 = vpack.c.bf16 %v3189, %v3188
      %v3198 = vld [vmem:[%s4 + $0x1c0] sm:$0xf]
      %v3199 = vld [vmem:[%s4 + $0x1c4] sm:$0xf]
      %v3200 = vld [vmem:[%s4 + $0x1c8] sm:$0xf]
      %v3201 = vld [vmem:[%s4 + $0x1cc] sm:$0xf]
      %v3202 = vld [vmem:[%s4 + $0x1d0] sm:$0xf]
      %v3203 = vld [vmem:[%s4 + $0x1d4] sm:$0xf]
      %v3204 = vld [vmem:[%s4 + $0x1d8] sm:$0xf]
      %v3205 = vld [vmem:[%s4 + $0x1dc] sm:$0xf]
      %v3206 = vld [vmem:[%s4 + $0x1e0] sm:$0xf]
      %v3207 = vld [vmem:[%s4 + $0x1e4] sm:$0xf]
      %v3208 = vld [vmem:[%s4 + $0x1e8] sm:$0xf]
      %v3209 = vld [vmem:[%s4 + $0x1ec] sm:$0xf]
      %v3210 = vld [vmem:[%s4 + $0x1f0] sm:$0xf]
      %v3211 = vld [vmem:[%s4 + $0x1f4] sm:$0xf]
      %v3212 = vld [vmem:[%s4 + $0x1f8] sm:$0xf]
      %v3213 = vld [vmem:[%s4 + $0x1fc] sm:$0xf]
      %v3230 = vunpack.c.l.b16 %v3198
      %v3231 = vunpack.c.l.b16 %v3199
      %v3232 = vunpack.c.l.b16 %v3200
      %v3233 = vunpack.c.l.b16 %v3201
      %v3234 = vunpack.c.l.b16 %v3202
      %v3235 = vunpack.c.l.b16 %v3203
      %v3236 = vunpack.c.l.b16 %v3204
      %v3237 = vunpack.c.l.b16 %v3205
      %v3238 = vunpack.c.l.b16 %v3206
      %v3239 = vunpack.c.l.b16 %v3207
      %v3240 = vunpack.c.l.b16 %v3208
      %v3241 = vunpack.c.l.b16 %v3209
      %v3242 = vunpack.c.l.b16 %v3210
      %v3243 = vunpack.c.l.b16 %v3211
      %v3244 = vunpack.c.l.b16 %v3212
      %v3245 = vunpack.c.l.b16 %v3213
      %v3246 = vpack.c.b16 %v3231, %v3230
      %v3247 = vpack.c.b16 %v3233, %v3232
      %v3248 = vpack.c.b16 %v3235, %v3234
      %v3249 = vpack.c.b16 %v3237, %v3236
      %v3250 = vpack.c.b16 %v3239, %v3238
      %v3251 = vpack.c.b16 %v3241, %v3240
      %v3252 = vpack.c.b16 %v3243, %v3242
      %v3253 = vpack.c.b16 %v3245, %v3244
      %3262 = vmatprep.subr.bf16.mxu0 0
      %3263 = vmatpush1.bf16.msra.mxu0 %v3246
      %3264 = vmatprep.subr.bf16.mxu0 0
      %3265 = vmatpush1.bf16.msra.mxu0 %v3247
      %3266 = vmatprep.subr.bf16.mxu0 0
      %3267 = vmatpush1.bf16.msra.mxu0 %v3248
      %3268 = vmatprep.subr.bf16.mxu0 0
      %3269 = vmatpush1.bf16.msra.mxu0 %v3249
      %3270 = vmatprep.subr.bf16.mxu0 0
      %3271 = vmatpush1.bf16.msra.mxu0 %v3250
      %3272 = vmatprep.subr.bf16.mxu0 0
      %3273 = vmatpush1.bf16.msra.mxu0 %v3251
      %3274 = vmatprep.subr.bf16.mxu0 0
      %3275 = vmatpush1.bf16.msra.mxu0 %v3252
      %3276 = vmatprep.subr.bf16.mxu0 0
      %3277 = vmatpush1.bf16.msra.mxu0 %v3253
      %3278 = vmatprep.subr.bf16.mxu0 0
      %3279 = vmatpush1.bf16.msra.mxu0 0
      %3280 = vmatprep.subr.bf16.mxu0 0
      %3281 = vmatpush1.bf16.msra.mxu0 0
      %3282 = vmatprep.subr.bf16.mxu0 0
      %3283 = vmatpush1.bf16.msra.mxu0 0
      %3284 = vmatprep.subr.bf16.mxu0 0
      %3285 = vmatpush1.bf16.msra.mxu0 0
      %3286 = vmatprep.subr.bf16.mxu0 0
      %3287 = vmatpush1.bf16.msra.mxu0 0
      %3288 = vmatprep.subr.bf16.mxu0 0
      %3289 = vmatpush1.bf16.msra.mxu0 0
      %3290 = vmatprep.subr.bf16.mxu0 0
      %3291 = vmatpush1.bf16.msra.mxu0 0
      %3292 = vmatprep.subr.bf16.mxu0 0
      %3293 = vmatpush1.bf16.msra.mxu0 0
      %3294 = vmatprep.mubr.bf16.mxu0 0
      %3295 = vmatmul.mubr.bf16.gmra.mrb[0].mxu0 %v3190
      %v3296 = vpop.f32.mrb[0].mxu0
      %v3297 = vadd.f32 0.0, %v3296
      %v3298 = vpop.f32.mrb[0].mxu0
      %v3299 = vpop.f32.mrb[0].mxu0
      %v3300 = vpop.f32.mrb[0].mxu0
      %3301 = vmatprep.mubr.bf16.mxu0 0
      %3302 = vmatmul.mubr.bf16.gmra.mrb[0].mxu0 %v3191
      %v3303 = vpop.f32.mrb[0].mxu0
      %v3304 = vadd.f32 0.0, %v3303
      %v3305 = vpop.f32.mrb[0].mxu0
      %v3306 = vpop.f32.mrb[0].mxu0
      %v3307 = vpop.f32.mrb[0].mxu0
      %3308 = vmatprep.mubr.bf16.mxu0 0
      %3309 = vmatmul.mubr.bf16.gmra.mrb[0].mxu0 %v3192
      %v3310 = vpop.f32.mrb[0].mxu0
      %v3311 = vadd.f32 0.0, %v3310
      %v3312 = vpop.f32.mrb[0].mxu0
      %v3313 = vpop.f32.mrb[0].mxu0
      %v3314 = vpop.f32.mrb[0].mxu0
      %3315 = vmatprep.mubr.bf16.mxu0 0
      %3316 = vmatmul.mubr.bf16.gmra.mrb[0].mxu0 %v3193
      %v3317 = vpop.f32.mrb[0].mxu0
      %v3318 = vadd.f32 0.0, %v3317
      %v3319 = vpop.f32.mrb[0].mxu0
      %v3320 = vpop.f32.mrb[0].mxu0
      %v3321 = vpop.f32.mrb[0].mxu0
      %3322 = vmatprep.mubr.bf16.mxu0 0
      %3323 = vmatmul.mubr.bf16.gmra.mrb[0].mxu0 %v3194
      %v3324 = vpop.f32.mrb[0].mxu0
      %v3325 = vadd.f32 0.0, %v3324
      %v3326 = vpop.f32.mrb[0].mxu0
      %v3327 = vpop.f32.mrb[0].mxu0
      %v3328 = vpop.f32.mrb[0].mxu0
      %3329 = vmatprep.mubr.bf16.mxu0 0
      %3330 = vmatmul.mubr.bf16.gmra.mrb[0].mxu0 %v3195
      %v3331 = vpop.f32.mrb[0].mxu0
      %v3332 = vadd.f32 0.0, %v3331
      %v3333 = vpop.f32.mrb[0].mxu0
      %v3334 = vpop.f32.mrb[0].mxu0
      %v3335 = vpop.f32.mrb[0].mxu0
      %3336 = vmatprep.mubr.bf16.mxu0 0
      %3337 = vmatmul.mubr.bf16.gmra.mrb[0].mxu0 %v3196
      %v3338 = vpop.f32.mrb[0].mxu0
      %v3339 = vadd.f32 0.0, %v3338
      %v3340 = vpop.f32.mrb[0].mxu0
      %v3341 = vpop.f32.mrb[0].mxu0
      %v3342 = vpop.f32.mrb[0].mxu0
      %3343 = vmatprep.mubr.bf16.mxu0 0
      %3344 = vmatmul.mubr.bf16.gmra.mrb[0].mxu0 %v3197
      %v3345 = vpop.f32.mrb[0].mxu0
      %v3346 = vadd.f32 0.0, %v3345
      %v3347 = vpop.f32.mrb[0].mxu0
      %v3348 = vpop.f32.mrb[0].mxu0
      %v3349 = vpop.f32.mrb[0].mxu0
      %3350 = vdwg.mxu0
      %v3351 = vadd.f32 %v3166, %v3297
      %v3352 = vadd.f32 %v3167, %v3304
      %v3353 = vadd.f32 %v3168, %v3311
      %v3354 = vadd.f32 %v3169, %v3318
      %v3355 = vadd.f32 %v3170, %v3325
      %v3356 = vadd.f32 %v3171, %v3332
      %v3357 = vadd.f32 %v3172, %v3339
      %v3358 = vadd.f32 %v3173, %v3346
      %v3359 = vld [vmem:[#allocation2 + $0x11] sm:$0xff]
      %v3360 = vld [vmem:[#allocation2 + $0x19] sm:$0xff]
      %v3361 = vld [vmem:[#allocation2 + $0x21] sm:$0xff]
      %v3362 = vld [vmem:[#allocation2 + $0x29] sm:$0xff]
      %v3363 = vld [vmem:[#allocation2 + $0x31] sm:$0xff]
      %v3364 = vld [vmem:[#allocation2 + $0x39] sm:$0xff]
      %v3365 = vld [vmem:[#allocation2 + $0x41] sm:$0xff]
      %v3366 = vld [vmem:[#allocation2 + $0x49] sm:$0xff]
      %v3367 = vld [vmem:[#allocation2 + $0x51] sm:$0xff]
      %v3368 = vld [vmem:[#allocation2 + $0x59] sm:$0xff]
      %v3369 = vld [vmem:[#allocation2 + $0x61] sm:$0xff]
      %v3370 = vld [vmem:[#allocation2 + $0x69] sm:$0xff]
      %v3371 = vld [vmem:[#allocation2 + $0x71] sm:$0xff]
      %v3372 = vld [vmem:[#allocation2 + $0x79] sm:$0xff]
      %v3373 = vld [vmem:[#allocation2 + $0x81] sm:$0xff]
      %v3374 = vld [vmem:[#allocation2 + $0x89] sm:$0xff]
      %v3375 = vpack.c.bf16 %v3360, %v3359
      %v3376 = vpack.c.bf16 %v3362, %v3361
      %v3377 = vpack.c.bf16 %v3364, %v3363
      %v3378 = vpack.c.bf16 %v3366, %v3365
      %v3379 = vpack.c.bf16 %v3368, %v3367
      %v3380 = vpack.c.bf16 %v3370, %v3369
      %v3381 = vpack.c.bf16 %v3372, %v3371
      %v3382 = vpack.c.bf16 %v3374, %v3373
      %v3383 = vld [vmem:[%s4 + $0x200] sm:$0xf]
      %v3384 = vld [vmem:[%s4 + $0x204] sm:$0xf]
      %v3385 = vld [vmem:[%s4 + $0x208] sm:$0xf]
      %v3386 = vld [vmem:[%s4 + $0x20c] sm:$0xf]
      %v3387 = vld [vmem:[%s4 + $0x210] sm:$0xf]
      %v3388 = vld [vmem:[%s4 + $0x214] sm:$0xf]
      %v3389 = vld [vmem:[%s4 + $0x218] sm:$0xf]
      %v3390 = vld [vmem:[%s4 + $0x21c] sm:$0xf]
      %v3391 = vld [vmem:[%s4 + $0x220] sm:$0xf]
      %v3392 = vld [vmem:[%s4 + $0x224] sm:$0xf]
      %v3393 = vld [vmem:[%s4 + $0x228] sm:$0xf]
      %v3394 = vld [vmem:[%s4 + $0x22c] sm:$0xf]
      %v3395 = vld [vmem:[%s4 + $0x230] sm:$0xf]
      %v3396 = vld [vmem:[%s4 + $0x234] sm:$0xf]
      %v3397 = vld [vmem:[%s4 + $0x238] sm:$0xf]
      %v3398 = vld [vmem:[%s4 + $0x23c] sm:$0xf]
      %v3415 = vunpack.c.l.b16 %v3383
      %v3416 = vunpack.c.l.b16 %v3384
      %v3417 = vunpack.c.l.b16 %v3385
      %v3418 = vunpack.c.l.b16 %v3386
      %v3419 = vunpack.c.l.b16 %v3387
      %v3420 = vunpack.c.l.b16 %v3388
      %v3421 = vunpack.c.l.b16 %v3389
      %v3422 = vunpack.c.l.b16 %v3390
      %v3423 = vunpack.c.l.b16 %v3391
      %v3424 = vunpack.c.l.b16 %v3392
      %v3425 = vunpack.c.l.b16 %v3393
      %v3426 = vunpack.c.l.b16 %v3394
      %v3427 = vunpack.c.l.b16 %v3395
      %v3428 = vunpack.c.l.b16 %v3396
      %v3429 = vunpack.c.l.b16 %v3397
      %v3430 = vunpack.c.l.b16 %v3398
      %v3431 = vpack.c.b16 %v3416, %v3415
      %v3432 = vpack.c.b16 %v3418, %v3417
      %v3433 = vpack.c.b16 %v3420, %v3419
      %v3434 = vpack.c.b16 %v3422, %v3421
      %v3435 = vpack.c.b16 %v3424, %v3423
      %v3436 = vpack.c.b16 %v3426, %v3425
      %v3437 = vpack.c.b16 %v3428, %v3427
      %v3438 = vpack.c.b16 %v3430, %v3429
      %3447 = vmatprep.subr.bf16.mxu0 0
      %3448 = vmatpush1.bf16.msra.mxu0 %v3431
      %3449 = vmatprep.subr.bf16.mxu0 0
      %3450 = vmatpush1.bf16.msra.mxu0 %v3432
      %3451 = vmatprep.subr.bf16.mxu0 0
      %3452 = vmatpush1.bf16.msra.mxu0 %v3433
      %3453 = vmatprep.subr.bf16.mxu0 0
      %3454 = vmatpush1.bf16.msra.mxu0 %v3434
      %3455 = vmatprep.subr.bf16.mxu0 0
      %3456 = vmatpush1.bf16.msra.mxu0 %v3435
      %3457 = vmatprep.subr.bf16.mxu0 0
      %3458 = vmatpush1.bf16.msra.mxu0 %v3436
      %3459 = vmatprep.subr.bf16.mxu0 0
      %3460 = vmatpush1.bf16.msra.mxu0 %v3437
      %3461 = vmatprep.subr.bf16.mxu0 0
      %3462 = vmatpush1.bf16.msra.mxu0 %v3438
      %3463 = vmatprep.subr.bf16.mxu0 0
      %3464 = vmatpush1.bf16.msra.mxu0 0
      %3465 = vmatprep.subr.bf16.mxu0 0
      %3466 = vmatpush1.bf16.msra.mxu0 0
      %3467 = vmatprep.subr.bf16.mxu0 0
      %3468 = vmatpush1.bf16.msra.mxu0 0
      %3469 = vmatprep.subr.bf16.mxu0 0
      %3470 = vmatpush1.bf16.msra.mxu0 0
      %3471 = vmatprep.subr.bf16.mxu0 0
      %3472 = vmatpush1.bf16.msra.mxu0 0
      %3473 = vmatprep.subr.bf16.mxu0 0
      %3474 = vmatpush1.bf16.msra.mxu0 0
      %3475 = vmatprep.subr.bf16.mxu0 0
      %3476 = vmatpush1.bf16.msra.mxu0 0
      %3477 = vmatprep.subr.bf16.mxu0 0
      %3478 = vmatpush1.bf16.msra.mxu0 0
      %3479 = vmatprep.mubr.bf16.mxu0 0
      %3480 = vmatmul.mubr.bf16.gmra.mrb[0].mxu0 %v3375
      %v3481 = vpop.f32.mrb[0].mxu0
      %v3482 = vadd.f32 0.0, %v3481
      %v3483 = vpop.f32.mrb[0].mxu0
      %v3484 = vpop.f32.mrb[0].mxu0
      %v3485 = vpop.f32.mrb[0].mxu0
      %3486 = vmatprep.mubr.bf16.mxu0 0
      %3487 = vmatmul.mubr.bf16.gmra.mrb[0].mxu0 %v3376
      %v3488 = vpop.f32.mrb[0].mxu0
      %v3489 = vadd.f32 0.0, %v3488
      %v3490 = vpop.f32.mrb[0].mxu0
      %v3491 = vpop.f32.mrb[0].mxu0
      %v3492 = vpop.f32.mrb[0].mxu0
      %3493 = vmatprep.mubr.bf16.mxu0 0
      %3494 = vmatmul.mubr.bf16.gmra.mrb[0].mxu0 %v3377
      %v3495 = vpop.f32.mrb[0].mxu0
      %v3496 = vadd.f32 0.0, %v3495
      %v3497 = vpop.f32.mrb[0].mxu0
      %v3498 = vpop.f32.mrb[0].mxu0
      %v3499 = vpop.f32.mrb[0].mxu0
      %3500 = vmatprep.mubr.bf16.mxu0 0
      %3501 = vmatmul.mubr.bf16.gmra.mrb[0].mxu0 %v3378
      %v3502 = vpop.f32.mrb[0].mxu0
      %v3503 = vadd.f32 0.0, %v3502
      %v3504 = vpop.f32.mrb[0].mxu0
      %v3505 = vpop.f32.mrb[0].mxu0
      %v3506 = vpop.f32.mrb[0].mxu0
      %3507 = vmatprep.mubr.bf16.mxu0 0
      %3508 = vmatmul.mubr.bf16.gmra.mrb[0].mxu0 %v3379
      %v3509 = vpop.f32.mrb[0].mxu0
      %v3510 = vadd.f32 0.0, %v3509
      %v3511 = vpop.f32.mrb[0].mxu0
      %v3512 = vpop.f32.mrb[0].mxu0
      %v3513 = vpop.f32.mrb[0].mxu0
      %3514 = vmatprep.mubr.bf16.mxu0 0
      %3515 = vmatmul.mubr.bf16.gmra.mrb[0].mxu0 %v3380
      %v3516 = vpop.f32.mrb[0].mxu0
      %v3517 = vadd.f32 0.0, %v3516
      %v3518 = vpop.f32.mrb[0].mxu0
      %v3519 = vpop.f32.mrb[0].mxu0
      %v3520 = vpop.f32.mrb[0].mxu0
      %3521 = vmatprep.mubr.bf16.mxu0 0
      %3522 = vmatmul.mubr.bf16.gmra.mrb[0].mxu0 %v3381
      %v3523 = vpop.f32.mrb[0].mxu0
      %v3524 = vadd.f32 0.0, %v3523
      %v3525 = vpop.f32.mrb[0].mxu0
      %v3526 = vpop.f32.mrb[0].mxu0
      %v3527 = vpop.f32.mrb[0].mxu0
      %3528 = vmatprep.mubr.bf16.mxu0 0
      %3529 = vmatmul.mubr.bf16.gmra.mrb[0].mxu0 %v3382
      %v3530 = vpop.f32.mrb[0].mxu0
      %v3531 = vadd.f32 0.0, %v3530
      %v3532 = vpop.f32.mrb[0].mxu0
      %v3533 = vpop.f32.mrb[0].mxu0
      %v3534 = vpop.f32.mrb[0].mxu0
      %3535 = vdwg.mxu0
      %v3536 = vadd.f32 %v3351, %v3482
      %v3537 = vadd.f32 %v3352, %v3489
      %v3538 = vadd.f32 %v3353, %v3496
      %v3539 = vadd.f32 %v3354, %v3503
      %v3540 = vadd.f32 %v3355, %v3510
      %v3541 = vadd.f32 %v3356, %v3517
      %v3542 = vadd.f32 %v3357, %v3524
      %v3543 = vadd.f32 %v3358, %v3531
      %v3544 = vld [vmem:[%s5] sm:$0x1]
      %v3546 = vlaneseq
      %v3547 = vshrl.u32 %v3546, 7
      %v3548 = vsub.s32 0, %v3547
      %v3549 = vrot.slane %v3544, %v3548
      %v3551 = vadd.f32 %v3536, %v3549
      %v3552 = vadd.f32 %v3537, %v3549
      %v3553 = vadd.f32 %v3538, %v3549
      %v3554 = vadd.f32 %v3539, %v3549
      %v3555 = vadd.f32 %v3540, %v3549
      %v3556 = vadd.f32 %v3541, %v3549
      %v3557 = vadd.f32 %v3542, %v3549
      %v3558 = vadd.f32 %v3543, %v3549
      %v3559 = vmax.f32 %v3551, 0.0
      %v3560 = vmax.f32 %v3552, 0.0
      %v3561 = vmax.f32 %v3553, 0.0
      %v3562 = vmax.f32 %v3554, 0.0
      %v3563 = vmax.f32 %v3555, 0.0
      %v3564 = vmax.f32 %v3556, 0.0
      %v3565 = vmax.f32 %v3557, 0.0
      %v3566 = vmax.f32 %v3558, 0.0
      %v3567 = vpack.c.bf16 %v3560, %v3559
      %v3568 = vpack.c.bf16 %v3562, %v3561
      %v3569 = vpack.c.bf16 %v3564, %v3563
      %v3570 = vpack.c.bf16 %v3566, %v3565
      %v3575 = vunpack.c.l.b16 %v3567
      %v3576 = vunpack.c.h.b16 %v3567
      %v3577 = vunpack.c.l.b16 %v3568
      %v3578 = vunpack.c.h.b16 %v3568
      %v3579 = vunpack.c.l.b16 %v3569
      %v3580 = vunpack.c.h.b16 %v3569
      %v3581 = vunpack.c.l.b16 %v3570
      %v3582 = vunpack.c.h.b16 %v3570
      %v3583 = vpack.c.b16 %v3575, %v3575
      %v3584 = vpack.c.b16 %v3576, %v3576
      %v3585 = vpack.c.b16 %v3577, %v3577
      %v3586 = vpack.c.b16 %v3578, %v3578
      %v3587 = vpack.c.b16 %v3579, %v3579
      %v3588 = vpack.c.b16 %v3580, %v3580
      %v3589 = vpack.c.b16 %v3581, %v3581
      %v3590 = vpack.c.b16 %v3582, %v3582
      %3599 = vst [vmem:[%s251] sm:$0xf] %v3583
      %3600 = vst [vmem:[%s251 + $0x4] sm:$0xf] %v3584
      %3601 = vst [vmem:[%s251 + $0x8] sm:$0xf] %v3585
      %3602 = vst [vmem:[%s251 + $0xc] sm:$0xf] %v3586
      %3603 = vst [vmem:[%s251 + $0x10] sm:$0xf] %v3587
      %3604 = vst [vmem:[%s251 + $0x14] sm:$0xf] %v3588
      %3605 = vst [vmem:[%s251 + $0x18] sm:$0xf] %v3589
      %3606 = vst [vmem:[%s251 + $0x1c] sm:$0xf] %v3590
      %p3607 = scmp.lt.s32.totalorder %s17, 1
      %s3608 = scalar_select %p3607, %s17, 1
      %s3609 = smul.addr %s3608, 8
      %s3610 = smul.addr %s3609, 4
      %s3611 = scalar_lea.vmem %s6, %s3610
      // Predicated region
      $region45: #{bottleneck_forward.2} parent=43 // pred_check
        %p3612 = pneg %p166
      $region46: #{bottleneck_forward.2} parent=43 // pred_check_branch
        %3614 = sbr.rel (%p3612) target = $region48
      $region47: #{bottleneck_forward.2} parent=43 // pred_region
        _
      $region48: #{bottleneck_forward.2} parent=43 // pred_fallthru
        _
    $region44: #{bottleneck_forward.2} parent=5 // pred_fallthru
      _
    %p3615 = scmp.le.s32.totalorder 2, %s12
    // Predicated region
    $region49: #{bottleneck_forward.2} parent=5 // pred_check
      %p3616 = pneg %p3615
    $region50: #{bottleneck_forward.2} parent=5 // pred_check_branch
      %3618 = sbr.rel (%p3616) target = $region52
    $region51: #{bottleneck_forward.2} parent=5 // pred_region
      %s3619 = ssub.s32 %s12, 2
      // Predicated region
      $region53: #{bottleneck_forward.2} parent=51 // pred_check
        %p3620 = pneg %p172
      $region54: #{bottleneck_forward.2} parent=51 // pred_check_branch
        %3622 = sbr.rel (%p3620) target = $region56
      $region55: #{bottleneck_forward.2} parent=51 // pred_region
        %p3623 = scmp.lt.s32.totalorder %s18, 1
        %s3624 = scalar_select %p3623, %s18, 1
        %s3625 = smul.addr %s3624, 8
        %s3626 = smul.addr %s3625, 4
        %s3627 = scalar_lea.vmem %s6, %s3626
      $region56: #{bottleneck_forward.2} parent=51 // pred_fallthru
        _
    $region52: #{bottleneck_forward.2} parent=5 // pred_fallthru
      _
  $region6: #{bottleneck_forward.2} parent=0 // loop_footer
    %s16 = sadd.s32 1, %s12
  $region7: #{bottleneck_forward.2} parent=0 // loop_footer_branch
    %11 = sbr.rel target = $region3
  $region8: #{bottleneck_forward.2} parent=0 // loop_exit
    _

</llo_original>
